<compile_context>
chip_gen: v7x
topology: tpu7x:2x2x1
jax: 0.10.0
libtpu: 0.0.40
codegen_flags: <defaults>
</compile_context>

<pallas_src>
import numpy as np
import jax
import jax.numpy as jnp
from jax.experimental import pallas as pl
from jax.experimental.pallas import tpu as pltpu

# ---------------- configuration (small, deterministic) ----------------
B = 2          # batch
L = 128        # waveform length
K = 16         # encoder/decoder kernel size (K == 2*S)
S = 8          # stride
F = 32         # n_filters
N_SRC = 2      # number of sources
T = (L - K) // S + 1          # encoder output frames = 15
L_DEC = (T - 1) * S + K       # decoder output length  = 128
TK = T * K                    # 240  frame lanes
TSF = T * N_SRC * F           # 960  (frame, source, filter) lanes
OUT_LANES = N_SRC * L_DEC     # 256  lane-dense output
assert K == 2 * S
assert OUT_LANES % 128 == 0


# ------------- Pallas kernel: encoder + masker + mask-apply + decoder/overlap-add -------------
def emd_kernel(frames_ref, e_rep_ref, m_blk_ref, bias_ref, w_ola_ref, out_ref):
    # frames_ref : (ROWS, T*K)              bf16  rows = zero-padded batch, lanes = (frame, tap)
    # e_rep_ref  : (T*K, T*N_SRC*F)         bf16  block-diag encoder weight, replicated per source
    # m_blk_ref  : (T*N_SRC*F, T*N_SRC*F)   bf16  block-diag pointwise masker weight
    # bias_ref   : (1, T*N_SRC*F)           f32   masker bias tiled over frames
    # w_ola_ref  : (T*N_SRC*F, N_SRC*L_DEC) bf16  decoder + overlap-add placement weight
    # out_ref    : (ROWS, N_SRC*L_DEC)      f32   128-lane-dense output slab
    frames = frames_ref[...]

    # encoder (per-source replication baked into the weight -> no in-kernel lane concat)
    tf_rep = jnp.dot(frames, e_rep_ref[...],
                     preferred_element_type=jnp.float32)               # (ROWS, TSF) f32

    # masker: pointwise conv (block-diag over frames/sources) + bias + sigmoid
    logits = jnp.dot(tf_rep.astype(jnp.bfloat16), m_blk_ref[...],
                     preferred_element_type=jnp.float32) + bias_ref[...]
    masked = jax.nn.sigmoid(logits) * tf_rep                            # est_masks * tf_rep

    # decoder + overlap-add fused into one placement matmul -> unmasked 256-lane store
    out_ref[...] = jnp.dot(masked.astype(jnp.bfloat16), w_ola_ref[...],
                           preferred_element_type=jnp.float32)          # (ROWS, 256)


def emd_pallas(frames, e_rep, m_blk, bias, w_ola):
    rows = frames.shape[0]
    vmem = pl.BlockSpec(memory_space=pltpu.MemorySpace.VMEM)
    return pl.pallas_call(
        emd_kernel,
        out_shape=jax.ShapeDtypeStruct((rows, OUT_LANES), jnp.float32),
        in_specs=[vmem, vmem, vmem, vmem, vmem],
        out_specs=vmem,
    )(frames, e_rep, m_blk, bias, w_ola)


# ---------------- one-time parameter repacking (hoisted out of the forward) ----------------
def prepare_params(params):
    enc_w = np.asarray(params["enc_w"], np.float32)    # (K, F)
    mask_w = np.asarray(params["mask_w"], np.float32)  # (F, N_SRC*F)
    mask_b = np.asarray(params["mask_b"], np.float32).reshape(-1)  # (N_SRC*F,)
    dec_w = np.asarray(params["dec_w"], np.float32)    # (F, K)

    # encoder weight, replicated per source, block-diagonal over frames: (T*K, T*N_SRC*F)
    e_rep = np.kron(np.eye(T, dtype=np.float32), np.tile(enc_w, (1, N_SRC)))

    # masker pointwise conv, block-diagonal over (frame, source): (T*N_SRC*F, T*N_SRC*F)
    blk = np.zeros((N_SRC * F, N_SRC * F), np.float32)
    for s in range(N_SRC):
        blk[s * F:(s + 1) * F, s * F:(s + 1) * F] = mask_w[:, s * F:(s + 1) * F]
    m_blk = np.kron(np.eye(T, dtype=np.float32), blk)

    # bias tiled over frames, layout (frame, source, filter)
    bias = np.tile(mask_b, T).reshape(1, TSF)

    # decoder + overlap-add placement weight: (T*N_SRC*F, N_SRC*L_DEC)
    w_ola = np.zeros((T, N_SRC, F, N_SRC, L_DEC), np.float32)
    for t in range(T):
        for s in range(N_SRC):
            w_ola[t, s, :, s, t * S:t * S + K] = dec_w
    w_ola = w_ola.reshape(TSF, N_SRC * L_DEC)

    return {
        "e_rep": jnp.asarray(e_rep, jnp.bfloat16),
        "m_blk": jnp.asarray(m_blk, jnp.bfloat16),
        "bias": jnp.asarray(bias, jnp.float32),
        "w_ola": jnp.asarray(w_ola, jnp.bfloat16),
    }


# ---------------- JAX glue (vectorized strided unfold, sublane-padded rows) ----------------
def extract_frames(wav_b1l):
    # (B, 1, L) -> (ROWS, T*K) bf16 with ROWS = batch padded to a multiple of 8.
    w = wav_b1l[:, 0, :]
    bsz = w.shape[0]
    rows = max(8, ((bsz + 7) // 8) * 8)
    w = jnp.pad(w, ((0, rows - bsz), (0, 0)))
    chunks = w.reshape(rows, L // S, S)                                   # (ROWS, L/S, S)
    frames = jnp.stack([chunks[:, :T, :], chunks[:, 1:T + 1, :]], axis=2)  # (ROWS, T, 2, S)
    return frames.reshape(rows, TK).astype(jnp.bfloat16)


def base_encoder_masker_decoder_forward(wav, prepped):
    # mirrors BaseEncoderMaskerDecoder.forward
    orig_ndim = wav.ndim
    if wav.ndim == 1:
        wav = wav.reshape(1, 1, -1)
    elif wav.ndim == 2:
        wav = wav[:, None, :]                       # unsqueeze(1) -> (B, 1, L)
    bsz = wav.shape[0]

    frames = extract_frames(wav)                    # (ROWS, T*K)
    out = emd_pallas(frames, prepped["e_rep"], prepped["m_blk"],
                     prepped["bias"], prepped["w_ola"])                  # (ROWS, N_SRC*L_DEC)
    decoded = out[:bsz].reshape(bsz, N_SRC, L_DEC)  # overlap-add already done in-kernel

    pad = wav.shape[-1] - L_DEC
    reconstructed = jnp.pad(decoded, ((0, 0), (0, 0), (0, max(pad, 0))))
    if pad < 0:   # mirror F.pad's negative-pad truncation instead of erroring
        reconstructed = reconstructed[..., :wav.shape[-1]]
    if orig_ndim == 1:
        return reconstructed[0]
    return reconstructed


forward_jit = jax.jit(base_encoder_masker_decoder_forward)


# ---------------- pure-JAX reference for correctness ----------------
def reference_forward(wav, params):
    if wav.ndim == 2:
        wav = wav[:, None, :]
    w = wav[:, 0, :]
    frames = jnp.stack([w[:, t * S:t * S + K] for t in range(T)], axis=1)   # (B, T, K)
    tf_rep = jnp.einsum("btk,kf->btf", frames, params["enc_w"])
    logits = jnp.einsum("btf,fg->btg", tf_rep, params["mask_w"]) + params["mask_b"][0]
    masks = jax.nn.sigmoid(logits).reshape(B, T, N_SRC, F).transpose(0, 2, 1, 3)
    masked = masks * tf_rep[:, None, :, :]                                  # (B, n_src, T, F)
    dec_frames = jnp.einsum("bstf,fk->bstk", masked, params["dec_w"])
    out = jnp.zeros((B, N_SRC, L_DEC), jnp.float32)
    for t in range(T):
        out = out.at[..., t * S:t * S + K].add(dec_frames[:, :, t, :])
    pad = L - out.shape[-1]
    return jnp.pad(out, ((0, 0), (0, 0), (0, pad)))


if __name__ == "__main__":
    key = jax.random.PRNGKey(0)
    k1, k2, k3, k4, k5 = jax.random.split(key, 5)

    params = {
        # encoder Conv1d weight (F, 1, K) stored transposed as (K, F)
        "enc_w": jax.random.normal(k1, (K, F), jnp.float32) * 0.1,
        # masker pointwise conv weight (n_src*F, F, 1) stored as (F, n_src*F)
        "mask_w": jax.random.normal(k2, (F, N_SRC * F), jnp.float32) * 0.1,
        "mask_b": jax.random.normal(k3, (1, N_SRC * F), jnp.float32) * 0.1,
        # decoder ConvTranspose1d weight (F, 1, K) stored as (F, K)
        "dec_w": jax.random.normal(k4, (F, K), jnp.float32) * 0.1,
    }
    prepped = prepare_params(params)               # one-time weight repacking / bf16 cast

    wav = jax.random.normal(k5, (B, L), jnp.float32)   # (batch, time), in_channels=1

    out = forward_jit(wav, prepped)
    out = jax.block_until_ready(out)

    ref = reference_forward(wav, params)
    assert out.shape == (B, N_SRC, L), out.shape
    # bf16 MXU operands with f32 accumulation -> slightly looser tolerance than pure f32
    assert jnp.allclose(out, ref, atol=1e-2, rtol=1e-2), "mismatch vs reference"

    print("KERNEL_OK")
</pallas_src>

<mosaic_0001>
module attributes {stable_mosaic.version = 11 : i64} {
  func.func @emd_kernel(%arg0: memref<8x240xbf16, #tpu.memory_space<vmem>>, %arg1: memref<240x960xbf16, #tpu.memory_space<vmem>>, %arg2: memref<960x960xbf16, #tpu.memory_space<vmem>>, %arg3: memref<1x960xf32, #tpu.memory_space<vmem>>, %arg4: memref<960x256xbf16, #tpu.memory_space<vmem>>, %arg5: memref<8x256xf32, #tpu.memory_space<vmem>>) attributes {dimension_semantics = [], scalar_prefetch = 0 : i64, scratch_operands = 0 : i64, tpu.core_type = #tpu.core_type<tc>} {
    %c0 = arith.constant 0 : index
    %c0_0 = arith.constant 0 : index
    %0 = vector.load %arg0[%c0, %c0_0] : memref<8x240xbf16, #tpu.memory_space<vmem>>, vector<8x240xbf16>
    %c0_1 = arith.constant 0 : index
    %c0_2 = arith.constant 0 : index
    %1 = vector.load %arg1[%c0_1, %c0_2] : memref<240x960xbf16, #tpu.memory_space<vmem>>, vector<240x960xbf16>
    %cst = arith.constant dense<0.000000e+00> : vector<8x960xf32>
    %2 = tpu.matmul %0, %1, %cst {dimension_numbers = #tpu.dot_dimension_numbers<[1], [0], [0], [1], [0, 0, 1, 1], [], []>} : vector<8x240xbf16>, vector<240x960xbf16>, vector<8x960xf32> -> vector<8x960xf32>
    %3 = arith.truncf %2 : vector<8x960xf32> to vector<8x960xbf16>
    %c0_3 = arith.constant 0 : index
    %c0_4 = arith.constant 0 : index
    %4 = vector.load %arg2[%c0_3, %c0_4] : memref<960x960xbf16, #tpu.memory_space<vmem>>, vector<960x960xbf16>
    %cst_5 = arith.constant dense<0.000000e+00> : vector<8x960xf32>
    %5 = tpu.matmul %3, %4, %cst_5 {dimension_numbers = #tpu.dot_dimension_numbers<[1], [0], [0], [1], [0, 0, 1, 1], [], []>} : vector<8x960xbf16>, vector<960x960xbf16>, vector<8x960xf32> -> vector<8x960xf32>
    %c0_6 = arith.constant 0 : index
    %c0_7 = arith.constant 0 : index
    %6 = vector.load %arg3[%c0_6, %c0_7] : memref<1x960xf32, #tpu.memory_space<vmem>>, vector<1x960xf32>
    %7 = vector.broadcast %6 : vector<1x960xf32> to vector<8x960xf32>
    %8 = arith.addf %5, %7 : vector<8x960xf32>
    %9 = arith.negf %8 : vector<8x960xf32>
    %10 = math.exp %9 : vector<8x960xf32>
    %cst_8 = arith.constant 1.000000e+00 : f32
    %11 = vector.broadcast %cst_8 : f32 to vector<8x960xf32>
    %12 = arith.addf %11, %10 : vector<8x960xf32>
    %13 = arith.divf %11, %12 : vector<8x960xf32>
    %14 = arith.mulf %13, %2 : vector<8x960xf32>
    %15 = arith.truncf %14 : vector<8x960xf32> to vector<8x960xbf16>
    %c0_9 = arith.constant 0 : index
    %c0_10 = arith.constant 0 : index
    %16 = vector.load %arg4[%c0_9, %c0_10] : memref<960x256xbf16, #tpu.memory_space<vmem>>, vector<960x256xbf16>
    %cst_11 = arith.constant dense<0.000000e+00> : vector<8x256xf32>
    %17 = tpu.matmul %15, %16, %cst_11 {dimension_numbers = #tpu.dot_dimension_numbers<[1], [0], [0], [1], [0, 0, 1, 1], [], []>} : vector<8x960xbf16>, vector<960x256xbf16>, vector<8x256xf32> -> vector<8x256xf32>
    %c0_12 = arith.constant 0 : index
    %c0_13 = arith.constant 0 : index
    %18 = vector.load %arg5[%c0_12, %c0_13] : memref<8x256xf32, #tpu.memory_space<vmem>>, vector<8x256xf32>
    tpu.vector_store %arg5[%c0_12, %c0_13], %17 {strides = array<i32>} : memref<8x256xf32, #tpu.memory_space<vmem>>, vector<8x256xf32>,
    return
  }
}

</mosaic_0001>

<llo_original>
// kernel: base_encoder_masker_decoder_forward.1
$region0: #{base_encoder_masker_decoder_forward.1}
  #allocation0 [shape = 'u32[]', space=smem, size = 0x4, offset = 0x4, fixed_abs, tag = 'smem constant byte address 0x4 - core index']
  #allocation1 [shape = 'u32[144,128]{1,0:T(1,128)}', space=vmem, size = 0x12000, scoped, tag = 'internal scratch']
  %s0 = inlined_call_operand.vmem [shape: bf16[8,240], index: 0, kind: input, shape index: {}]
  %s1 = inlined_call_operand.hbm [shape: bf16[240,960], index: 1, kind: input, shape index: {}]
  %s2 = inlined_call_operand.hbm [shape: bf16[960,960], index: 2, kind: input, shape index: {}]
  %s3 = inlined_call_operand.hbm [shape: f32[1,960], index: 3, kind: input, shape index: {}]
  %s4 = inlined_call_operand.hbm [shape: bf16[960,256], index: 4, kind: input, shape index: {}]
  %s5 = inlined_call_operand.vmem [shape: f32[8,256], index: 5, kind: output, shape index: {}]
  %s6 = sld [smem:[#allocation0]]
  $region46: #{base_encoder_masker_decoder_forward.1} parent=0
    _
  %s8 = ssub.s32 1, %s6
  %s9 = scalar_select 0, %s8, %s6
  $region1: #{base_encoder_masker_decoder_forward.1} parent=0
    #allocation2 [shape = 'u8[491520]{0}', space=vmem, size = 0x78000, scoped, tag = 'input window, operand 1, single buffered']
    #allocation3 [shape = 's32[1]{0}', space=sflag, size = 0x4, scoped, tag = 'scoped memory for base_encoder_masker_decoder_forward.1']
    #allocation4 [shape = 'u8[1966080]{0}', space=vmem, size = 0x1e0000, scoped, tag = 'input window, operand 2, single buffered']
    #allocation5 [shape = 's32[1]{0}', space=sflag, size = 0x4, scoped, tag = 'scoped memory for base_encoder_masker_decoder_forward.1']
    #allocation6 [shape = 'u8[4096]{0}', space=vmem, size = 0x1000, scoped, tag = 'input window, operand 3, single buffered']
    #allocation7 [shape = 'u8[491520]{0}', space=vmem, size = 0x78000, scoped, tag = 'input window, operand 4, single buffered']
    #allocation8 [shape = 's32[1]{0}', space=sflag, size = 0x4, scoped, tag = 'scoped memory for base_encoder_masker_decoder_forward.1']
    %10 = vsyncpa [#allocation3], 0
    %11 = vsyncpa [#allocation5], 0
    %12 = vsyncpa [#allocation8], 0
    // Predicated region
    $region2: #{base_encoder_masker_decoder_forward.1} parent=1 // pred_check
      _
    $region3: #{base_encoder_masker_decoder_forward.1} parent=1 // pred_check_branch
      %14 = sbr.rel (0) target = $region5
    $region4: #{base_encoder_masker_decoder_forward.1} parent=1 // pred_region
      _
    $region5: #{base_encoder_masker_decoder_forward.1} parent=1 // pred_fallthru
      _
    // Predicated region
    $region6: #{base_encoder_masker_decoder_forward.1} parent=1 // pred_check
      _
    $region7: #{base_encoder_masker_decoder_forward.1} parent=1 // pred_check_branch
      %16 = sbr.rel (0) target = $region9
    $region8: #{base_encoder_masker_decoder_forward.1} parent=1 // pred_region
      %s18 = ssub.s32 15360, 15360
      %19 = vsyncadd [#allocation3], %s18
      %s20 = sshll.u32 [#allocation2], 4
      %s21 = int_to_ptr.vmem [resolvable:$true] %s20
      %26 = dma.hbm_to_vmem [thread:$0]  %s1, 15360, %s21, [#allocation3], 512, 512, 32
    $region9: #{base_encoder_masker_decoder_forward.1} parent=1 // pred_fallthru
      _
    // Predicated region
    $region10: #{base_encoder_masker_decoder_forward.1} parent=1 // pred_check
      _
    $region11: #{base_encoder_masker_decoder_forward.1} parent=1 // pred_check_branch
      %28 = sbr.rel (0) target = $region13
    $region12: #{base_encoder_masker_decoder_forward.1} parent=1 // pred_region
      %s30 = ssub.s32 61440, 61440
      %31 = vsyncadd [#allocation5], %s30
      %s32 = sshll.u32 [#allocation4], 4
      %s33 = int_to_ptr.vmem [resolvable:$true] %s32
      %38 = dma.hbm_to_vmem [thread:$0]  %s2, 61440, %s33, [#allocation5], 512, 512, 32
    $region13: #{base_encoder_masker_decoder_forward.1} parent=1 // pred_fallthru
      _
    // Predicated region
    $region14: #{base_encoder_masker_decoder_forward.1} parent=1 // pred_check
      _
    $region15: #{base_encoder_masker_decoder_forward.1} parent=1 // pred_check_branch
      %40 = sbr.rel (0) target = $region17
    $region16: #{base_encoder_masker_decoder_forward.1} parent=1 // pred_region
      %s42 = ssub.s32 128, 128
      %43 = vsyncadd [#allocation5], %s42
      %s45 = sshll.u32 [#allocation6], 4
      %s46 = int_to_ptr.vmem [resolvable:$true] %s45
      %48 = dma.hbm_to_vmem [thread:$0]  %s3, 128, %s46, [#allocation5]
    $region17: #{base_encoder_masker_decoder_forward.1} parent=1 // pred_fallthru
      _
    // Predicated region
    $region18: #{base_encoder_masker_decoder_forward.1} parent=1 // pred_check
      _
    $region19: #{base_encoder_masker_decoder_forward.1} parent=1 // pred_check_branch
      %50 = sbr.rel (0) target = $region21
    $region20: #{base_encoder_masker_decoder_forward.1} parent=1 // pred_region
      %s52 = ssub.s32 15360, 15360
      %53 = vsyncadd [#allocation8], %s52
      %s54 = sshll.u32 [#allocation7], 4
      %s55 = int_to_ptr.vmem [resolvable:$true] %s54
      %60 = dma.hbm_to_vmem [thread:$0]  %s4, 15360, %s55, [#allocation8], 128, 128, 8
    $region21: #{base_encoder_masker_decoder_forward.1} parent=1 // pred_fallthru
      _
    // Predicated region
    $region22: #{base_encoder_masker_decoder_forward.1} parent=1 // pred_check
      _
    $region23: #{base_encoder_masker_decoder_forward.1} parent=1 // pred_check_branch
      %62 = sbr.rel (0) target = $region25
    $region24: #{base_encoder_masker_decoder_forward.1} parent=1 // pred_region
      %63 = dma.done [#allocation3], 15360
    $region25: #{base_encoder_masker_decoder_forward.1} parent=1 // pred_fallthru
      _
    // Predicated region
    $region26: #{base_encoder_masker_decoder_forward.1} parent=1 // pred_check
      _
    $region27: #{base_encoder_masker_decoder_forward.1} parent=1 // pred_check_branch
      %65 = sbr.rel (0) target = $region29
    $region28: #{base_encoder_masker_decoder_forward.1} parent=1 // pred_region
      %66 = dma.done [#allocation5], 61440
    $region29: #{base_encoder_masker_decoder_forward.1} parent=1 // pred_fallthru
      _
    // Predicated region
    $region30: #{base_encoder_masker_decoder_forward.1} parent=1 // pred_check
      _
    $region31: #{base_encoder_masker_decoder_forward.1} parent=1 // pred_check_branch
      %68 = sbr.rel (0) target = $region33
    $region32: #{base_encoder_masker_decoder_forward.1} parent=1 // pred_region
      %69 = dma.done [#allocation5], 128
    $region33: #{base_encoder_masker_decoder_forward.1} parent=1 // pred_fallthru
      _
    // Predicated region
    $region34: #{base_encoder_masker_decoder_forward.1} parent=1 // pred_check
      _
    $region35: #{base_encoder_masker_decoder_forward.1} parent=1 // pred_check_branch
      %71 = sbr.rel (0) target = $region37
    $region36: #{base_encoder_masker_decoder_forward.1} parent=1 // pred_region
      %72 = dma.done [#allocation8], 15360
    $region37: #{base_encoder_masker_decoder_forward.1} parent=1 // pred_fallthru
      _
    %v74 = vld [vmem:[%s0] sm:$0xff]
    %v75 = vld [vmem:[#allocation2] sm:$0xff]
    %v76 = vld [vmem:[#allocation2 + $0x8] sm:$0xff]
    %v77 = vld [vmem:[#allocation2 + $0x10] sm:$0xff]
    %v78 = vld [vmem:[#allocation2 + $0x18] sm:$0xff]
    %v79 = vld [vmem:[#allocation2 + $0x20] sm:$0xff]
    %v80 = vld [vmem:[#allocation2 + $0x28] sm:$0xff]
    %v81 = vld [vmem:[#allocation2 + $0x30] sm:$0xff]
    %v82 = vld [vmem:[#allocation2 + $0x38] sm:$0xff]
    %v83 = vld [vmem:[#allocation2 + $0x40] sm:$0xff]
    %v84 = vld [vmem:[#allocation2 + $0x48] sm:$0xff]
    %v85 = vld [vmem:[#allocation2 + $0x50] sm:$0xff]
    %v86 = vld [vmem:[#allocation2 + $0x58] sm:$0xff]
    %v87 = vld [vmem:[#allocation2 + $0x60] sm:$0xff]
    %v88 = vld [vmem:[#allocation2 + $0x68] sm:$0xff]
    %v89 = vld [vmem:[#allocation2 + $0x70] sm:$0xff]
    %v90 = vld [vmem:[#allocation2 + $0x78] sm:$0xff]
    %v91 = vld [vmem:[#allocation2 + $0x80] sm:$0xff]
    %v92 = vld [vmem:[#allocation2 + $0x88] sm:$0xff]
    %v93 = vld [vmem:[#allocation2 + $0x90] sm:$0xff]
    %v94 = vld [vmem:[#allocation2 + $0x98] sm:$0xff]
    %v95 = vld [vmem:[#allocation2 + $0xa0] sm:$0xff]
    %v96 = vld [vmem:[#allocation2 + $0xa8] sm:$0xff]
    %v97 = vld [vmem:[#allocation2 + $0xb0] sm:$0xff]
    %v98 = vld [vmem:[#allocation2 + $0xb8] sm:$0xff]
    %v99 = vld [vmem:[#allocation2 + $0xc0] sm:$0xff]
    %v100 = vld [vmem:[#allocation2 + $0xc8] sm:$0xff]
    %v101 = vld [vmem:[#allocation2 + $0xd0] sm:$0xff]
    %v102 = vld [vmem:[#allocation2 + $0xd8] sm:$0xff]
    %v103 = vld [vmem:[#allocation2 + $0xe0] sm:$0xff]
    %v104 = vld [vmem:[#allocation2 + $0xe8] sm:$0xff]
    %v105 = vld [vmem:[#allocation2 + $0xf0] sm:$0xff]
    %v106 = vld [vmem:[#allocation2 + $0xf8] sm:$0xff]
    %v107 = vld [vmem:[#allocation2 + $0x100] sm:$0xff]
    %v108 = vld [vmem:[#allocation2 + $0x108] sm:$0xff]
    %v109 = vld [vmem:[#allocation2 + $0x110] sm:$0xff]
    %v110 = vld [vmem:[#allocation2 + $0x118] sm:$0xff]
    %v111 = vld [vmem:[#allocation2 + $0x120] sm:$0xff]
    %v112 = vld [vmem:[#allocation2 + $0x128] sm:$0xff]
    %v113 = vld [vmem:[#allocation2 + $0x130] sm:$0xff]
    %v114 = vld [vmem:[#allocation2 + $0x138] sm:$0xff]
    %v115 = vld [vmem:[#allocation2 + $0x140] sm:$0xff]
    %v116 = vld [vmem:[#allocation2 + $0x148] sm:$0xff]
    %v117 = vld [vmem:[#allocation2 + $0x150] sm:$0xff]
    %v118 = vld [vmem:[#allocation2 + $0x158] sm:$0xff]
    %v119 = vld [vmem:[#allocation2 + $0x160] sm:$0xff]
    %v120 = vld [vmem:[#allocation2 + $0x168] sm:$0xff]
    %v121 = vld [vmem:[#allocation2 + $0x170] sm:$0xff]
    %v122 = vld [vmem:[#allocation2 + $0x178] sm:$0xff]
    %v123 = vld [vmem:[#allocation2 + $0x180] sm:$0xff]
    %v124 = vld [vmem:[#allocation2 + $0x188] sm:$0xff]
    %v125 = vld [vmem:[#allocation2 + $0x190] sm:$0xff]
    %v126 = vld [vmem:[#allocation2 + $0x198] sm:$0xff]
    %v127 = vld [vmem:[#allocation2 + $0x1a0] sm:$0xff]
    %v128 = vld [vmem:[#allocation2 + $0x1a8] sm:$0xff]
    %v129 = vld [vmem:[#allocation2 + $0x1b0] sm:$0xff]
    %v130 = vld [vmem:[#allocation2 + $0x1b8] sm:$0xff]
    %v131 = vld [vmem:[#allocation2 + $0x1c0] sm:$0xff]
    %v132 = vld [vmem:[#allocation2 + $0x1c8] sm:$0xff]
    %v133 = vld [vmem:[#allocation2 + $0x1d0] sm:$0xff]
    %v134 = vld [vmem:[#allocation2 + $0x1d8] sm:$0xff]
    %v135 = vld [vmem:[#allocation2 + $0x1e0] sm:$0xff]
    %v136 = vld [vmem:[#allocation2 + $0x1e8] sm:$0xff]
    %v137 = vld [vmem:[#allocation2 + $0x1f0] sm:$0xff]
    %v138 = vld [vmem:[#allocation2 + $0x1f8] sm:$0xff]
    %v139 = vld [vmem:[#allocation2 + $0x200] sm:$0xff]
    %v140 = vld [vmem:[#allocation2 + $0x208] sm:$0xff]
    %v141 = vld [vmem:[#allocation2 + $0x210] sm:$0xff]
    %v142 = vld [vmem:[#allocation2 + $0x218] sm:$0xff]
    %v143 = vld [vmem:[#allocation2 + $0x220] sm:$0xff]
    %v144 = vld [vmem:[#allocation2 + $0x228] sm:$0xff]
    %v145 = vld [vmem:[#allocation2 + $0x230] sm:$0xff]
    %v146 = vld [vmem:[#allocation2 + $0x238] sm:$0xff]
    %v147 = vld [vmem:[#allocation2 + $0x240] sm:$0xff]
    %v148 = vld [vmem:[#allocation2 + $0x248] sm:$0xff]
    %v149 = vld [vmem:[#allocation2 + $0x250] sm:$0xff]
    %v150 = vld [vmem:[#allocation2 + $0x258] sm:$0xff]
    %v151 = vld [vmem:[#allocation2 + $0x260] sm:$0xff]
    %v152 = vld [vmem:[#allocation2 + $0x268] sm:$0xff]
    %v153 = vld [vmem:[#allocation2 + $0x270] sm:$0xff]
    %v154 = vld [vmem:[#allocation2 + $0x278] sm:$0xff]
    %v155 = vld [vmem:[#allocation2 + $0x280] sm:$0xff]
    %v156 = vld [vmem:[#allocation2 + $0x288] sm:$0xff]
    %v157 = vld [vmem:[#allocation2 + $0x290] sm:$0xff]
    %v158 = vld [vmem:[#allocation2 + $0x298] sm:$0xff]
    %v159 = vld [vmem:[#allocation2 + $0x2a0] sm:$0xff]
    %v160 = vld [vmem:[#allocation2 + $0x2a8] sm:$0xff]
    %v161 = vld [vmem:[#allocation2 + $0x2b0] sm:$0xff]
    %v162 = vld [vmem:[#allocation2 + $0x2b8] sm:$0xff]
    %v163 = vld [vmem:[#allocation2 + $0x2c0] sm:$0xff]
    %v164 = vld [vmem:[#allocation2 + $0x2c8] sm:$0xff]
    %v165 = vld [vmem:[#allocation2 + $0x2d0] sm:$0xff]
    %v166 = vld [vmem:[#allocation2 + $0x2d8] sm:$0xff]
    %v167 = vld [vmem:[#allocation2 + $0x2e0] sm:$0xff]
    %v168 = vld [vmem:[#allocation2 + $0x2e8] sm:$0xff]
    %v169 = vld [vmem:[#allocation2 + $0x2f0] sm:$0xff]
    %v170 = vld [vmem:[#allocation2 + $0x2f8] sm:$0xff]
    %v171 = vld [vmem:[#allocation2 + $0x300] sm:$0xff]
    %v172 = vld [vmem:[#allocation2 + $0x308] sm:$0xff]
    %v173 = vld [vmem:[#allocation2 + $0x310] sm:$0xff]
    %v174 = vld [vmem:[#allocation2 + $0x318] sm:$0xff]
    %v175 = vld [vmem:[#allocation2 + $0x320] sm:$0xff]
    %v176 = vld [vmem:[#allocation2 + $0x328] sm:$0xff]
    %v177 = vld [vmem:[#allocation2 + $0x330] sm:$0xff]
    %v178 = vld [vmem:[#allocation2 + $0x338] sm:$0xff]
    %v179 = vld [vmem:[#allocation2 + $0x340] sm:$0xff]
    %v180 = vld [vmem:[#allocation2 + $0x348] sm:$0xff]
    %v181 = vld [vmem:[#allocation2 + $0x350] sm:$0xff]
    %v182 = vld [vmem:[#allocation2 + $0x358] sm:$0xff]
    %v183 = vld [vmem:[#allocation2 + $0x360] sm:$0xff]
    %v184 = vld [vmem:[#allocation2 + $0x368] sm:$0xff]
    %v185 = vld [vmem:[#allocation2 + $0x370] sm:$0xff]
    %v186 = vld [vmem:[#allocation2 + $0x378] sm:$0xff]
    %v187 = vld [vmem:[#allocation2 + $0x380] sm:$0xff]
    %v188 = vld [vmem:[#allocation2 + $0x388] sm:$0xff]
    %v189 = vld [vmem:[#allocation2 + $0x390] sm:$0xff]
    %v190 = vld [vmem:[#allocation2 + $0x398] sm:$0xff]
    %v191 = vld [vmem:[#allocation2 + $0x3a0] sm:$0xff]
    %v192 = vld [vmem:[#allocation2 + $0x3a8] sm:$0xff]
    %v193 = vld [vmem:[#allocation2 + $0x3b0] sm:$0xff]
    %v194 = vld [vmem:[#allocation2 + $0x3b8] sm:$0xff]
    %v196 = vunpack.c.l.b16 %v74
    %v197 = vunpack.c.h.b16 %v74
    %v198 = vpack.c.b16 %v196, %v196
    %v199 = vpack.c.b16 %v197, %v197
    %v321 = vunpack.c.l.b16 %v75
    %v322 = vunpack.c.h.b16 %v75
    %v323 = vunpack.c.l.b16 %v76
    %v324 = vunpack.c.h.b16 %v76
    %v325 = vunpack.c.l.b16 %v77
    %v326 = vunpack.c.h.b16 %v77
    %v327 = vunpack.c.l.b16 %v78
    %v328 = vunpack.c.h.b16 %v78
    %v329 = vunpack.c.l.b16 %v79
    %v330 = vunpack.c.h.b16 %v79
    %v331 = vunpack.c.l.b16 %v80
    %v332 = vunpack.c.h.b16 %v80
    %v333 = vunpack.c.l.b16 %v81
    %v334 = vunpack.c.h.b16 %v81
    %v335 = vunpack.c.l.b16 %v82
    %v336 = vunpack.c.h.b16 %v82
    %v337 = vunpack.c.l.b16 %v83
    %v338 = vunpack.c.h.b16 %v83
    %v339 = vunpack.c.l.b16 %v84
    %v340 = vunpack.c.h.b16 %v84
    %v341 = vunpack.c.l.b16 %v85
    %v342 = vunpack.c.h.b16 %v85
    %v343 = vunpack.c.l.b16 %v86
    %v344 = vunpack.c.h.b16 %v86
    %v345 = vunpack.c.l.b16 %v87
    %v346 = vunpack.c.h.b16 %v87
    %v347 = vunpack.c.l.b16 %v88
    %v348 = vunpack.c.h.b16 %v88
    %v349 = vunpack.c.l.b16 %v89
    %v350 = vunpack.c.h.b16 %v89
    %v351 = vunpack.c.l.b16 %v90
    %v352 = vunpack.c.h.b16 %v90
    %v353 = vunpack.c.l.b16 %v91
    %v354 = vunpack.c.h.b16 %v91
    %v355 = vunpack.c.l.b16 %v92
    %v356 = vunpack.c.h.b16 %v92
    %v357 = vunpack.c.l.b16 %v93
    %v358 = vunpack.c.h.b16 %v93
    %v359 = vunpack.c.l.b16 %v94
    %v360 = vunpack.c.h.b16 %v94
    %v361 = vunpack.c.l.b16 %v95
    %v362 = vunpack.c.h.b16 %v95
    %v363 = vunpack.c.l.b16 %v96
    %v364 = vunpack.c.h.b16 %v96
    %v365 = vunpack.c.l.b16 %v97
    %v366 = vunpack.c.h.b16 %v97
    %v367 = vunpack.c.l.b16 %v98
    %v368 = vunpack.c.h.b16 %v98
    %v369 = vunpack.c.l.b16 %v99
    %v370 = vunpack.c.h.b16 %v99
    %v371 = vunpack.c.l.b16 %v100
    %v372 = vunpack.c.h.b16 %v100
    %v373 = vunpack.c.l.b16 %v101
    %v374 = vunpack.c.h.b16 %v101
    %v375 = vunpack.c.l.b16 %v102
    %v376 = vunpack.c.h.b16 %v102
    %v377 = vunpack.c.l.b16 %v103
    %v378 = vunpack.c.h.b16 %v103
    %v379 = vunpack.c.l.b16 %v104
    %v380 = vunpack.c.h.b16 %v104
    %v381 = vunpack.c.l.b16 %v105
    %v382 = vunpack.c.h.b16 %v105
    %v383 = vunpack.c.l.b16 %v106
    %v384 = vunpack.c.h.b16 %v106
    %v385 = vunpack.c.l.b16 %v107
    %v386 = vunpack.c.h.b16 %v107
    %v387 = vunpack.c.l.b16 %v108
    %v388 = vunpack.c.h.b16 %v108
    %v389 = vunpack.c.l.b16 %v109
    %v390 = vunpack.c.h.b16 %v109
    %v391 = vunpack.c.l.b16 %v110
    %v392 = vunpack.c.h.b16 %v110
    %v393 = vunpack.c.l.b16 %v111
    %v394 = vunpack.c.h.b16 %v111
    %v395 = vunpack.c.l.b16 %v112
    %v396 = vunpack.c.h.b16 %v112
    %v397 = vunpack.c.l.b16 %v113
    %v398 = vunpack.c.h.b16 %v113
    %v399 = vunpack.c.l.b16 %v114
    %v400 = vunpack.c.h.b16 %v114
    %v401 = vunpack.c.l.b16 %v115
    %v402 = vunpack.c.h.b16 %v115
    %v403 = vunpack.c.l.b16 %v116
    %v404 = vunpack.c.h.b16 %v116
    %v405 = vunpack.c.l.b16 %v117
    %v406 = vunpack.c.h.b16 %v117
    %v407 = vunpack.c.l.b16 %v118
    %v408 = vunpack.c.h.b16 %v118
    %v409 = vunpack.c.l.b16 %v119
    %v410 = vunpack.c.h.b16 %v119
    %v411 = vunpack.c.l.b16 %v120
    %v412 = vunpack.c.h.b16 %v120
    %v413 = vunpack.c.l.b16 %v121
    %v414 = vunpack.c.h.b16 %v121
    %v415 = vunpack.c.l.b16 %v122
    %v416 = vunpack.c.h.b16 %v122
    %v417 = vunpack.c.l.b16 %v123
    %v418 = vunpack.c.h.b16 %v123
    %v419 = vunpack.c.l.b16 %v124
    %v420 = vunpack.c.h.b16 %v124
    %v421 = vunpack.c.l.b16 %v125
    %v422 = vunpack.c.h.b16 %v125
    %v423 = vunpack.c.l.b16 %v126
    %v424 = vunpack.c.h.b16 %v126
    %v425 = vunpack.c.l.b16 %v127
    %v426 = vunpack.c.h.b16 %v127
    %v427 = vunpack.c.l.b16 %v128
    %v428 = vunpack.c.h.b16 %v128
    %v429 = vunpack.c.l.b16 %v129
    %v430 = vunpack.c.h.b16 %v129
    %v431 = vunpack.c.l.b16 %v130
    %v432 = vunpack.c.h.b16 %v130
    %v433 = vunpack.c.l.b16 %v131
    %v434 = vunpack.c.h.b16 %v131
    %v435 = vunpack.c.l.b16 %v132
    %v436 = vunpack.c.h.b16 %v132
    %v437 = vunpack.c.l.b16 %v133
    %v438 = vunpack.c.h.b16 %v133
    %v439 = vunpack.c.l.b16 %v134
    %v440 = vunpack.c.h.b16 %v134
    %v441 = vunpack.c.l.b16 %v135
    %v442 = vunpack.c.h.b16 %v135
    %v443 = vunpack.c.l.b16 %v136
    %v444 = vunpack.c.h.b16 %v136
    %v445 = vunpack.c.l.b16 %v137
    %v446 = vunpack.c.h.b16 %v137
    %v447 = vunpack.c.l.b16 %v138
    %v448 = vunpack.c.h.b16 %v138
    %v449 = vunpack.c.l.b16 %v139
    %v450 = vunpack.c.h.b16 %v139
    %v451 = vunpack.c.l.b16 %v140
    %v452 = vunpack.c.h.b16 %v140
    %v453 = vunpack.c.l.b16 %v141
    %v454 = vunpack.c.h.b16 %v141
    %v455 = vunpack.c.l.b16 %v142
    %v456 = vunpack.c.h.b16 %v142
    %v457 = vunpack.c.l.b16 %v143
    %v458 = vunpack.c.h.b16 %v143
    %v459 = vunpack.c.l.b16 %v144
    %v460 = vunpack.c.h.b16 %v144
    %v461 = vunpack.c.l.b16 %v145
    %v462 = vunpack.c.h.b16 %v145
    %v463 = vunpack.c.l.b16 %v146
    %v464 = vunpack.c.h.b16 %v146
    %v465 = vunpack.c.l.b16 %v147
    %v466 = vunpack.c.h.b16 %v147
    %v467 = vunpack.c.l.b16 %v148
    %v468 = vunpack.c.h.b16 %v148
    %v469 = vunpack.c.l.b16 %v149
    %v470 = vunpack.c.h.b16 %v149
    %v471 = vunpack.c.l.b16 %v150
    %v472 = vunpack.c.h.b16 %v150
    %v473 = vunpack.c.l.b16 %v151
    %v474 = vunpack.c.h.b16 %v151
    %v475 = vunpack.c.l.b16 %v152
    %v476 = vunpack.c.h.b16 %v152
    %v477 = vunpack.c.l.b16 %v153
    %v478 = vunpack.c.h.b16 %v153
    %v479 = vunpack.c.l.b16 %v154
    %v480 = vunpack.c.h.b16 %v154
    %v481 = vunpack.c.l.b16 %v155
    %v482 = vunpack.c.h.b16 %v155
    %v483 = vunpack.c.l.b16 %v156
    %v484 = vunpack.c.h.b16 %v156
    %v485 = vunpack.c.l.b16 %v157
    %v486 = vunpack.c.h.b16 %v157
    %v487 = vunpack.c.l.b16 %v158
    %v488 = vunpack.c.h.b16 %v158
    %v489 = vunpack.c.l.b16 %v159
    %v490 = vunpack.c.h.b16 %v159
    %v491 = vunpack.c.l.b16 %v160
    %v492 = vunpack.c.h.b16 %v160
    %v493 = vunpack.c.l.b16 %v161
    %v494 = vunpack.c.h.b16 %v161
    %v495 = vunpack.c.l.b16 %v162
    %v496 = vunpack.c.h.b16 %v162
    %v497 = vunpack.c.l.b16 %v163
    %v498 = vunpack.c.h.b16 %v163
    %v499 = vunpack.c.l.b16 %v164
    %v500 = vunpack.c.h.b16 %v164
    %v501 = vunpack.c.l.b16 %v165
    %v502 = vunpack.c.h.b16 %v165
    %v503 = vunpack.c.l.b16 %v166
    %v504 = vunpack.c.h.b16 %v166
    %v505 = vunpack.c.l.b16 %v167
    %v506 = vunpack.c.h.b16 %v167
    %v507 = vunpack.c.l.b16 %v168
    %v508 = vunpack.c.h.b16 %v168
    %v509 = vunpack.c.l.b16 %v169
    %v510 = vunpack.c.h.b16 %v169
    %v511 = vunpack.c.l.b16 %v170
    %v512 = vunpack.c.h.b16 %v170
    %v513 = vunpack.c.l.b16 %v171
    %v514 = vunpack.c.h.b16 %v171
    %v515 = vunpack.c.l.b16 %v172
    %v516 = vunpack.c.h.b16 %v172
    %v517 = vunpack.c.l.b16 %v173
    %v518 = vunpack.c.h.b16 %v173
    %v519 = vunpack.c.l.b16 %v174
    %v520 = vunpack.c.h.b16 %v174
    %v521 = vunpack.c.l.b16 %v175
    %v522 = vunpack.c.h.b16 %v175
    %v523 = vunpack.c.l.b16 %v176
    %v524 = vunpack.c.h.b16 %v176
    %v525 = vunpack.c.l.b16 %v177
    %v526 = vunpack.c.h.b16 %v177
    %v527 = vunpack.c.l.b16 %v178
    %v528 = vunpack.c.h.b16 %v178
    %v529 = vunpack.c.l.b16 %v179
    %v530 = vunpack.c.h.b16 %v179
    %v531 = vunpack.c.l.b16 %v180
    %v532 = vunpack.c.h.b16 %v180
    %v533 = vunpack.c.l.b16 %v181
    %v534 = vunpack.c.h.b16 %v181
    %v535 = vunpack.c.l.b16 %v182
    %v536 = vunpack.c.h.b16 %v182
    %v537 = vunpack.c.l.b16 %v183
    %v538 = vunpack.c.h.b16 %v183
    %v539 = vunpack.c.l.b16 %v184
    %v540 = vunpack.c.h.b16 %v184
    %v541 = vunpack.c.l.b16 %v185
    %v542 = vunpack.c.h.b16 %v185
    %v543 = vunpack.c.l.b16 %v186
    %v544 = vunpack.c.h.b16 %v186
    %v545 = vunpack.c.l.b16 %v187
    %v546 = vunpack.c.h.b16 %v187
    %v547 = vunpack.c.l.b16 %v188
    %v548 = vunpack.c.h.b16 %v188
    %v549 = vunpack.c.l.b16 %v189
    %v550 = vunpack.c.h.b16 %v189
    %v551 = vunpack.c.l.b16 %v190
    %v552 = vunpack.c.h.b16 %v190
    %v553 = vunpack.c.l.b16 %v191
    %v554 = vunpack.c.h.b16 %v191
    %v555 = vunpack.c.l.b16 %v192
    %v556 = vunpack.c.h.b16 %v192
    %v557 = vunpack.c.l.b16 %v193
    %v558 = vunpack.c.h.b16 %v193
    %v559 = vunpack.c.l.b16 %v194
    %v560 = vunpack.c.h.b16 %v194
    %v561 = vpack.c.b16 %v329, %v321
    %v562 = vpack.c.b16 %v330, %v322
    %v563 = vpack.c.b16 %v331, %v323
    %v564 = vpack.c.b16 %v332, %v324
    %v565 = vpack.c.b16 %v333, %v325
    %v566 = vpack.c.b16 %v334, %v326
    %v567 = vpack.c.b16 %v335, %v327
    %v568 = vpack.c.b16 %v336, %v328
    %v569 = vpack.c.b16 %v345, %v337
    %v570 = vpack.c.b16 %v346, %v338
    %v571 = vpack.c.b16 %v347, %v339
    %v572 = vpack.c.b16 %v348, %v340
    %v573 = vpack.c.b16 %v349, %v341
    %v574 = vpack.c.b16 %v350, %v342
    %v575 = vpack.c.b16 %v351, %v343
    %v576 = vpack.c.b16 %v352, %v344
    %v577 = vpack.c.b16 %v361, %v353
    %v578 = vpack.c.b16 %v362, %v354
    %v579 = vpack.c.b16 %v363, %v355
    %v580 = vpack.c.b16 %v364, %v356
    %v581 = vpack.c.b16 %v365, %v357
    %v582 = vpack.c.b16 %v366, %v358
    %v583 = vpack.c.b16 %v367, %v359
    %v584 = vpack.c.b16 %v368, %v360
    %v585 = vpack.c.b16 %v377, %v369
    %v586 = vpack.c.b16 %v378, %v370
    %v587 = vpack.c.b16 %v379, %v371
    %v588 = vpack.c.b16 %v380, %v372
    %v589 = vpack.c.b16 %v381, %v373
    %v590 = vpack.c.b16 %v382, %v374
    %v591 = vpack.c.b16 %v383, %v375
    %v592 = vpack.c.b16 %v384, %v376
    %v593 = vpack.c.b16 %v393, %v385
    %v594 = vpack.c.b16 %v394, %v386
    %v595 = vpack.c.b16 %v395, %v387
    %v596 = vpack.c.b16 %v396, %v388
    %v597 = vpack.c.b16 %v397, %v389
    %v598 = vpack.c.b16 %v398, %v390
    %v599 = vpack.c.b16 %v399, %v391
    %v600 = vpack.c.b16 %v400, %v392
    %v601 = vpack.c.b16 %v409, %v401
    %v602 = vpack.c.b16 %v410, %v402
    %v603 = vpack.c.b16 %v411, %v403
    %v604 = vpack.c.b16 %v412, %v404
    %v605 = vpack.c.b16 %v413, %v405
    %v606 = vpack.c.b16 %v414, %v406
    %v607 = vpack.c.b16 %v415, %v407
    %v608 = vpack.c.b16 %v416, %v408
    %v609 = vpack.c.b16 %v425, %v417
    %v610 = vpack.c.b16 %v426, %v418
    %v611 = vpack.c.b16 %v427, %v419
    %v612 = vpack.c.b16 %v428, %v420
    %v613 = vpack.c.b16 %v429, %v421
    %v614 = vpack.c.b16 %v430, %v422
    %v615 = vpack.c.b16 %v431, %v423
    %v616 = vpack.c.b16 %v432, %v424
    %v617 = vpack.c.b16 %v441, %v433
    %v618 = vpack.c.b16 %v442, %v434
    %v619 = vpack.c.b16 %v443, %v435
    %v620 = vpack.c.b16 %v444, %v436
    %v621 = vpack.c.b16 %v445, %v437
    %v622 = vpack.c.b16 %v446, %v438
    %v623 = vpack.c.b16 %v447, %v439
    %v624 = vpack.c.b16 %v448, %v440
    %v625 = vpack.c.b16 %v457, %v449
    %v626 = vpack.c.b16 %v458, %v450
    %v627 = vpack.c.b16 %v459, %v451
    %v628 = vpack.c.b16 %v460, %v452
    %v629 = vpack.c.b16 %v461, %v453
    %v630 = vpack.c.b16 %v462, %v454
    %v631 = vpack.c.b16 %v463, %v455
    %v632 = vpack.c.b16 %v464, %v456
    %v633 = vpack.c.b16 %v473, %v465
    %v634 = vpack.c.b16 %v474, %v466
    %v635 = vpack.c.b16 %v475, %v467
    %v636 = vpack.c.b16 %v476, %v468
    %v637 = vpack.c.b16 %v477, %v469
    %v638 = vpack.c.b16 %v478, %v470
    %v639 = vpack.c.b16 %v479, %v471
    %v640 = vpack.c.b16 %v480, %v472
    %v641 = vpack.c.b16 %v489, %v481
    %v642 = vpack.c.b16 %v490, %v482
    %v643 = vpack.c.b16 %v491, %v483
    %v644 = vpack.c.b16 %v492, %v484
    %v645 = vpack.c.b16 %v493, %v485
    %v646 = vpack.c.b16 %v494, %v486
    %v647 = vpack.c.b16 %v495, %v487
    %v648 = vpack.c.b16 %v496, %v488
    %v649 = vpack.c.b16 %v505, %v497
    %v650 = vpack.c.b16 %v506, %v498
    %v651 = vpack.c.b16 %v507, %v499
    %v652 = vpack.c.b16 %v508, %v500
    %v653 = vpack.c.b16 %v509, %v501
    %v654 = vpack.c.b16 %v510, %v502
    %v655 = vpack.c.b16 %v511, %v503
    %v656 = vpack.c.b16 %v512, %v504
    %v657 = vpack.c.b16 %v521, %v513
    %v658 = vpack.c.b16 %v522, %v514
    %v659 = vpack.c.b16 %v523, %v515
    %v660 = vpack.c.b16 %v524, %v516
    %v661 = vpack.c.b16 %v525, %v517
    %v662 = vpack.c.b16 %v526, %v518
    %v663 = vpack.c.b16 %v527, %v519
    %v664 = vpack.c.b16 %v528, %v520
    %v665 = vpack.c.b16 %v537, %v529
    %v666 = vpack.c.b16 %v538, %v530
    %v667 = vpack.c.b16 %v539, %v531
    %v668 = vpack.c.b16 %v540, %v532
    %v669 = vpack.c.b16 %v541, %v533
    %v670 = vpack.c.b16 %v542, %v534
    %v671 = vpack.c.b16 %v543, %v535
    %v672 = vpack.c.b16 %v544, %v536
    %v673 = vpack.c.b16 %v553, %v545
    %v674 = vpack.c.b16 %v554, %v546
    %v675 = vpack.c.b16 %v555, %v547
    %v676 = vpack.c.b16 %v556, %v548
    %v677 = vpack.c.b16 %v557, %v549
    %v678 = vpack.c.b16 %v558, %v550
    %v679 = vpack.c.b16 %v559, %v551
    %v680 = vpack.c.b16 %v560, %v552
    %vm801 = vcmask 916480
    %v803 = vsel %vm801, %v199, 0
    %805 = vmatprep.subr.bf16.mxu0 %v562
    %806 = vmatpush1.bf16.msra.mxu0 %v561
    %807 = vmatprep.subr.bf16.mxu0 %v570
    %808 = vmatpush1.bf16.msra.mxu0 %v569
    %809 = vmatprep.subr.bf16.mxu0 %v578
    %810 = vmatpush1.bf16.msra.mxu0 %v577
    %811 = vmatprep.subr.bf16.mxu0 %v586
    %812 = vmatpush1.bf16.msra.mxu0 %v585
    %813 = vmatprep.subr.bf16.mxu0 %v594
    %814 = vmatpush1.bf16.msra.mxu0 %v593
    %815 = vmatprep.subr.bf16.mxu0 %v602
    %816 = vmatpush1.bf16.msra.mxu0 %v601
    %817 = vmatprep.subr.bf16.mxu0 %v610
    %818 = vmatpush1.bf16.msra.mxu0 %v609
    %819 = vmatprep.subr.bf16.mxu0 %v618
    %820 = vmatpush1.bf16.msra.mxu0 %v617
    %821 = vmatprep.subr.bf16.mxu0 %v626
    %822 = vmatpush1.bf16.msra.mxu0 %v625
    %823 = vmatprep.subr.bf16.mxu0 %v634
    %824 = vmatpush1.bf16.msra.mxu0 %v633
    %825 = vmatprep.subr.bf16.mxu0 %v642
    %826 = vmatpush1.bf16.msra.mxu0 %v641
    %827 = vmatprep.subr.bf16.mxu0 %v650
    %828 = vmatpush1.bf16.msra.mxu0 %v649
    %829 = vmatprep.subr.bf16.mxu0 %v658
    %830 = vmatpush1.bf16.msra.mxu0 %v657
    %831 = vmatprep.subr.bf16.mxu0 %v666
    %832 = vmatpush1.bf16.msra.mxu0 %v665
    %833 = vmatprep.subr.bf16.mxu0 %v674
    %834 = vmatpush1.bf16.msra.mxu0 %v673
    %835 = vmatprep.subr.bf16.mxu0 0
    %836 = vmatpush1.bf16.msra.mxu0 0
    %837 = vmatprep.mubr.bf16.mxu0 %v803
    %838 = vmatmul.mubr.bf16.gmra.mrb[0].mxu0 %v198
    %v839 = vpop.f32.mrb[0].mxu0
    %v840 = vadd.f32 0.0, %v839
    %v841 = vpop.f32.mrb[0].mxu0
    %v842 = vadd.f32 0.0, %v841
    %v843 = vpop.f32.mrb[0].mxu0
    %v844 = vpop.f32.mrb[0].mxu0
    %845 = vdwg.mxu0
    %846 = vmatprep.subr.bf16.mxu0 %v564
    %847 = vmatpush1.bf16.msra.mxu0 %v563
    %848 = vmatprep.subr.bf16.mxu0 %v572
    %849 = vmatpush1.bf16.msra.mxu0 %v571
    %850 = vmatprep.subr.bf16.mxu0 %v580
    %851 = vmatpush1.bf16.msra.mxu0 %v579
    %852 = vmatprep.subr.bf16.mxu0 %v588
    %853 = vmatpush1.bf16.msra.mxu0 %v587
    %854 = vmatprep.subr.bf16.mxu0 %v596
    %855 = vmatpush1.bf16.msra.mxu0 %v595
    %856 = vmatprep.subr.bf16.mxu0 %v604
    %857 = vmatpush1.bf16.msra.mxu0 %v603
    %858 = vmatprep.subr.bf16.mxu0 %v612
    %859 = vmatpush1.bf16.msra.mxu0 %v611
    %860 = vmatprep.subr.bf16.mxu0 %v620
    %861 = vmatpush1.bf16.msra.mxu0 %v619
    %862 = vmatprep.subr.bf16.mxu0 %v628
    %863 = vmatpush1.bf16.msra.mxu0 %v627
    %864 = vmatprep.subr.bf16.mxu0 %v636
    %865 = vmatpush1.bf16.msra.mxu0 %v635
    %866 = vmatprep.subr.bf16.mxu0 %v644
    %867 = vmatpush1.bf16.msra.mxu0 %v643
    %868 = vmatprep.subr.bf16.mxu0 %v652
    %869 = vmatpush1.bf16.msra.mxu0 %v651
    %870 = vmatprep.subr.bf16.mxu0 %v660
    %871 = vmatpush1.bf16.msra.mxu0 %v659
    %872 = vmatprep.subr.bf16.mxu0 %v668
    %873 = vmatpush1.bf16.msra.mxu0 %v667
    %874 = vmatprep.subr.bf16.mxu0 %v676
    %875 = vmatpush1.bf16.msra.mxu0 %v675
    %876 = vmatprep.subr.bf16.mxu0 0
    %877 = vmatpush1.bf16.msra.mxu0 0
    %878 = vmatprep.mubr.bf16.mxu0 %v803
    %879 = vmatmul.mubr.bf16.gmra.mrb[0].mxu0 %v198
    %v880 = vpop.f32.mrb[0].mxu0
    %v881 = vadd.f32 0.0, %v880
    %v882 = vpop.f32.mrb[0].mxu0
    %v883 = vadd.f32 0.0, %v882
    %v884 = vpop.f32.mrb[0].mxu0
    %v885 = vpop.f32.mrb[0].mxu0
    %886 = vdwg.mxu0
    %887 = vmatprep.subr.bf16.mxu0 %v566
    %888 = vmatpush1.bf16.msra.mxu0 %v565
    %889 = vmatprep.subr.bf16.mxu0 %v574
    %890 = vmatpush1.bf16.msra.mxu0 %v573
    %891 = vmatprep.subr.bf16.mxu0 %v582
    %892 = vmatpush1.bf16.msra.mxu0 %v581
    %893 = vmatprep.subr.bf16.mxu0 %v590
    %894 = vmatpush1.bf16.msra.mxu0 %v589
    %895 = vmatprep.subr.bf16.mxu0 %v598
    %896 = vmatpush1.bf16.msra.mxu0 %v597
    %897 = vmatprep.subr.bf16.mxu0 %v606
    %898 = vmatpush1.bf16.msra.mxu0 %v605
    %899 = vmatprep.subr.bf16.mxu0 %v614
    %900 = vmatpush1.bf16.msra.mxu0 %v613
    %901 = vmatprep.subr.bf16.mxu0 %v622
    %902 = vmatpush1.bf16.msra.mxu0 %v621
    %903 = vmatprep.subr.bf16.mxu0 %v630
    %904 = vmatpush1.bf16.msra.mxu0 %v629
    %905 = vmatprep.subr.bf16.mxu0 %v638
    %906 = vmatpush1.bf16.msra.mxu0 %v637
    %907 = vmatprep.subr.bf16.mxu0 %v646
    %908 = vmatpush1.bf16.msra.mxu0 %v645
    %909 = vmatprep.subr.bf16.mxu0 %v654
    %910 = vmatpush1.bf16.msra.mxu0 %v653
    %911 = vmatprep.subr.bf16.mxu0 %v662
    %912 = vmatpush1.bf16.msra.mxu0 %v661
    %913 = vmatprep.subr.bf16.mxu0 %v670
    %914 = vmatpush1.bf16.msra.mxu0 %v669
    %915 = vmatprep.subr.bf16.mxu0 %v678
    %916 = vmatpush1.bf16.msra.mxu0 %v677
    %917 = vmatprep.subr.bf16.mxu0 0
    %918 = vmatpush1.bf16.msra.mxu0 0
    %919 = vmatprep.mubr.bf16.mxu0 %v803
    %920 = vmatmul.mubr.bf16.gmra.mrb[0].mxu0 %v198
    %v921 = vpop.f32.mrb[0].mxu0
    %v922 = vadd.f32 0.0, %v921
    %v923 = vpop.f32.mrb[0].mxu0
    %v924 = vadd.f32 0.0, %v923
    %v925 = vpop.f32.mrb[0].mxu0
    %v926 = vpop.f32.mrb[0].mxu0
    %927 = vdwg.mxu0
    %928 = vmatprep.subr.bf16.mxu0 %v568
    %929 = vmatpush1.bf16.msra.mxu0 %v567
    %930 = vmatprep.subr.bf16.mxu0 %v576
    %931 = vmatpush1.bf16.msra.mxu0 %v575
    %932 = vmatprep.subr.bf16.mxu0 %v584
    %933 = vmatpush1.bf16.msra.mxu0 %v583
    %934 = vmatprep.subr.bf16.mxu0 %v592
    %935 = vmatpush1.bf16.msra.mxu0 %v591
    %936 = vmatprep.subr.bf16.mxu0 %v600
    %937 = vmatpush1.bf16.msra.mxu0 %v599
    %938 = vmatprep.subr.bf16.mxu0 %v608
    %939 = vmatpush1.bf16.msra.mxu0 %v607
    %940 = vmatprep.subr.bf16.mxu0 %v616
    %941 = vmatpush1.bf16.msra.mxu0 %v615
    %942 = vmatprep.subr.bf16.mxu0 %v624
    %943 = vmatpush1.bf16.msra.mxu0 %v623
    %944 = vmatprep.subr.bf16.mxu0 %v632
    %945 = vmatpush1.bf16.msra.mxu0 %v631
    %946 = vmatprep.subr.bf16.mxu0 %v640
    %947 = vmatpush1.bf16.msra.mxu0 %v639
    %948 = vmatprep.subr.bf16.mxu0 %v648
    %949 = vmatpush1.bf16.msra.mxu0 %v647
    %950 = vmatprep.subr.bf16.mxu0 %v656
    %951 = vmatpush1.bf16.msra.mxu0 %v655
    %952 = vmatprep.subr.bf16.mxu0 %v664
    %953 = vmatpush1.bf16.msra.mxu0 %v663
    %954 = vmatprep.subr.bf16.mxu0 %v672
    %955 = vmatpush1.bf16.msra.mxu0 %v671
    %956 = vmatprep.subr.bf16.mxu0 %v680
    %957 = vmatpush1.bf16.msra.mxu0 %v679
    %958 = vmatprep.subr.bf16.mxu0 0
    %959 = vmatpush1.bf16.msra.mxu0 0
    %960 = vmatprep.mubr.bf16.mxu0 %v803
    %961 = vmatmul.mubr.bf16.gmra.mrb[0].mxu0 %v198
    %v962 = vpop.f32.mrb[0].mxu0
    %v963 = vadd.f32 0.0, %v962
    %v964 = vpop.f32.mrb[0].mxu0
    %v965 = vadd.f32 0.0, %v964
    %v966 = vpop.f32.mrb[0].mxu0
    %v967 = vpop.f32.mrb[0].mxu0
    %968 = vdwg.mxu0
    %v969 = vpack.c.bf16 %v840, %v840
    %v970 = vpack.c.bf16 %v842, %v842
    %v971 = vpack.c.bf16 %v881, %v881
    %v972 = vpack.c.bf16 %v883, %v883
    %v973 = vpack.c.bf16 %v922, %v922
    %v974 = vpack.c.bf16 %v924, %v924
    %v975 = vpack.c.bf16 %v963, %v963
    %v976 = vpack.c.bf16 %v965, %v965
    %v977 = vld [vmem:[#allocation4] sm:$0xff]
    %v978 = vld [vmem:[#allocation4 + $0x8] sm:$0xff]
    %v979 = vld [vmem:[#allocation4 + $0x10] sm:$0xff]
    %v980 = vld [vmem:[#allocation4 + $0x18] sm:$0xff]
    %v981 = vld [vmem:[#allocation4 + $0x20] sm:$0xff]
    %v982 = vld [vmem:[#allocation4 + $0x28] sm:$0xff]
    %v983 = vld [vmem:[#allocation4 + $0x30] sm:$0xff]
    %v984 = vld [vmem:[#allocation4 + $0x38] sm:$0xff]
    %v985 = vld [vmem:[#allocation4 + $0x40] sm:$0xff]
    %v986 = vld [vmem:[#allocation4 + $0x48] sm:$0xff]
    %v987 = vld [vmem:[#allocation4 + $0x50] sm:$0xff]
    %v988 = vld [vmem:[#allocation4 + $0x58] sm:$0xff]
    %v989 = vld [vmem:[#allocation4 + $0x60] sm:$0xff]
    %v990 = vld [vmem:[#allocation4 + $0x68] sm:$0xff]
    %v991 = vld [vmem:[#allocation4 + $0x70] sm:$0xff]
    %v992 = vld [vmem:[#allocation4 + $0x78] sm:$0xff]
    %v993 = vld [vmem:[#allocation4 + $0x80] sm:$0xff]
    %v994 = vld [vmem:[#allocation4 + $0x88] sm:$0xff]
    %v995 = vld [vmem:[#allocation4 + $0x90] sm:$0xff]
    %v996 = vld [vmem:[#allocation4 + $0x98] sm:$0xff]
    %v997 = vld [vmem:[#allocation4 + $0xa0] sm:$0xff]
    %v998 = vld [vmem:[#allocation4 + $0xa8] sm:$0xff]
    %v999 = vld [vmem:[#allocation4 + $0xb0] sm:$0xff]
    %v1000 = vld [vmem:[#allocation4 + $0xb8] sm:$0xff]
    %v1001 = vld [vmem:[#allocation4 + $0xc0] sm:$0xff]
    %v1002 = vld [vmem:[#allocation4 + $0xc8] sm:$0xff]
    %v1003 = vld [vmem:[#allocation4 + $0xd0] sm:$0xff]
    %v1004 = vld [vmem:[#allocation4 + $0xd8] sm:$0xff]
    %v1005 = vld [vmem:[#allocation4 + $0xe0] sm:$0xff]
    %v1006 = vld [vmem:[#allocation4 + $0xe8] sm:$0xff]
    %v1007 = vld [vmem:[#allocation4 + $0xf0] sm:$0xff]
    %v1008 = vld [vmem:[#allocation4 + $0xf8] sm:$0xff]
    %v1009 = vld [vmem:[#allocation4 + $0x100] sm:$0xff]
    %v1010 = vld [vmem:[#allocation4 + $0x108] sm:$0xff]
    %v1011 = vld [vmem:[#allocation4 + $0x110] sm:$0xff]
    %v1012 = vld [vmem:[#allocation4 + $0x118] sm:$0xff]
    %v1013 = vld [vmem:[#allocation4 + $0x120] sm:$0xff]
    %v1014 = vld [vmem:[#allocation4 + $0x128] sm:$0xff]
    %v1015 = vld [vmem:[#allocation4 + $0x130] sm:$0xff]
    %v1016 = vld [vmem:[#allocation4 + $0x138] sm:$0xff]
    %v1017 = vld [vmem:[#allocation4 + $0x140] sm:$0xff]
    %v1018 = vld [vmem:[#allocation4 + $0x148] sm:$0xff]
    %v1019 = vld [vmem:[#allocation4 + $0x150] sm:$0xff]
    %v1020 = vld [vmem:[#allocation4 + $0x158] sm:$0xff]
    %v1021 = vld [vmem:[#allocation4 + $0x160] sm:$0xff]
    %v1022 = vld [vmem:[#allocation4 + $0x168] sm:$0xff]
    %v1023 = vld [vmem:[#allocation4 + $0x170] sm:$0xff]
    %v1024 = vld [vmem:[#allocation4 + $0x178] sm:$0xff]
    %v1025 = vld [vmem:[#allocation4 + $0x180] sm:$0xff]
    %v1026 = vld [vmem:[#allocation4 + $0x188] sm:$0xff]
    %v1027 = vld [vmem:[#allocation4 + $0x190] sm:$0xff]
    %v1028 = vld [vmem:[#allocation4 + $0x198] sm:$0xff]
    %v1029 = vld [vmem:[#allocation4 + $0x1a0] sm:$0xff]
    %v1030 = vld [vmem:[#allocation4 + $0x1a8] sm:$0xff]
    %v1031 = vld [vmem:[#allocation4 + $0x1b0] sm:$0xff]
    %v1032 = vld [vmem:[#allocation4 + $0x1b8] sm:$0xff]
    %v1033 = vld [vmem:[#allocation4 + $0x1c0] sm:$0xff]
    %v1034 = vld [vmem:[#allocation4 + $0x1c8] sm:$0xff]
    %v1035 = vld [vmem:[#allocation4 + $0x1d0] sm:$0xff]
    %v1036 = vld [vmem:[#allocation4 + $0x1d8] sm:$0xff]
    %v1037 = vld [vmem:[#allocation4 + $0x1e0] sm:$0xff]
    %v1038 = vld [vmem:[#allocation4 + $0x1e8] sm:$0xff]
    %v1039 = vld [vmem:[#allocation4 + $0x1f0] sm:$0xff]
    %v1040 = vld [vmem:[#allocation4 + $0x1f8] sm:$0xff]
    %v1041 = vld [vmem:[#allocation4 + $0x200] sm:$0xff]
    %v1042 = vld [vmem:[#allocation4 + $0x208] sm:$0xff]
    %v1043 = vld [vmem:[#allocation4 + $0x210] sm:$0xff]
    %v1044 = vld [vmem:[#allocation4 + $0x218] sm:$0xff]
    %v1045 = vld [vmem:[#allocation4 + $0x220] sm:$0xff]
    %v1046 = vld [vmem:[#allocation4 + $0x228] sm:$0xff]
    %v1047 = vld [vmem:[#allocation4 + $0x230] sm:$0xff]
    %v1048 = vld [vmem:[#allocation4 + $0x238] sm:$0xff]
    %v1049 = vld [vmem:[#allocation4 + $0x240] sm:$0xff]
    %v1050 = vld [vmem:[#allocation4 + $0x248] sm:$0xff]
    %v1051 = vld [vmem:[#allocation4 + $0x250] sm:$0xff]
    %v1052 = vld [vmem:[#allocation4 + $0x258] sm:$0xff]
    %v1053 = vld [vmem:[#allocation4 + $0x260] sm:$0xff]
    %v1054 = vld [vmem:[#allocation4 + $0x268] sm:$0xff]
    %v1055 = vld [vmem:[#allocation4 + $0x270] sm:$0xff]
    %v1056 = vld [vmem:[#allocation4 + $0x278] sm:$0xff]
    %v1057 = vld [vmem:[#allocation4 + $0x280] sm:$0xff]
    %v1058 = vld [vmem:[#allocation4 + $0x288] sm:$0xff]
    %v1059 = vld [vmem:[#allocation4 + $0x290] sm:$0xff]
    %v1060 = vld [vmem:[#allocation4 + $0x298] sm:$0xff]
    %v1061 = vld [vmem:[#allocation4 + $0x2a0] sm:$0xff]
    %v1062 = vld [vmem:[#allocation4 + $0x2a8] sm:$0xff]
    %v1063 = vld [vmem:[#allocation4 + $0x2b0] sm:$0xff]
    %v1064 = vld [vmem:[#allocation4 + $0x2b8] sm:$0xff]
    %v1065 = vld [vmem:[#allocation4 + $0x2c0] sm:$0xff]
    %v1066 = vld [vmem:[#allocation4 + $0x2c8] sm:$0xff]
    %v1067 = vld [vmem:[#allocation4 + $0x2d0] sm:$0xff]
    %v1068 = vld [vmem:[#allocation4 + $0x2d8] sm:$0xff]
    %v1069 = vld [vmem:[#allocation4 + $0x2e0] sm:$0xff]
    %v1070 = vld [vmem:[#allocation4 + $0x2e8] sm:$0xff]
    %v1071 = vld [vmem:[#allocation4 + $0x2f0] sm:$0xff]
    %v1072 = vld [vmem:[#allocation4 + $0x2f8] sm:$0xff]
    %v1073 = vld [vmem:[#allocation4 + $0x300] sm:$0xff]
    %v1074 = vld [vmem:[#allocation4 + $0x308] sm:$0xff]
    %v1075 = vld [vmem:[#allocation4 + $0x310] sm:$0xff]
    %v1076 = vld [vmem:[#allocation4 + $0x318] sm:$0xff]
    %v1077 = vld [vmem:[#allocation4 + $0x320] sm:$0xff]
    %v1078 = vld [vmem:[#allocation4 + $0x328] sm:$0xff]
    %v1079 = vld [vmem:[#allocation4 + $0x330] sm:$0xff]
    %v1080 = vld [vmem:[#allocation4 + $0x338] sm:$0xff]
    %v1081 = vld [vmem:[#allocation4 + $0x340] sm:$0xff]
    %v1082 = vld [vmem:[#allocation4 + $0x348] sm:$0xff]
    %v1083 = vld [vmem:[#allocation4 + $0x350] sm:$0xff]
    %v1084 = vld [vmem:[#allocation4 + $0x358] sm:$0xff]
    %v1085 = vld [vmem:[#allocation4 + $0x360] sm:$0xff]
    %v1086 = vld [vmem:[#allocation4 + $0x368] sm:$0xff]
    %v1087 = vld [vmem:[#allocation4 + $0x370] sm:$0xff]
    %v1088 = vld [vmem:[#allocation4 + $0x378] sm:$0xff]
    %v1089 = vld [vmem:[#allocation4 + $0x380] sm:$0xff]
    %v1090 = vld [vmem:[#allocation4 + $0x388] sm:$0xff]
    %v1091 = vld [vmem:[#allocation4 + $0x390] sm:$0xff]
    %v1092 = vld [vmem:[#allocation4 + $0x398] sm:$0xff]
    %v1093 = vld [vmem:[#allocation4 + $0x3a0] sm:$0xff]
    %v1094 = vld [vmem:[#allocation4 + $0x3a8] sm:$0xff]
    %v1095 = vld [vmem:[#allocation4 + $0x3b0] sm:$0xff]
    %v1096 = vld [vmem:[#allocation4 + $0x3b8] sm:$0xff]
    %v1097 = vld [vmem:[#allocation4 + $0x3c0] sm:$0xff]
    %v1098 = vld [vmem:[#allocation4 + $0x3c8] sm:$0xff]
    %v1099 = vld [vmem:[#allocation4 + $0x3d0] sm:$0xff]
    %v1100 = vld [vmem:[#allocation4 + $0x3d8] sm:$0xff]
    %v1101 = vld [vmem:[#allocation4 + $0x3e0] sm:$0xff]
    %v1102 = vld [vmem:[#allocation4 + $0x3e8] sm:$0xff]
    %v1103 = vld [vmem:[#allocation4 + $0x3f0] sm:$0xff]
    %v1104 = vld [vmem:[#allocation4 + $0x3f8] sm:$0xff]
    %v1105 = vld [vmem:[#allocation4 + $0x400] sm:$0xff]
    %v1106 = vld [vmem:[#allocation4 + $0x408] sm:$0xff]
    %v1107 = vld [vmem:[#allocation4 + $0x410] sm:$0xff]
    %v1108 = vld [vmem:[#allocation4 + $0x418] sm:$0xff]
    %v1109 = vld [vmem:[#allocation4 + $0x420] sm:$0xff]
    %v1110 = vld [vmem:[#allocation4 + $0x428] sm:$0xff]
    %v1111 = vld [vmem:[#allocation4 + $0x430] sm:$0xff]
    %v1112 = vld [vmem:[#allocation4 + $0x438] sm:$0xff]
    %v1113 = vld [vmem:[#allocation4 + $0x440] sm:$0xff]
    %v1114 = vld [vmem:[#allocation4 + $0x448] sm:$0xff]
    %v1115 = vld [vmem:[#allocation4 + $0x450] sm:$0xff]
    %v1116 = vld [vmem:[#allocation4 + $0x458] sm:$0xff]
    %v1117 = vld [vmem:[#allocation4 + $0x460] sm:$0xff]
    %v1118 = vld [vmem:[#allocation4 + $0x468] sm:$0xff]
    %v1119 = vld [vmem:[#allocation4 + $0x470] sm:$0xff]
    %v1120 = vld [vmem:[#allocation4 + $0x478] sm:$0xff]
    %v1121 = vld [vmem:[#allocation4 + $0x480] sm:$0xff]
    %v1122 = vld [vmem:[#allocation4 + $0x488] sm:$0xff]
    %v1123 = vld [vmem:[#allocation4 + $0x490] sm:$0xff]
    %v1124 = vld [vmem:[#allocation4 + $0x498] sm:$0xff]
    %v1125 = vld [vmem:[#allocation4 + $0x4a0] sm:$0xff]
    %v1126 = vld [vmem:[#allocation4 + $0x4a8] sm:$0xff]
    %v1127 = vld [vmem:[#allocation4 + $0x4b0] sm:$0xff]
    %v1128 = vld [vmem:[#allocation4 + $0x4b8] sm:$0xff]
    %v1129 = vld [vmem:[#allocation4 + $0x4c0] sm:$0xff]
    %v1130 = vld [vmem:[#allocation4 + $0x4c8] sm:$0xff]
    %v1131 = vld [vmem:[#allocation4 + $0x4d0] sm:$0xff]
    %v1132 = vld [vmem:[#allocation4 + $0x4d8] sm:$0xff]
    %v1133 = vld [vmem:[#allocation4 + $0x4e0] sm:$0xff]
    %v1134 = vld [vmem:[#allocation4 + $0x4e8] sm:$0xff]
    %v1135 = vld [vmem:[#allocation4 + $0x4f0] sm:$0xff]
    %v1136 = vld [vmem:[#allocation4 + $0x4f8] sm:$0xff]
    %v1137 = vld [vmem:[#allocation4 + $0x500] sm:$0xff]
    %v1138 = vld [vmem:[#allocation4 + $0x508] sm:$0xff]
    %v1139 = vld [vmem:[#allocation4 + $0x510] sm:$0xff]
    %v1140 = vld [vmem:[#allocation4 + $0x518] sm:$0xff]
    %v1141 = vld [vmem:[#allocation4 + $0x520] sm:$0xff]
    %v1142 = vld [vmem:[#allocation4 + $0x528] sm:$0xff]
    %v1143 = vld [vmem:[#allocation4 + $0x530] sm:$0xff]
    %v1144 = vld [vmem:[#allocation4 + $0x538] sm:$0xff]
    %v1145 = vld [vmem:[#allocation4 + $0x540] sm:$0xff]
    %v1146 = vld [vmem:[#allocation4 + $0x548] sm:$0xff]
    %v1147 = vld [vmem:[#allocation4 + $0x550] sm:$0xff]
    %v1148 = vld [vmem:[#allocation4 + $0x558] sm:$0xff]
    %v1149 = vld [vmem:[#allocation4 + $0x560] sm:$0xff]
    %v1150 = vld [vmem:[#allocation4 + $0x568] sm:$0xff]
    %v1151 = vld [vmem:[#allocation4 + $0x570] sm:$0xff]
    %v1152 = vld [vmem:[#allocation4 + $0x578] sm:$0xff]
    %v1153 = vld [vmem:[#allocation4 + $0x580] sm:$0xff]
    %v1154 = vld [vmem:[#allocation4 + $0x588] sm:$0xff]
    %v1155 = vld [vmem:[#allocation4 + $0x590] sm:$0xff]
    %v1156 = vld [vmem:[#allocation4 + $0x598] sm:$0xff]
    %v1157 = vld [vmem:[#allocation4 + $0x5a0] sm:$0xff]
    %v1158 = vld [vmem:[#allocation4 + $0x5a8] sm:$0xff]
    %v1159 = vld [vmem:[#allocation4 + $0x5b0] sm:$0xff]
    %v1160 = vld [vmem:[#allocation4 + $0x5b8] sm:$0xff]
    %v1161 = vld [vmem:[#allocation4 + $0x5c0] sm:$0xff]
    %v1162 = vld [vmem:[#allocation4 + $0x5c8] sm:$0xff]
    %v1163 = vld [vmem:[#allocation4 + $0x5d0] sm:$0xff]
    %v1164 = vld [vmem:[#allocation4 + $0x5d8] sm:$0xff]
    %v1165 = vld [vmem:[#allocation4 + $0x5e0] sm:$0xff]
    %v1166 = vld [vmem:[#allocation4 + $0x5e8] sm:$0xff]
    %v1167 = vld [vmem:[#allocation4 + $0x5f0] sm:$0xff]
    %v1168 = vld [vmem:[#allocation4 + $0x5f8] sm:$0xff]
    %v1169 = vld [vmem:[#allocation4 + $0x600] sm:$0xff]
    %v1170 = vld [vmem:[#allocation4 + $0x608] sm:$0xff]
    %v1171 = vld [vmem:[#allocation4 + $0x610] sm:$0xff]
    %v1172 = vld [vmem:[#allocation4 + $0x618] sm:$0xff]
    %v1173 = vld [vmem:[#allocation4 + $0x620] sm:$0xff]
    %v1174 = vld [vmem:[#allocation4 + $0x628] sm:$0xff]
    %v1175 = vld [vmem:[#allocation4 + $0x630] sm:$0xff]
    %v1176 = vld [vmem:[#allocation4 + $0x638] sm:$0xff]
    %v1177 = vld [vmem:[#allocation4 + $0x640] sm:$0xff]
    %v1178 = vld [vmem:[#allocation4 + $0x648] sm:$0xff]
    %v1179 = vld [vmem:[#allocation4 + $0x650] sm:$0xff]
    %v1180 = vld [vmem:[#allocation4 + $0x658] sm:$0xff]
    %v1181 = vld [vmem:[#allocation4 + $0x660] sm:$0xff]
    %v1182 = vld [vmem:[#allocation4 + $0x668] sm:$0xff]
    %v1183 = vld [vmem:[#allocation4 + $0x670] sm:$0xff]
    %v1184 = vld [vmem:[#allocation4 + $0x678] sm:$0xff]
    %v1185 = vld [vmem:[#allocation4 + $0x680] sm:$0xff]
    %v1186 = vld [vmem:[#allocation4 + $0x688] sm:$0xff]
    %v1187 = vld [vmem:[#allocation4 + $0x690] sm:$0xff]
    %v1188 = vld [vmem:[#allocation4 + $0x698] sm:$0xff]
    %v1189 = vld [vmem:[#allocation4 + $0x6a0] sm:$0xff]
    %v1190 = vld [vmem:[#allocation4 + $0x6a8] sm:$0xff]
    %v1191 = vld [vmem:[#allocation4 + $0x6b0] sm:$0xff]
    %v1192 = vld [vmem:[#allocation4 + $0x6b8] sm:$0xff]
    %v1193 = vld [vmem:[#allocation4 + $0x6c0] sm:$0xff]
    %v1194 = vld [vmem:[#allocation4 + $0x6c8] sm:$0xff]
    %v1195 = vld [vmem:[#allocation4 + $0x6d0] sm:$0xff]
    %v1196 = vld [vmem:[#allocation4 + $0x6d8] sm:$0xff]
    %v1197 = vld [vmem:[#allocation4 + $0x6e0] sm:$0xff]
    %v1198 = vld [vmem:[#allocation4 + $0x6e8] sm:$0xff]
    %v1199 = vld [vmem:[#allocation4 + $0x6f0] sm:$0xff]
    %v1200 = vld [vmem:[#allocation4 + $0x6f8] sm:$0xff]
    %v1201 = vld [vmem:[#allocation4 + $0x700] sm:$0xff]
    %v1202 = vld [vmem:[#allocation4 + $0x708] sm:$0xff]
    %v1203 = vld [vmem:[#allocation4 + $0x710] sm:$0xff]
    %v1204 = vld [vmem:[#allocation4 + $0x718] sm:$0xff]
    %v1205 = vld [vmem:[#allocation4 + $0x720] sm:$0xff]
    %v1206 = vld [vmem:[#allocation4 + $0x728] sm:$0xff]
    %v1207 = vld [vmem:[#allocation4 + $0x730] sm:$0xff]
    %v1208 = vld [vmem:[#allocation4 + $0x738] sm:$0xff]
    %v1209 = vld [vmem:[#allocation4 + $0x740] sm:$0xff]
    %v1210 = vld [vmem:[#allocation4 + $0x748] sm:$0xff]
    %v1211 = vld [vmem:[#allocation4 + $0x750] sm:$0xff]
    %v1212 = vld [vmem:[#allocation4 + $0x758] sm:$0xff]
    %v1213 = vld [vmem:[#allocation4 + $0x760] sm:$0xff]
    %v1214 = vld [vmem:[#allocation4 + $0x768] sm:$0xff]
    %v1215 = vld [vmem:[#allocation4 + $0x770] sm:$0xff]
    %v1216 = vld [vmem:[#allocation4 + $0x778] sm:$0xff]
    %v1217 = vld [vmem:[#allocation4 + $0x780] sm:$0xff]
    %v1218 = vld [vmem:[#allocation4 + $0x788] sm:$0xff]
    %v1219 = vld [vmem:[#allocation4 + $0x790] sm:$0xff]
    %v1220 = vld [vmem:[#allocation4 + $0x798] sm:$0xff]
    %v1221 = vld [vmem:[#allocation4 + $0x7a0] sm:$0xff]
    %v1222 = vld [vmem:[#allocation4 + $0x7a8] sm:$0xff]
    %v1223 = vld [vmem:[#allocation4 + $0x7b0] sm:$0xff]
    %v1224 = vld [vmem:[#allocation4 + $0x7b8] sm:$0xff]
    %v1225 = vld [vmem:[#allocation4 + $0x7c0] sm:$0xff]
    %v1226 = vld [vmem:[#allocation4 + $0x7c8] sm:$0xff]
    %v1227 = vld [vmem:[#allocation4 + $0x7d0] sm:$0xff]
    %v1228 = vld [vmem:[#allocation4 + $0x7d8] sm:$0xff]
    %v1229 = vld [vmem:[#allocation4 + $0x7e0] sm:$0xff]
    %v1230 = vld [vmem:[#allocation4 + $0x7e8] sm:$0xff]
    %v1231 = vld [vmem:[#allocation4 + $0x7f0] sm:$0xff]
    %v1232 = vld [vmem:[#allocation4 + $0x7f8] sm:$0xff]
    %v1233 = vld [vmem:[#allocation4 + $0x800] sm:$0xff]
    %v1234 = vld [vmem:[#allocation4 + $0x808] sm:$0xff]
    %v1235 = vld [vmem:[#allocation4 + $0x810] sm:$0xff]
    %v1236 = vld [vmem:[#allocation4 + $0x818] sm:$0xff]
    %v1237 = vld [vmem:[#allocation4 + $0x820] sm:$0xff]
    %v1238 = vld [vmem:[#allocation4 + $0x828] sm:$0xff]
    %v1239 = vld [vmem:[#allocation4 + $0x830] sm:$0xff]
    %v1240 = vld [vmem:[#allocation4 + $0x838] sm:$0xff]
    %v1241 = vld [vmem:[#allocation4 + $0x840] sm:$0xff]
    %v1242 = vld [vmem:[#allocation4 + $0x848] sm:$0xff]
    %v1243 = vld [vmem:[#allocation4 + $0x850] sm:$0xff]
    %v1244 = vld [vmem:[#allocation4 + $0x858] sm:$0xff]
    %v1245 = vld [vmem:[#allocation4 + $0x860] sm:$0xff]
    %v1246 = vld [vmem:[#allocation4 + $0x868] sm:$0xff]
    %v1247 = vld [vmem:[#allocation4 + $0x870] sm:$0xff]
    %v1248 = vld [vmem:[#allocation4 + $0x878] sm:$0xff]
    %v1249 = vld [vmem:[#allocation4 + $0x880] sm:$0xff]
    %v1250 = vld [vmem:[#allocation4 + $0x888] sm:$0xff]
    %v1251 = vld [vmem:[#allocation4 + $0x890] sm:$0xff]
    %v1252 = vld [vmem:[#allocation4 + $0x898] sm:$0xff]
    %v1253 = vld [vmem:[#allocation4 + $0x8a0] sm:$0xff]
    %v1254 = vld [vmem:[#allocation4 + $0x8a8] sm:$0xff]
    %v1255 = vld [vmem:[#allocation4 + $0x8b0] sm:$0xff]
    %v1256 = vld [vmem:[#allocation4 + $0x8b8] sm:$0xff]
    %v1257 = vld [vmem:[#allocation4 + $0x8c0] sm:$0xff]
    %v1258 = vld [vmem:[#allocation4 + $0x8c8] sm:$0xff]
    %v1259 = vld [vmem:[#allocation4 + $0x8d0] sm:$0xff]
    %v1260 = vld [vmem:[#allocation4 + $0x8d8] sm:$0xff]
    %v1261 = vld [vmem:[#allocation4 + $0x8e0] sm:$0xff]
    %v1262 = vld [vmem:[#allocation4 + $0x8e8] sm:$0xff]
    %v1263 = vld [vmem:[#allocation4 + $0x8f0] sm:$0xff]
    %v1264 = vld [vmem:[#allocation4 + $0x8f8] sm:$0xff]
    %v1265 = vld [vmem:[#allocation4 + $0x900] sm:$0xff]
    %v1266 = vld [vmem:[#allocation4 + $0x908] sm:$0xff]
    %v1267 = vld [vmem:[#allocation4 + $0x910] sm:$0xff]
    %v1268 = vld [vmem:[#allocation4 + $0x918] sm:$0xff]
    %v1269 = vld [vmem:[#allocation4 + $0x920] sm:$0xff]
    %v1270 = vld [vmem:[#allocation4 + $0x928] sm:$0xff]
    %v1271 = vld [vmem:[#allocation4 + $0x930] sm:$0xff]
    %v1272 = vld [vmem:[#allocation4 + $0x938] sm:$0xff]
    %v1273 = vld [vmem:[#allocation4 + $0x940] sm:$0xff]
    %v1274 = vld [vmem:[#allocation4 + $0x948] sm:$0xff]
    %v1275 = vld [vmem:[#allocation4 + $0x950] sm:$0xff]
    %v1276 = vld [vmem:[#allocation4 + $0x958] sm:$0xff]
    %v1277 = vld [vmem:[#allocation4 + $0x960] sm:$0xff]
    %v1278 = vld [vmem:[#allocation4 + $0x968] sm:$0xff]
    %v1279 = vld [vmem:[#allocation4 + $0x970] sm:$0xff]
    %v1280 = vld [vmem:[#allocation4 + $0x978] sm:$0xff]
    %v1281 = vld [vmem:[#allocation4 + $0x980] sm:$0xff]
    %v1282 = vld [vmem:[#allocation4 + $0x988] sm:$0xff]
    %v1283 = vld [vmem:[#allocation4 + $0x990] sm:$0xff]
    %v1284 = vld [vmem:[#allocation4 + $0x998] sm:$0xff]
    %v1285 = vld [vmem:[#allocation4 + $0x9a0] sm:$0xff]
    %v1286 = vld [vmem:[#allocation4 + $0x9a8] sm:$0xff]
    %v1287 = vld [vmem:[#allocation4 + $0x9b0] sm:$0xff]
    %v1288 = vld [vmem:[#allocation4 + $0x9b8] sm:$0xff]
    %v1289 = vld [vmem:[#allocation4 + $0x9c0] sm:$0xff]
    %v1290 = vld [vmem:[#allocation4 + $0x9c8] sm:$0xff]
    %v1291 = vld [vmem:[#allocation4 + $0x9d0] sm:$0xff]
    %v1292 = vld [vmem:[#allocation4 + $0x9d8] sm:$0xff]
    %v1293 = vld [vmem:[#allocation4 + $0x9e0] sm:$0xff]
    %v1294 = vld [vmem:[#allocation4 + $0x9e8] sm:$0xff]
    %v1295 = vld [vmem:[#allocation4 + $0x9f0] sm:$0xff]
    %v1296 = vld [vmem:[#allocation4 + $0x9f8] sm:$0xff]
    %v1297 = vld [vmem:[#allocation4 + $0xa00] sm:$0xff]
    %v1298 = vld [vmem:[#allocation4 + $0xa08] sm:$0xff]
    %v1299 = vld [vmem:[#allocation4 + $0xa10] sm:$0xff]
    %v1300 = vld [vmem:[#allocation4 + $0xa18] sm:$0xff]
    %v1301 = vld [vmem:[#allocation4 + $0xa20] sm:$0xff]
    %v1302 = vld [vmem:[#allocation4 + $0xa28] sm:$0xff]
    %v1303 = vld [vmem:[#allocation4 + $0xa30] sm:$0xff]
    %v1304 = vld [vmem:[#allocation4 + $0xa38] sm:$0xff]
    %v1305 = vld [vmem:[#allocation4 + $0xa40] sm:$0xff]
    %v1306 = vld [vmem:[#allocation4 + $0xa48] sm:$0xff]
    %v1307 = vld [vmem:[#allocation4 + $0xa50] sm:$0xff]
    %v1308 = vld [vmem:[#allocation4 + $0xa58] sm:$0xff]
    %v1309 = vld [vmem:[#allocation4 + $0xa60] sm:$0xff]
    %v1310 = vld [vmem:[#allocation4 + $0xa68] sm:$0xff]
    %v1311 = vld [vmem:[#allocation4 + $0xa70] sm:$0xff]
    %v1312 = vld [vmem:[#allocation4 + $0xa78] sm:$0xff]
    %v1313 = vld [vmem:[#allocation4 + $0xa80] sm:$0xff]
    %v1314 = vld [vmem:[#allocation4 + $0xa88] sm:$0xff]
    %v1315 = vld [vmem:[#allocation4 + $0xa90] sm:$0xff]
    %v1316 = vld [vmem:[#allocation4 + $0xa98] sm:$0xff]
    %v1317 = vld [vmem:[#allocation4 + $0xaa0] sm:$0xff]
    %v1318 = vld [vmem:[#allocation4 + $0xaa8] sm:$0xff]
    %v1319 = vld [vmem:[#allocation4 + $0xab0] sm:$0xff]
    %v1320 = vld [vmem:[#allocation4 + $0xab8] sm:$0xff]
    %v1321 = vld [vmem:[#allocation4 + $0xac0] sm:$0xff]
    %v1322 = vld [vmem:[#allocation4 + $0xac8] sm:$0xff]
    %v1323 = vld [vmem:[#allocation4 + $0xad0] sm:$0xff]
    %v1324 = vld [vmem:[#allocation4 + $0xad8] sm:$0xff]
    %v1325 = vld [vmem:[#allocation4 + $0xae0] sm:$0xff]
    %v1326 = vld [vmem:[#allocation4 + $0xae8] sm:$0xff]
    %v1327 = vld [vmem:[#allocation4 + $0xaf0] sm:$0xff]
    %v1328 = vld [vmem:[#allocation4 + $0xaf8] sm:$0xff]
    %v1329 = vld [vmem:[#allocation4 + $0xb00] sm:$0xff]
    %v1330 = vld [vmem:[#allocation4 + $0xb08] sm:$0xff]
    %v1331 = vld [vmem:[#allocation4 + $0xb10] sm:$0xff]
    %v1332 = vld [vmem:[#allocation4 + $0xb18] sm:$0xff]
    %v1333 = vld [vmem:[#allocation4 + $0xb20] sm:$0xff]
    %v1334 = vld [vmem:[#allocation4 + $0xb28] sm:$0xff]
    %v1335 = vld [vmem:[#allocation4 + $0xb30] sm:$0xff]
    %v1336 = vld [vmem:[#allocation4 + $0xb38] sm:$0xff]
    %v1337 = vld [vmem:[#allocation4 + $0xb40] sm:$0xff]
    %v1338 = vld [vmem:[#allocation4 + $0xb48] sm:$0xff]
    %v1339 = vld [vmem:[#allocation4 + $0xb50] sm:$0xff]
    %v1340 = vld [vmem:[#allocation4 + $0xb58] sm:$0xff]
    %v1341 = vld [vmem:[#allocation4 + $0xb60] sm:$0xff]
    %v1342 = vld [vmem:[#allocation4 + $0xb68] sm:$0xff]
    %v1343 = vld [vmem:[#allocation4 + $0xb70] sm:$0xff]
    %v1344 = vld [vmem:[#allocation4 + $0xb78] sm:$0xff]
    %v1345 = vld [vmem:[#allocation4 + $0xb80] sm:$0xff]
    %v1346 = vld [vmem:[#allocation4 + $0xb88] sm:$0xff]
    %v1347 = vld [vmem:[#allocation4 + $0xb90] sm:$0xff]
    %v1348 = vld [vmem:[#allocation4 + $0xb98] sm:$0xff]
    %v1349 = vld [vmem:[#allocation4 + $0xba0] sm:$0xff]
    %v1350 = vld [vmem:[#allocation4 + $0xba8] sm:$0xff]
    %v1351 = vld [vmem:[#allocation4 + $0xbb0] sm:$0xff]
    %v1352 = vld [vmem:[#allocation4 + $0xbb8] sm:$0xff]
    %v1353 = vld [vmem:[#allocation4 + $0xbc0] sm:$0xff]
    %v1354 = vld [vmem:[#allocation4 + $0xbc8] sm:$0xff]
    %v1355 = vld [vmem:[#allocation4 + $0xbd0] sm:$0xff]
    %v1356 = vld [vmem:[#allocation4 + $0xbd8] sm:$0xff]
    %v1357 = vld [vmem:[#allocation4 + $0xbe0] sm:$0xff]
    %v1358 = vld [vmem:[#allocation4 + $0xbe8] sm:$0xff]
    %v1359 = vld [vmem:[#allocation4 + $0xbf0] sm:$0xff]
    %v1360 = vld [vmem:[#allocation4 + $0xbf8] sm:$0xff]
    %v1361 = vld [vmem:[#allocation4 + $0xc00] sm:$0xff]
    %v1362 = vld [vmem:[#allocation4 + $0xc08] sm:$0xff]
    %v1363 = vld [vmem:[#allocation4 + $0xc10] sm:$0xff]
    %v1364 = vld [vmem:[#allocation4 + $0xc18] sm:$0xff]
    %v1365 = vld [vmem:[#allocation4 + $0xc20] sm:$0xff]
    %v1366 = vld [vmem:[#allocation4 + $0xc28] sm:$0xff]
    %v1367 = vld [vmem:[#allocation4 + $0xc30] sm:$0xff]
    %v1368 = vld [vmem:[#allocation4 + $0xc38] sm:$0xff]
    %v1369 = vld [vmem:[#allocation4 + $0xc40] sm:$0xff]
    %v1370 = vld [vmem:[#allocation4 + $0xc48] sm:$0xff]
    %v1371 = vld [vmem:[#allocation4 + $0xc50] sm:$0xff]
    %v1372 = vld [vmem:[#allocation4 + $0xc58] sm:$0xff]
    %v1373 = vld [vmem:[#allocation4 + $0xc60] sm:$0xff]
    %v1374 = vld [vmem:[#allocation4 + $0xc68] sm:$0xff]
    %v1375 = vld [vmem:[#allocation4 + $0xc70] sm:$0xff]
    %v1376 = vld [vmem:[#allocation4 + $0xc78] sm:$0xff]
    %v1377 = vld [vmem:[#allocation4 + $0xc80] sm:$0xff]
    %v1378 = vld [vmem:[#allocation4 + $0xc88] sm:$0xff]
    %v1379 = vld [vmem:[#allocation4 + $0xc90] sm:$0xff]
    %v1380 = vld [vmem:[#allocation4 + $0xc98] sm:$0xff]
    %v1381 = vld [vmem:[#allocation4 + $0xca0] sm:$0xff]
    %v1382 = vld [vmem:[#allocation4 + $0xca8] sm:$0xff]
    %v1383 = vld [vmem:[#allocation4 + $0xcb0] sm:$0xff]
    %v1384 = vld [vmem:[#allocation4 + $0xcb8] sm:$0xff]
    %v1385 = vld [vmem:[#allocation4 + $0xcc0] sm:$0xff]
    %v1386 = vld [vmem:[#allocation4 + $0xcc8] sm:$0xff]
    %v1387 = vld [vmem:[#allocation4 + $0xcd0] sm:$0xff]
    %v1388 = vld [vmem:[#allocation4 + $0xcd8] sm:$0xff]
    %v1389 = vld [vmem:[#allocation4 + $0xce0] sm:$0xff]
    %v1390 = vld [vmem:[#allocation4 + $0xce8] sm:$0xff]
    %v1391 = vld [vmem:[#allocation4 + $0xcf0] sm:$0xff]
    %v1392 = vld [vmem:[#allocation4 + $0xcf8] sm:$0xff]
    %v1393 = vld [vmem:[#allocation4 + $0xd00] sm:$0xff]
    %v1394 = vld [vmem:[#allocation4 + $0xd08] sm:$0xff]
    %v1395 = vld [vmem:[#allocation4 + $0xd10] sm:$0xff]
    %v1396 = vld [vmem:[#allocation4 + $0xd18] sm:$0xff]
    %v1397 = vld [vmem:[#allocation4 + $0xd20] sm:$0xff]
    %v1398 = vld [vmem:[#allocation4 + $0xd28] sm:$0xff]
    %v1399 = vld [vmem:[#allocation4 + $0xd30] sm:$0xff]
    %v1400 = vld [vmem:[#allocation4 + $0xd38] sm:$0xff]
    %v1401 = vld [vmem:[#allocation4 + $0xd40] sm:$0xff]
    %v1402 = vld [vmem:[#allocation4 + $0xd48] sm:$0xff]
    %v1403 = vld [vmem:[#allocation4 + $0xd50] sm:$0xff]
    %v1404 = vld [vmem:[#allocation4 + $0xd58] sm:$0xff]
    %v1405 = vld [vmem:[#allocation4 + $0xd60] sm:$0xff]
    %v1406 = vld [vmem:[#allocation4 + $0xd68] sm:$0xff]
    %v1407 = vld [vmem:[#allocation4 + $0xd70] sm:$0xff]
    %v1408 = vld [vmem:[#allocation4 + $0xd78] sm:$0xff]
    %v1409 = vld [vmem:[#allocation4 + $0xd80] sm:$0xff]
    %v1410 = vld [vmem:[#allocation4 + $0xd88] sm:$0xff]
    %v1411 = vld [vmem:[#allocation4 + $0xd90] sm:$0xff]
    %v1412 = vld [vmem:[#allocation4 + $0xd98] sm:$0xff]
    %v1413 = vld [vmem:[#allocation4 + $0xda0] sm:$0xff]
    %v1414 = vld [vmem:[#allocation4 + $0xda8] sm:$0xff]
    %v1415 = vld [vmem:[#allocation4 + $0xdb0] sm:$0xff]
    %v1416 = vld [vmem:[#allocation4 + $0xdb8] sm:$0xff]
    %v1417 = vld [vmem:[#allocation4 + $0xdc0] sm:$0xff]
    %v1418 = vld [vmem:[#allocation4 + $0xdc8] sm:$0xff]
    %v1419 = vld [vmem:[#allocation4 + $0xdd0] sm:$0xff]
    %v1420 = vld [vmem:[#allocation4 + $0xdd8] sm:$0xff]
    %v1421 = vld [vmem:[#allocation4 + $0xde0] sm:$0xff]
    %v1422 = vld [vmem:[#allocation4 + $0xde8] sm:$0xff]
    %v1423 = vld [vmem:[#allocation4 + $0xdf0] sm:$0xff]
    %v1424 = vld [vmem:[#allocation4 + $0xdf8] sm:$0xff]
    %v1425 = vld [vmem:[#allocation4 + $0xe00] sm:$0xff]
    %v1426 = vld [vmem:[#allocation4 + $0xe08] sm:$0xff]
    %v1427 = vld [vmem:[#allocation4 + $0xe10] sm:$0xff]
    %v1428 = vld [vmem:[#allocation4 + $0xe18] sm:$0xff]
    %v1429 = vld [vmem:[#allocation4 + $0xe20] sm:$0xff]
    %v1430 = vld [vmem:[#allocation4 + $0xe28] sm:$0xff]
    %v1431 = vld [vmem:[#allocation4 + $0xe30] sm:$0xff]
    %v1432 = vld [vmem:[#allocation4 + $0xe38] sm:$0xff]
    %v1433 = vld [vmem:[#allocation4 + $0xe40] sm:$0xff]
    %v1434 = vld [vmem:[#allocation4 + $0xe48] sm:$0xff]
    %v1435 = vld [vmem:[#allocation4 + $0xe50] sm:$0xff]
    %v1436 = vld [vmem:[#allocation4 + $0xe58] sm:$0xff]
    %v1437 = vld [vmem:[#allocation4 + $0xe60] sm:$0xff]
    %v1438 = vld [vmem:[#allocation4 + $0xe68] sm:$0xff]
    %v1439 = vld [vmem:[#allocation4 + $0xe70] sm:$0xff]
    %v1440 = vld [vmem:[#allocation4 + $0xe78] sm:$0xff]
    %v1441 = vld [vmem:[#allocation4 + $0xe80] sm:$0xff]
    %v1442 = vld [vmem:[#allocation4 + $0xe88] sm:$0xff]
    %v1443 = vld [vmem:[#allocation4 + $0xe90] sm:$0xff]
    %v1444 = vld [vmem:[#allocation4 + $0xe98] sm:$0xff]
    %v1445 = vld [vmem:[#allocation4 + $0xea0] sm:$0xff]
    %v1446 = vld [vmem:[#allocation4 + $0xea8] sm:$0xff]
    %v1447 = vld [vmem:[#allocation4 + $0xeb0] sm:$0xff]
    %v1448 = vld [vmem:[#allocation4 + $0xeb8] sm:$0xff]
    %v1449 = vld [vmem:[#allocation4 + $0xec0] sm:$0xff]
    %v1450 = vld [vmem:[#allocation4 + $0xec8] sm:$0xff]
    %v1451 = vld [vmem:[#allocation4 + $0xed0] sm:$0xff]
    %v1452 = vld [vmem:[#allocation4 + $0xed8] sm:$0xff]
    %v1453 = vld [vmem:[#allocation4 + $0xee0] sm:$0xff]
    %v1454 = vld [vmem:[#allocation4 + $0xee8] sm:$0xff]
    %v1455 = vld [vmem:[#allocation4 + $0xef0] sm:$0xff]
    %v1456 = vld [vmem:[#allocation4 + $0xef8] sm:$0xff]
    %v1457 = vld [vmem:[#allocation6] sm:$0xff]
    %v1459 = vlaneseq
    %v1460 = vshrl.u32 %v1459, 7
    %v1461 = vsub.s32 0, %v1460
    %v1462 = vrot.slane %v1457, %v1461
    %v1463 = vlaneseq
    %v1464 = vshrl.u32 %v1463, 7
    %v1465 = vsub.s32 1, %v1464
    %v1466 = vrot.slane %v1457, %v1465
    %v1467 = vlaneseq
    %v1468 = vshrl.u32 %v1467, 7
    %v1469 = vsub.s32 2, %v1468
    %v1470 = vrot.slane %v1457, %v1469
    %v1471 = vlaneseq
    %v1472 = vshrl.u32 %v1471, 7
    %v1473 = vsub.s32 3, %v1472
    %v1474 = vrot.slane %v1457, %v1473
    %v1475 = vlaneseq
    %v1476 = vshrl.u32 %v1475, 7
    %v1477 = vsub.s32 4, %v1476
    %v1478 = vrot.slane %v1457, %v1477
    %v1479 = vlaneseq
    %v1480 = vshrl.u32 %v1479, 7
    %v1481 = vsub.s32 5, %v1480
    %v1482 = vrot.slane %v1457, %v1481
    %v1483 = vlaneseq
    %v1484 = vshrl.u32 %v1483, 7
    %v1485 = vsub.s32 6, %v1484
    %v1486 = vrot.slane %v1457, %v1485
    %v1487 = vlaneseq
    %v1488 = vshrl.u32 %v1487, 7
    %v1489 = vsub.s32 7, %v1488
    %v1490 = vrot.slane %v1457, %v1489
    %v1979 = vunpack.c.l.b16 %v977
    %v1980 = vunpack.c.h.b16 %v977
    %v1981 = vunpack.c.l.b16 %v978
    %v1982 = vunpack.c.h.b16 %v978
    %v1983 = vunpack.c.l.b16 %v979
    %v1984 = vunpack.c.h.b16 %v979
    %v1985 = vunpack.c.l.b16 %v980
    %v1986 = vunpack.c.h.b16 %v980
    %v1987 = vunpack.c.l.b16 %v981
    %v1988 = vunpack.c.h.b16 %v981
    %v1989 = vunpack.c.l.b16 %v982
    %v1990 = vunpack.c.h.b16 %v982
    %v1991 = vunpack.c.l.b16 %v983
    %v1992 = vunpack.c.h.b16 %v983
    %v1993 = vunpack.c.l.b16 %v984
    %v1994 = vunpack.c.h.b16 %v984
    %v1995 = vunpack.c.l.b16 %v985
    %v1996 = vunpack.c.h.b16 %v985
    %v1997 = vunpack.c.l.b16 %v986
    %v1998 = vunpack.c.h.b16 %v986
    %v1999 = vunpack.c.l.b16 %v987
    %v2000 = vunpack.c.h.b16 %v987
    %v2001 = vunpack.c.l.b16 %v988
    %v2002 = vunpack.c.h.b16 %v988
    %v2003 = vunpack.c.l.b16 %v989
    %v2004 = vunpack.c.h.b16 %v989
    %v2005 = vunpack.c.l.b16 %v990
    %v2006 = vunpack.c.h.b16 %v990
    %v2007 = vunpack.c.l.b16 %v991
    %v2008 = vunpack.c.h.b16 %v991
    %v2009 = vunpack.c.l.b16 %v992
    %v2010 = vunpack.c.h.b16 %v992
    %v2011 = vunpack.c.l.b16 %v993
    %v2012 = vunpack.c.h.b16 %v993
    %v2013 = vunpack.c.l.b16 %v994
    %v2014 = vunpack.c.h.b16 %v994
    %v2015 = vunpack.c.l.b16 %v995
    %v2016 = vunpack.c.h.b16 %v995
    %v2017 = vunpack.c.l.b16 %v996
    %v2018 = vunpack.c.h.b16 %v996
    %v2019 = vunpack.c.l.b16 %v997
    %v2020 = vunpack.c.h.b16 %v997
    %v2021 = vunpack.c.l.b16 %v998
    %v2022 = vunpack.c.h.b16 %v998
    %v2023 = vunpack.c.l.b16 %v999
    %v2024 = vunpack.c.h.b16 %v999
    %v2025 = vunpack.c.l.b16 %v1000
    %v2026 = vunpack.c.h.b16 %v1000
    %v2027 = vunpack.c.l.b16 %v1001
    %v2028 = vunpack.c.h.b16 %v1001
    %v2029 = vunpack.c.l.b16 %v1002
    %v2030 = vunpack.c.h.b16 %v1002
    %v2031 = vunpack.c.l.b16 %v1003
    %v2032 = vunpack.c.h.b16 %v1003
    %v2033 = vunpack.c.l.b16 %v1004
    %v2034 = vunpack.c.h.b16 %v1004
    %v2035 = vunpack.c.l.b16 %v1005
    %v2036 = vunpack.c.h.b16 %v1005
    %v2037 = vunpack.c.l.b16 %v1006
    %v2038 = vunpack.c.h.b16 %v1006
    %v2039 = vunpack.c.l.b16 %v1007
    %v2040 = vunpack.c.h.b16 %v1007
    %v2041 = vunpack.c.l.b16 %v1008
    %v2042 = vunpack.c.h.b16 %v1008
    %v2043 = vunpack.c.l.b16 %v1009
    %v2044 = vunpack.c.h.b16 %v1009
    %v2045 = vunpack.c.l.b16 %v1010
    %v2046 = vunpack.c.h.b16 %v1010
    %v2047 = vunpack.c.l.b16 %v1011
    %v2048 = vunpack.c.h.b16 %v1011
    %v2049 = vunpack.c.l.b16 %v1012
    %v2050 = vunpack.c.h.b16 %v1012
    %v2051 = vunpack.c.l.b16 %v1013
    %v2052 = vunpack.c.h.b16 %v1013
    %v2053 = vunpack.c.l.b16 %v1014
    %v2054 = vunpack.c.h.b16 %v1014
    %v2055 = vunpack.c.l.b16 %v1015
    %v2056 = vunpack.c.h.b16 %v1015
    %v2057 = vunpack.c.l.b16 %v1016
    %v2058 = vunpack.c.h.b16 %v1016
    %v2059 = vunpack.c.l.b16 %v1017
    %v2060 = vunpack.c.h.b16 %v1017
    %v2061 = vunpack.c.l.b16 %v1018
    %v2062 = vunpack.c.h.b16 %v1018
    %v2063 = vunpack.c.l.b16 %v1019
    %v2064 = vunpack.c.h.b16 %v1019
    %v2065 = vunpack.c.l.b16 %v1020
    %v2066 = vunpack.c.h.b16 %v1020
    %v2067 = vunpack.c.l.b16 %v1021
    %v2068 = vunpack.c.h.b16 %v1021
    %v2069 = vunpack.c.l.b16 %v1022
    %v2070 = vunpack.c.h.b16 %v1022
    %v2071 = vunpack.c.l.b16 %v1023
    %v2072 = vunpack.c.h.b16 %v1023
    %v2073 = vunpack.c.l.b16 %v1024
    %v2074 = vunpack.c.h.b16 %v1024
    %v2075 = vunpack.c.l.b16 %v1025
    %v2076 = vunpack.c.h.b16 %v1025
    %v2077 = vunpack.c.l.b16 %v1026
    %v2078 = vunpack.c.h.b16 %v1026
    %v2079 = vunpack.c.l.b16 %v1027
    %v2080 = vunpack.c.h.b16 %v1027
    %v2081 = vunpack.c.l.b16 %v1028
    %v2082 = vunpack.c.h.b16 %v1028
    %v2083 = vunpack.c.l.b16 %v1029
    %v2084 = vunpack.c.h.b16 %v1029
    %v2085 = vunpack.c.l.b16 %v1030
    %v2086 = vunpack.c.h.b16 %v1030
    %v2087 = vunpack.c.l.b16 %v1031
    %v2088 = vunpack.c.h.b16 %v1031
    %v2089 = vunpack.c.l.b16 %v1032
    %v2090 = vunpack.c.h.b16 %v1032
    %v2091 = vunpack.c.l.b16 %v1033
    %v2092 = vunpack.c.h.b16 %v1033
    %v2093 = vunpack.c.l.b16 %v1034
    %v2094 = vunpack.c.h.b16 %v1034
    %v2095 = vunpack.c.l.b16 %v1035
    %v2096 = vunpack.c.h.b16 %v1035
    %v2097 = vunpack.c.l.b16 %v1036
    %v2098 = vunpack.c.h.b16 %v1036
    %v2099 = vunpack.c.l.b16 %v1037
    %v2100 = vunpack.c.h.b16 %v1037
    %v2101 = vunpack.c.l.b16 %v1038
    %v2102 = vunpack.c.h.b16 %v1038
    %v2103 = vunpack.c.l.b16 %v1039
    %v2104 = vunpack.c.h.b16 %v1039
    %v2105 = vunpack.c.l.b16 %v1040
    %v2106 = vunpack.c.h.b16 %v1040
    %v2107 = vunpack.c.l.b16 %v1041
    %v2108 = vunpack.c.h.b16 %v1041
    %v2109 = vunpack.c.l.b16 %v1042
    %v2110 = vunpack.c.h.b16 %v1042
    %v2111 = vunpack.c.l.b16 %v1043
    %v2112 = vunpack.c.h.b16 %v1043
    %v2113 = vunpack.c.l.b16 %v1044
    %v2114 = vunpack.c.h.b16 %v1044
    %v2115 = vunpack.c.l.b16 %v1045
    %v2116 = vunpack.c.h.b16 %v1045
    %v2117 = vunpack.c.l.b16 %v1046
    %v2118 = vunpack.c.h.b16 %v1046
    %v2119 = vunpack.c.l.b16 %v1047
    %v2120 = vunpack.c.h.b16 %v1047
    %v2121 = vunpack.c.l.b16 %v1048
    %v2122 = vunpack.c.h.b16 %v1048
    %v2123 = vunpack.c.l.b16 %v1049
    %v2124 = vunpack.c.h.b16 %v1049
    %v2125 = vunpack.c.l.b16 %v1050
    %v2126 = vunpack.c.h.b16 %v1050
    %v2127 = vunpack.c.l.b16 %v1051
    %v2128 = vunpack.c.h.b16 %v1051
    %v2129 = vunpack.c.l.b16 %v1052
    %v2130 = vunpack.c.h.b16 %v1052
    %v2131 = vunpack.c.l.b16 %v1053
    %v2132 = vunpack.c.h.b16 %v1053
    %v2133 = vunpack.c.l.b16 %v1054
    %v2134 = vunpack.c.h.b16 %v1054
    %v2135 = vunpack.c.l.b16 %v1055
    %v2136 = vunpack.c.h.b16 %v1055
    %v2137 = vunpack.c.l.b16 %v1056
    %v2138 = vunpack.c.h.b16 %v1056
    %v2139 = vunpack.c.l.b16 %v1057
    %v2140 = vunpack.c.h.b16 %v1057
    %v2141 = vunpack.c.l.b16 %v1058
    %v2142 = vunpack.c.h.b16 %v1058
    %v2143 = vunpack.c.l.b16 %v1059
    %v2144 = vunpack.c.h.b16 %v1059
    %v2145 = vunpack.c.l.b16 %v1060
    %v2146 = vunpack.c.h.b16 %v1060
    %v2147 = vunpack.c.l.b16 %v1061
    %v2148 = vunpack.c.h.b16 %v1061
    %v2149 = vunpack.c.l.b16 %v1062
    %v2150 = vunpack.c.h.b16 %v1062
    %v2151 = vunpack.c.l.b16 %v1063
    %v2152 = vunpack.c.h.b16 %v1063
    %v2153 = vunpack.c.l.b16 %v1064
    %v2154 = vunpack.c.h.b16 %v1064
    %v2155 = vunpack.c.l.b16 %v1065
    %v2156 = vunpack.c.h.b16 %v1065
    %v2157 = vunpack.c.l.b16 %v1066
    %v2158 = vunpack.c.h.b16 %v1066
    %v2159 = vunpack.c.l.b16 %v1067
    %v2160 = vunpack.c.h.b16 %v1067
    %v2161 = vunpack.c.l.b16 %v1068
    %v2162 = vunpack.c.h.b16 %v1068
    %v2163 = vunpack.c.l.b16 %v1069
    %v2164 = vunpack.c.h.b16 %v1069
    %v2165 = vunpack.c.l.b16 %v1070
    %v2166 = vunpack.c.h.b16 %v1070
    %v2167 = vunpack.c.l.b16 %v1071
    %v2168 = vunpack.c.h.b16 %v1071
    %v2169 = vunpack.c.l.b16 %v1072
    %v2170 = vunpack.c.h.b16 %v1072
    %v2171 = vunpack.c.l.b16 %v1073
    %v2172 = vunpack.c.h.b16 %v1073
    %v2173 = vunpack.c.l.b16 %v1074
    %v2174 = vunpack.c.h.b16 %v1074
    %v2175 = vunpack.c.l.b16 %v1075
    %v2176 = vunpack.c.h.b16 %v1075
    %v2177 = vunpack.c.l.b16 %v1076
    %v2178 = vunpack.c.h.b16 %v1076
    %v2179 = vunpack.c.l.b16 %v1077
    %v2180 = vunpack.c.h.b16 %v1077
    %v2181 = vunpack.c.l.b16 %v1078
    %v2182 = vunpack.c.h.b16 %v1078
    %v2183 = vunpack.c.l.b16 %v1079
    %v2184 = vunpack.c.h.b16 %v1079
    %v2185 = vunpack.c.l.b16 %v1080
    %v2186 = vunpack.c.h.b16 %v1080
    %v2187 = vunpack.c.l.b16 %v1081
    %v2188 = vunpack.c.h.b16 %v1081
    %v2189 = vunpack.c.l.b16 %v1082
    %v2190 = vunpack.c.h.b16 %v1082
    %v2191 = vunpack.c.l.b16 %v1083
    %v2192 = vunpack.c.h.b16 %v1083
    %v2193 = vunpack.c.l.b16 %v1084
    %v2194 = vunpack.c.h.b16 %v1084
    %v2195 = vunpack.c.l.b16 %v1085
    %v2196 = vunpack.c.h.b16 %v1085
    %v2197 = vunpack.c.l.b16 %v1086
    %v2198 = vunpack.c.h.b16 %v1086
    %v2199 = vunpack.c.l.b16 %v1087
    %v2200 = vunpack.c.h.b16 %v1087
    %v2201 = vunpack.c.l.b16 %v1088
    %v2202 = vunpack.c.h.b16 %v1088
    %v2203 = vunpack.c.l.b16 %v1089
    %v2204 = vunpack.c.h.b16 %v1089
    %v2205 = vunpack.c.l.b16 %v1090
    %v2206 = vunpack.c.h.b16 %v1090
    %v2207 = vunpack.c.l.b16 %v1091
    %v2208 = vunpack.c.h.b16 %v1091
    %v2209 = vunpack.c.l.b16 %v1092
    %v2210 = vunpack.c.h.b16 %v1092
    %v2211 = vunpack.c.l.b16 %v1093
    %v2212 = vunpack.c.h.b16 %v1093
    %v2213 = vunpack.c.l.b16 %v1094
    %v2214 = vunpack.c.h.b16 %v1094
    %v2215 = vunpack.c.l.b16 %v1095
    %v2216 = vunpack.c.h.b16 %v1095
    %v2217 = vunpack.c.l.b16 %v1096
    %v2218 = vunpack.c.h.b16 %v1096
    %v2219 = vunpack.c.l.b16 %v1097
    %v2220 = vunpack.c.h.b16 %v1097
    %v2221 = vunpack.c.l.b16 %v1098
    %v2222 = vunpack.c.h.b16 %v1098
    %v2223 = vunpack.c.l.b16 %v1099
    %v2224 = vunpack.c.h.b16 %v1099
    %v2225 = vunpack.c.l.b16 %v1100
    %v2226 = vunpack.c.h.b16 %v1100
    %v2227 = vunpack.c.l.b16 %v1101
    %v2228 = vunpack.c.h.b16 %v1101
    %v2229 = vunpack.c.l.b16 %v1102
    %v2230 = vunpack.c.h.b16 %v1102
    %v2231 = vunpack.c.l.b16 %v1103
    %v2232 = vunpack.c.h.b16 %v1103
    %v2233 = vunpack.c.l.b16 %v1104
    %v2234 = vunpack.c.h.b16 %v1104
    %v2235 = vunpack.c.l.b16 %v1105
    %v2236 = vunpack.c.h.b16 %v1105
    %v2237 = vunpack.c.l.b16 %v1106
    %v2238 = vunpack.c.h.b16 %v1106
    %v2239 = vunpack.c.l.b16 %v1107
    %v2240 = vunpack.c.h.b16 %v1107
    %v2241 = vunpack.c.l.b16 %v1108
    %v2242 = vunpack.c.h.b16 %v1108
    %v2243 = vunpack.c.l.b16 %v1109
    %v2244 = vunpack.c.h.b16 %v1109
    %v2245 = vunpack.c.l.b16 %v1110
    %v2246 = vunpack.c.h.b16 %v1110
    %v2247 = vunpack.c.l.b16 %v1111
    %v2248 = vunpack.c.h.b16 %v1111
    %v2249 = vunpack.c.l.b16 %v1112
    %v2250 = vunpack.c.h.b16 %v1112
    %v2251 = vunpack.c.l.b16 %v1113
    %v2252 = vunpack.c.h.b16 %v1113
    %v2253 = vunpack.c.l.b16 %v1114
    %v2254 = vunpack.c.h.b16 %v1114
    %v2255 = vunpack.c.l.b16 %v1115
    %v2256 = vunpack.c.h.b16 %v1115
    %v2257 = vunpack.c.l.b16 %v1116
    %v2258 = vunpack.c.h.b16 %v1116
    %v2259 = vunpack.c.l.b16 %v1117
    %v2260 = vunpack.c.h.b16 %v1117
    %v2261 = vunpack.c.l.b16 %v1118
    %v2262 = vunpack.c.h.b16 %v1118
    %v2263 = vunpack.c.l.b16 %v1119
    %v2264 = vunpack.c.h.b16 %v1119
    %v2265 = vunpack.c.l.b16 %v1120
    %v2266 = vunpack.c.h.b16 %v1120
    %v2267 = vunpack.c.l.b16 %v1121
    %v2268 = vunpack.c.h.b16 %v1121
    %v2269 = vunpack.c.l.b16 %v1122
    %v2270 = vunpack.c.h.b16 %v1122
    %v2271 = vunpack.c.l.b16 %v1123
    %v2272 = vunpack.c.h.b16 %v1123
    %v2273 = vunpack.c.l.b16 %v1124
    %v2274 = vunpack.c.h.b16 %v1124
    %v2275 = vunpack.c.l.b16 %v1125
    %v2276 = vunpack.c.h.b16 %v1125
    %v2277 = vunpack.c.l.b16 %v1126
    %v2278 = vunpack.c.h.b16 %v1126
    %v2279 = vunpack.c.l.b16 %v1127
    %v2280 = vunpack.c.h.b16 %v1127
    %v2281 = vunpack.c.l.b16 %v1128
    %v2282 = vunpack.c.h.b16 %v1128
    %v2283 = vunpack.c.l.b16 %v1129
    %v2284 = vunpack.c.h.b16 %v1129
    %v2285 = vunpack.c.l.b16 %v1130
    %v2286 = vunpack.c.h.b16 %v1130
    %v2287 = vunpack.c.l.b16 %v1131
    %v2288 = vunpack.c.h.b16 %v1131
    %v2289 = vunpack.c.l.b16 %v1132
    %v2290 = vunpack.c.h.b16 %v1132
    %v2291 = vunpack.c.l.b16 %v1133
    %v2292 = vunpack.c.h.b16 %v1133
    %v2293 = vunpack.c.l.b16 %v1134
    %v2294 = vunpack.c.h.b16 %v1134
    %v2295 = vunpack.c.l.b16 %v1135
    %v2296 = vunpack.c.h.b16 %v1135
    %v2297 = vunpack.c.l.b16 %v1136
    %v2298 = vunpack.c.h.b16 %v1136
    %v2299 = vunpack.c.l.b16 %v1137
    %v2300 = vunpack.c.h.b16 %v1137
    %v2301 = vunpack.c.l.b16 %v1138
    %v2302 = vunpack.c.h.b16 %v1138
    %v2303 = vunpack.c.l.b16 %v1139
    %v2304 = vunpack.c.h.b16 %v1139
    %v2305 = vunpack.c.l.b16 %v1140
    %v2306 = vunpack.c.h.b16 %v1140
    %v2307 = vunpack.c.l.b16 %v1141
    %v2308 = vunpack.c.h.b16 %v1141
    %v2309 = vunpack.c.l.b16 %v1142
    %v2310 = vunpack.c.h.b16 %v1142
    %v2311 = vunpack.c.l.b16 %v1143
    %v2312 = vunpack.c.h.b16 %v1143
    %v2313 = vunpack.c.l.b16 %v1144
    %v2314 = vunpack.c.h.b16 %v1144
    %v2315 = vunpack.c.l.b16 %v1145
    %v2316 = vunpack.c.h.b16 %v1145
    %v2317 = vunpack.c.l.b16 %v1146
    %v2318 = vunpack.c.h.b16 %v1146
    %v2319 = vunpack.c.l.b16 %v1147
    %v2320 = vunpack.c.h.b16 %v1147
    %v2321 = vunpack.c.l.b16 %v1148
    %v2322 = vunpack.c.h.b16 %v1148
    %v2323 = vunpack.c.l.b16 %v1149
    %v2324 = vunpack.c.h.b16 %v1149
    %v2325 = vunpack.c.l.b16 %v1150
    %v2326 = vunpack.c.h.b16 %v1150
    %v2327 = vunpack.c.l.b16 %v1151
    %v2328 = vunpack.c.h.b16 %v1151
    %v2329 = vunpack.c.l.b16 %v1152
    %v2330 = vunpack.c.h.b16 %v1152
    %v2331 = vunpack.c.l.b16 %v1153
    %v2332 = vunpack.c.h.b16 %v1153
    %v2333 = vunpack.c.l.b16 %v1154
    %v2334 = vunpack.c.h.b16 %v1154
    %v2335 = vunpack.c.l.b16 %v1155
    %v2336 = vunpack.c.h.b16 %v1155
    %v2337 = vunpack.c.l.b16 %v1156
    %v2338 = vunpack.c.h.b16 %v1156
    %v2339 = vunpack.c.l.b16 %v1157
    %v2340 = vunpack.c.h.b16 %v1157
    %v2341 = vunpack.c.l.b16 %v1158
    %v2342 = vunpack.c.h.b16 %v1158
    %v2343 = vunpack.c.l.b16 %v1159
    %v2344 = vunpack.c.h.b16 %v1159
    %v2345 = vunpack.c.l.b16 %v1160
    %v2346 = vunpack.c.h.b16 %v1160
    %v2347 = vunpack.c.l.b16 %v1161
    %v2348 = vunpack.c.h.b16 %v1161
    %v2349 = vunpack.c.l.b16 %v1162
    %v2350 = vunpack.c.h.b16 %v1162
    %v2351 = vunpack.c.l.b16 %v1163
    %v2352 = vunpack.c.h.b16 %v1163
    %v2353 = vunpack.c.l.b16 %v1164
    %v2354 = vunpack.c.h.b16 %v1164
    %v2355 = vunpack.c.l.b16 %v1165
    %v2356 = vunpack.c.h.b16 %v1165
    %v2357 = vunpack.c.l.b16 %v1166
    %v2358 = vunpack.c.h.b16 %v1166
    %v2359 = vunpack.c.l.b16 %v1167
    %v2360 = vunpack.c.h.b16 %v1167
    %v2361 = vunpack.c.l.b16 %v1168
    %v2362 = vunpack.c.h.b16 %v1168
    %v2363 = vunpack.c.l.b16 %v1169
    %v2364 = vunpack.c.h.b16 %v1169
    %v2365 = vunpack.c.l.b16 %v1170
    %v2366 = vunpack.c.h.b16 %v1170
    %v2367 = vunpack.c.l.b16 %v1171
    %v2368 = vunpack.c.h.b16 %v1171
    %v2369 = vunpack.c.l.b16 %v1172
    %v2370 = vunpack.c.h.b16 %v1172
    %v2371 = vunpack.c.l.b16 %v1173
    %v2372 = vunpack.c.h.b16 %v1173
    %v2373 = vunpack.c.l.b16 %v1174
    %v2374 = vunpack.c.h.b16 %v1174
    %v2375 = vunpack.c.l.b16 %v1175
    %v2376 = vunpack.c.h.b16 %v1175
    %v2377 = vunpack.c.l.b16 %v1176
    %v2378 = vunpack.c.h.b16 %v1176
    %v2379 = vunpack.c.l.b16 %v1177
    %v2380 = vunpack.c.h.b16 %v1177
    %v2381 = vunpack.c.l.b16 %v1178
    %v2382 = vunpack.c.h.b16 %v1178
    %v2383 = vunpack.c.l.b16 %v1179
    %v2384 = vunpack.c.h.b16 %v1179
    %v2385 = vunpack.c.l.b16 %v1180
    %v2386 = vunpack.c.h.b16 %v1180
    %v2387 = vunpack.c.l.b16 %v1181
    %v2388 = vunpack.c.h.b16 %v1181
    %v2389 = vunpack.c.l.b16 %v1182
    %v2390 = vunpack.c.h.b16 %v1182
    %v2391 = vunpack.c.l.b16 %v1183
    %v2392 = vunpack.c.h.b16 %v1183
    %v2393 = vunpack.c.l.b16 %v1184
    %v2394 = vunpack.c.h.b16 %v1184
    %v2395 = vunpack.c.l.b16 %v1185
    %v2396 = vunpack.c.h.b16 %v1185
    %v2397 = vunpack.c.l.b16 %v1186
    %v2398 = vunpack.c.h.b16 %v1186
    %v2399 = vunpack.c.l.b16 %v1187
    %v2400 = vunpack.c.h.b16 %v1187
    %v2401 = vunpack.c.l.b16 %v1188
    %v2402 = vunpack.c.h.b16 %v1188
    %v2403 = vunpack.c.l.b16 %v1189
    %v2404 = vunpack.c.h.b16 %v1189
    %v2405 = vunpack.c.l.b16 %v1190
    %v2406 = vunpack.c.h.b16 %v1190
    %v2407 = vunpack.c.l.b16 %v1191
    %v2408 = vunpack.c.h.b16 %v1191
    %v2409 = vunpack.c.l.b16 %v1192
    %v2410 = vunpack.c.h.b16 %v1192
    %v2411 = vunpack.c.l.b16 %v1193
    %v2412 = vunpack.c.h.b16 %v1193
    %v2413 = vunpack.c.l.b16 %v1194
    %v2414 = vunpack.c.h.b16 %v1194
    %v2415 = vunpack.c.l.b16 %v1195
    %v2416 = vunpack.c.h.b16 %v1195
    %v2417 = vunpack.c.l.b16 %v1196
    %v2418 = vunpack.c.h.b16 %v1196
    %v2419 = vunpack.c.l.b16 %v1197
    %v2420 = vunpack.c.h.b16 %v1197
    %v2421 = vunpack.c.l.b16 %v1198
    %v2422 = vunpack.c.h.b16 %v1198
    %v2423 = vunpack.c.l.b16 %v1199
    %v2424 = vunpack.c.h.b16 %v1199
    %v2425 = vunpack.c.l.b16 %v1200
    %v2426 = vunpack.c.h.b16 %v1200
    %v2427 = vunpack.c.l.b16 %v1201
    %v2428 = vunpack.c.h.b16 %v1201
    %v2429 = vunpack.c.l.b16 %v1202
    %v2430 = vunpack.c.h.b16 %v1202
    %v2431 = vunpack.c.l.b16 %v1203
    %v2432 = vunpack.c.h.b16 %v1203
    %v2433 = vunpack.c.l.b16 %v1204
    %v2434 = vunpack.c.h.b16 %v1204
    %v2435 = vunpack.c.l.b16 %v1205
    %v2436 = vunpack.c.h.b16 %v1205
    %v2437 = vunpack.c.l.b16 %v1206
    %v2438 = vunpack.c.h.b16 %v1206
    %v2439 = vunpack.c.l.b16 %v1207
    %v2440 = vunpack.c.h.b16 %v1207
    %v2441 = vunpack.c.l.b16 %v1208
    %v2442 = vunpack.c.h.b16 %v1208
    %v2443 = vunpack.c.l.b16 %v1209
    %v2444 = vunpack.c.h.b16 %v1209
    %v2445 = vunpack.c.l.b16 %v1210
    %v2446 = vunpack.c.h.b16 %v1210
    %v2447 = vunpack.c.l.b16 %v1211
    %v2448 = vunpack.c.h.b16 %v1211
    %v2449 = vunpack.c.l.b16 %v1212
    %v2450 = vunpack.c.h.b16 %v1212
    %v2451 = vunpack.c.l.b16 %v1213
    %v2452 = vunpack.c.h.b16 %v1213
    %v2453 = vunpack.c.l.b16 %v1214
    %v2454 = vunpack.c.h.b16 %v1214
    %v2455 = vunpack.c.l.b16 %v1215
    %v2456 = vunpack.c.h.b16 %v1215
    %v2457 = vunpack.c.l.b16 %v1216
    %v2458 = vunpack.c.h.b16 %v1216
    %v2459 = vunpack.c.l.b16 %v1217
    %v2460 = vunpack.c.h.b16 %v1217
    %v2461 = vunpack.c.l.b16 %v1218
    %v2462 = vunpack.c.h.b16 %v1218
    %v2463 = vunpack.c.l.b16 %v1219
    %v2464 = vunpack.c.h.b16 %v1219
    %v2465 = vunpack.c.l.b16 %v1220
    %v2466 = vunpack.c.h.b16 %v1220
    %v2467 = vunpack.c.l.b16 %v1221
    %v2468 = vunpack.c.h.b16 %v1221
    %v2469 = vunpack.c.l.b16 %v1222
    %v2470 = vunpack.c.h.b16 %v1222
    %v2471 = vunpack.c.l.b16 %v1223
    %v2472 = vunpack.c.h.b16 %v1223
    %v2473 = vunpack.c.l.b16 %v1224
    %v2474 = vunpack.c.h.b16 %v1224
    %v2475 = vunpack.c.l.b16 %v1225
    %v2476 = vunpack.c.h.b16 %v1225
    %v2477 = vunpack.c.l.b16 %v1226
    %v2478 = vunpack.c.h.b16 %v1226
    %v2479 = vunpack.c.l.b16 %v1227
    %v2480 = vunpack.c.h.b16 %v1227
    %v2481 = vunpack.c.l.b16 %v1228
    %v2482 = vunpack.c.h.b16 %v1228
    %v2483 = vunpack.c.l.b16 %v1229
    %v2484 = vunpack.c.h.b16 %v1229
    %v2485 = vunpack.c.l.b16 %v1230
    %v2486 = vunpack.c.h.b16 %v1230
    %v2487 = vunpack.c.l.b16 %v1231
    %v2488 = vunpack.c.h.b16 %v1231
    %v2489 = vunpack.c.l.b16 %v1232
    %v2490 = vunpack.c.h.b16 %v1232
    %v2491 = vunpack.c.l.b16 %v1233
    %v2492 = vunpack.c.h.b16 %v1233
    %v2493 = vunpack.c.l.b16 %v1234
    %v2494 = vunpack.c.h.b16 %v1234
    %v2495 = vunpack.c.l.b16 %v1235
    %v2496 = vunpack.c.h.b16 %v1235
    %v2497 = vunpack.c.l.b16 %v1236
    %v2498 = vunpack.c.h.b16 %v1236
    %v2499 = vunpack.c.l.b16 %v1237
    %v2500 = vunpack.c.h.b16 %v1237
    %v2501 = vunpack.c.l.b16 %v1238
    %v2502 = vunpack.c.h.b16 %v1238
    %v2503 = vunpack.c.l.b16 %v1239
    %v2504 = vunpack.c.h.b16 %v1239
    %v2505 = vunpack.c.l.b16 %v1240
    %v2506 = vunpack.c.h.b16 %v1240
    %v2507 = vunpack.c.l.b16 %v1241
    %v2508 = vunpack.c.h.b16 %v1241
    %v2509 = vunpack.c.l.b16 %v1242
    %v2510 = vunpack.c.h.b16 %v1242
    %v2511 = vunpack.c.l.b16 %v1243
    %v2512 = vunpack.c.h.b16 %v1243
    %v2513 = vunpack.c.l.b16 %v1244
    %v2514 = vunpack.c.h.b16 %v1244
    %v2515 = vunpack.c.l.b16 %v1245
    %v2516 = vunpack.c.h.b16 %v1245
    %v2517 = vunpack.c.l.b16 %v1246
    %v2518 = vunpack.c.h.b16 %v1246
    %v2519 = vunpack.c.l.b16 %v1247
    %v2520 = vunpack.c.h.b16 %v1247
    %v2521 = vunpack.c.l.b16 %v1248
    %v2522 = vunpack.c.h.b16 %v1248
    %v2523 = vunpack.c.l.b16 %v1249
    %v2524 = vunpack.c.h.b16 %v1249
    %v2525 = vunpack.c.l.b16 %v1250
    %v2526 = vunpack.c.h.b16 %v1250
    %v2527 = vunpack.c.l.b16 %v1251
    %v2528 = vunpack.c.h.b16 %v1251
    %v2529 = vunpack.c.l.b16 %v1252
    %v2530 = vunpack.c.h.b16 %v1252
    %v2531 = vunpack.c.l.b16 %v1253
    %v2532 = vunpack.c.h.b16 %v1253
    %v2533 = vunpack.c.l.b16 %v1254
    %v2534 = vunpack.c.h.b16 %v1254
    %v2535 = vunpack.c.l.b16 %v1255
    %v2536 = vunpack.c.h.b16 %v1255
    %v2537 = vunpack.c.l.b16 %v1256
    %v2538 = vunpack.c.h.b16 %v1256
    %v2539 = vunpack.c.l.b16 %v1257
    %v2540 = vunpack.c.h.b16 %v1257
    %v2541 = vunpack.c.l.b16 %v1258
    %v2542 = vunpack.c.h.b16 %v1258
    %v2543 = vunpack.c.l.b16 %v1259
    %v2544 = vunpack.c.h.b16 %v1259
    %v2545 = vunpack.c.l.b16 %v1260
    %v2546 = vunpack.c.h.b16 %v1260
    %v2547 = vunpack.c.l.b16 %v1261
    %v2548 = vunpack.c.h.b16 %v1261
    %v2549 = vunpack.c.l.b16 %v1262
    %v2550 = vunpack.c.h.b16 %v1262
    %v2551 = vunpack.c.l.b16 %v1263
    %v2552 = vunpack.c.h.b16 %v1263
    %v2553 = vunpack.c.l.b16 %v1264
    %v2554 = vunpack.c.h.b16 %v1264
    %v2555 = vunpack.c.l.b16 %v1265
    %v2556 = vunpack.c.h.b16 %v1265
    %v2557 = vunpack.c.l.b16 %v1266
    %v2558 = vunpack.c.h.b16 %v1266
    %v2559 = vunpack.c.l.b16 %v1267
    %v2560 = vunpack.c.h.b16 %v1267
    %v2561 = vunpack.c.l.b16 %v1268
    %v2562 = vunpack.c.h.b16 %v1268
    %v2563 = vunpack.c.l.b16 %v1269
    %v2564 = vunpack.c.h.b16 %v1269
    %v2565 = vunpack.c.l.b16 %v1270
    %v2566 = vunpack.c.h.b16 %v1270
    %v2567 = vunpack.c.l.b16 %v1271
    %v2568 = vunpack.c.h.b16 %v1271
    %v2569 = vunpack.c.l.b16 %v1272
    %v2570 = vunpack.c.h.b16 %v1272
    %v2571 = vunpack.c.l.b16 %v1273
    %v2572 = vunpack.c.h.b16 %v1273
    %v2573 = vunpack.c.l.b16 %v1274
    %v2574 = vunpack.c.h.b16 %v1274
    %v2575 = vunpack.c.l.b16 %v1275
    %v2576 = vunpack.c.h.b16 %v1275
    %v2577 = vunpack.c.l.b16 %v1276
    %v2578 = vunpack.c.h.b16 %v1276
    %v2579 = vunpack.c.l.b16 %v1277
    %v2580 = vunpack.c.h.b16 %v1277
    %v2581 = vunpack.c.l.b16 %v1278
    %v2582 = vunpack.c.h.b16 %v1278
    %v2583 = vunpack.c.l.b16 %v1279
    %v2584 = vunpack.c.h.b16 %v1279
    %v2585 = vunpack.c.l.b16 %v1280
    %v2586 = vunpack.c.h.b16 %v1280
    %v2587 = vunpack.c.l.b16 %v1281
    %v2588 = vunpack.c.h.b16 %v1281
    %v2589 = vunpack.c.l.b16 %v1282
    %v2590 = vunpack.c.h.b16 %v1282
    %v2591 = vunpack.c.l.b16 %v1283
    %v2592 = vunpack.c.h.b16 %v1283
    %v2593 = vunpack.c.l.b16 %v1284
    %v2594 = vunpack.c.h.b16 %v1284
    %v2595 = vunpack.c.l.b16 %v1285
    %v2596 = vunpack.c.h.b16 %v1285
    %v2597 = vunpack.c.l.b16 %v1286
    %v2598 = vunpack.c.h.b16 %v1286
    %v2599 = vunpack.c.l.b16 %v1287
    %v2600 = vunpack.c.h.b16 %v1287
    %v2601 = vunpack.c.l.b16 %v1288
    %v2602 = vunpack.c.h.b16 %v1288
    %v2603 = vunpack.c.l.b16 %v1289
    %v2604 = vunpack.c.h.b16 %v1289
    %v2605 = vunpack.c.l.b16 %v1290
    %v2606 = vunpack.c.h.b16 %v1290
    %v2607 = vunpack.c.l.b16 %v1291
    %v2608 = vunpack.c.h.b16 %v1291
    %v2609 = vunpack.c.l.b16 %v1292
    %v2610 = vunpack.c.h.b16 %v1292
    %v2611 = vunpack.c.l.b16 %v1293
    %v2612 = vunpack.c.h.b16 %v1293
    %v2613 = vunpack.c.l.b16 %v1294
    %v2614 = vunpack.c.h.b16 %v1294
    %v2615 = vunpack.c.l.b16 %v1295
    %v2616 = vunpack.c.h.b16 %v1295
    %v2617 = vunpack.c.l.b16 %v1296
    %v2618 = vunpack.c.h.b16 %v1296
    %v2619 = vunpack.c.l.b16 %v1297
    %v2620 = vunpack.c.h.b16 %v1297
    %v2621 = vunpack.c.l.b16 %v1298
    %v2622 = vunpack.c.h.b16 %v1298
    %v2623 = vunpack.c.l.b16 %v1299
    %v2624 = vunpack.c.h.b16 %v1299
    %v2625 = vunpack.c.l.b16 %v1300
    %v2626 = vunpack.c.h.b16 %v1300
    %v2627 = vunpack.c.l.b16 %v1301
    %v2628 = vunpack.c.h.b16 %v1301
    %v2629 = vunpack.c.l.b16 %v1302
    %v2630 = vunpack.c.h.b16 %v1302
    %v2631 = vunpack.c.l.b16 %v1303
    %v2632 = vunpack.c.h.b16 %v1303
    %v2633 = vunpack.c.l.b16 %v1304
    %v2634 = vunpack.c.h.b16 %v1304
    %v2635 = vunpack.c.l.b16 %v1305
    %v2636 = vunpack.c.h.b16 %v1305
    %v2637 = vunpack.c.l.b16 %v1306
    %v2638 = vunpack.c.h.b16 %v1306
    %v2639 = vunpack.c.l.b16 %v1307
    %v2640 = vunpack.c.h.b16 %v1307
    %v2641 = vunpack.c.l.b16 %v1308
    %v2642 = vunpack.c.h.b16 %v1308
    %v2643 = vunpack.c.l.b16 %v1309
    %v2644 = vunpack.c.h.b16 %v1309
    %v2645 = vunpack.c.l.b16 %v1310
    %v2646 = vunpack.c.h.b16 %v1310
    %v2647 = vunpack.c.l.b16 %v1311
    %v2648 = vunpack.c.h.b16 %v1311
    %v2649 = vunpack.c.l.b16 %v1312
    %v2650 = vunpack.c.h.b16 %v1312
    %v2651 = vunpack.c.l.b16 %v1313
    %v2652 = vunpack.c.h.b16 %v1313
    %v2653 = vunpack.c.l.b16 %v1314
    %v2654 = vunpack.c.h.b16 %v1314
    %v2655 = vunpack.c.l.b16 %v1315
    %v2656 = vunpack.c.h.b16 %v1315
    %v2657 = vunpack.c.l.b16 %v1316
    %v2658 = vunpack.c.h.b16 %v1316
    %v2659 = vunpack.c.l.b16 %v1317
    %v2660 = vunpack.c.h.b16 %v1317
    %v2661 = vunpack.c.l.b16 %v1318
    %v2662 = vunpack.c.h.b16 %v1318
    %v2663 = vunpack.c.l.b16 %v1319
    %v2664 = vunpack.c.h.b16 %v1319
    %v2665 = vunpack.c.l.b16 %v1320
    %v2666 = vunpack.c.h.b16 %v1320
    %v2667 = vunpack.c.l.b16 %v1321
    %v2668 = vunpack.c.h.b16 %v1321
    %v2669 = vunpack.c.l.b16 %v1322
    %v2670 = vunpack.c.h.b16 %v1322
    %v2671 = vunpack.c.l.b16 %v1323
    %v2672 = vunpack.c.h.b16 %v1323
    %v2673 = vunpack.c.l.b16 %v1324
    %v2674 = vunpack.c.h.b16 %v1324
    %v2675 = vunpack.c.l.b16 %v1325
    %v2676 = vunpack.c.h.b16 %v1325
    %v2677 = vunpack.c.l.b16 %v1326
    %v2678 = vunpack.c.h.b16 %v1326
    %v2679 = vunpack.c.l.b16 %v1327
    %v2680 = vunpack.c.h.b16 %v1327
    %v2681 = vunpack.c.l.b16 %v1328
    %v2682 = vunpack.c.h.b16 %v1328
    %v2683 = vunpack.c.l.b16 %v1329
    %v2684 = vunpack.c.h.b16 %v1329
    %v2685 = vunpack.c.l.b16 %v1330
    %v2686 = vunpack.c.h.b16 %v1330
    %v2687 = vunpack.c.l.b16 %v1331
    %v2688 = vunpack.c.h.b16 %v1331
    %v2689 = vunpack.c.l.b16 %v1332
    %v2690 = vunpack.c.h.b16 %v1332
    %v2691 = vunpack.c.l.b16 %v1333
    %v2692 = vunpack.c.h.b16 %v1333
    %v2693 = vunpack.c.l.b16 %v1334
    %v2694 = vunpack.c.h.b16 %v1334
    %v2695 = vunpack.c.l.b16 %v1335
    %v2696 = vunpack.c.h.b16 %v1335
    %v2697 = vunpack.c.l.b16 %v1336
    %v2698 = vunpack.c.h.b16 %v1336
    %v2699 = vunpack.c.l.b16 %v1337
    %v2700 = vunpack.c.h.b16 %v1337
    %v2701 = vunpack.c.l.b16 %v1338
    %v2702 = vunpack.c.h.b16 %v1338
    %v2703 = vunpack.c.l.b16 %v1339
    %v2704 = vunpack.c.h.b16 %v1339
    %v2705 = vunpack.c.l.b16 %v1340
    %v2706 = vunpack.c.h.b16 %v1340
    %v2707 = vunpack.c.l.b16 %v1341
    %v2708 = vunpack.c.h.b16 %v1341
    %v2709 = vunpack.c.l.b16 %v1342
    %v2710 = vunpack.c.h.b16 %v1342
    %v2711 = vunpack.c.l.b16 %v1343
    %v2712 = vunpack.c.h.b16 %v1343
    %v2713 = vunpack.c.l.b16 %v1344
    %v2714 = vunpack.c.h.b16 %v1344
    %v2715 = vunpack.c.l.b16 %v1345
    %v2716 = vunpack.c.h.b16 %v1345
    %v2717 = vunpack.c.l.b16 %v1346
    %v2718 = vunpack.c.h.b16 %v1346
    %v2719 = vunpack.c.l.b16 %v1347
    %v2720 = vunpack.c.h.b16 %v1347
    %v2721 = vunpack.c.l.b16 %v1348
    %v2722 = vunpack.c.h.b16 %v1348
    %v2723 = vunpack.c.l.b16 %v1349
    %v2724 = vunpack.c.h.b16 %v1349
    %v2725 = vunpack.c.l.b16 %v1350
    %v2726 = vunpack.c.h.b16 %v1350
    %v2727 = vunpack.c.l.b16 %v1351
    %v2728 = vunpack.c.h.b16 %v1351
    %v2729 = vunpack.c.l.b16 %v1352
    %v2730 = vunpack.c.h.b16 %v1352
    %v2731 = vunpack.c.l.b16 %v1353
    %v2732 = vunpack.c.h.b16 %v1353
    %v2733 = vunpack.c.l.b16 %v1354
    %v2734 = vunpack.c.h.b16 %v1354
    %v2735 = vunpack.c.l.b16 %v1355
    %v2736 = vunpack.c.h.b16 %v1355
    %v2737 = vunpack.c.l.b16 %v1356
    %v2738 = vunpack.c.h.b16 %v1356
    %v2739 = vunpack.c.l.b16 %v1357
    %v2740 = vunpack.c.h.b16 %v1357
    %v2741 = vunpack.c.l.b16 %v1358
    %v2742 = vunpack.c.h.b16 %v1358
    %v2743 = vunpack.c.l.b16 %v1359
    %v2744 = vunpack.c.h.b16 %v1359
    %v2745 = vunpack.c.l.b16 %v1360
    %v2746 = vunpack.c.h.b16 %v1360
    %v2747 = vunpack.c.l.b16 %v1361
    %v2748 = vunpack.c.h.b16 %v1361
    %v2749 = vunpack.c.l.b16 %v1362
    %v2750 = vunpack.c.h.b16 %v1362
    %v2751 = vunpack.c.l.b16 %v1363
    %v2752 = vunpack.c.h.b16 %v1363
    %v2753 = vunpack.c.l.b16 %v1364
    %v2754 = vunpack.c.h.b16 %v1364
    %v2755 = vunpack.c.l.b16 %v1365
    %v2756 = vunpack.c.h.b16 %v1365
    %v2757 = vunpack.c.l.b16 %v1366
    %v2758 = vunpack.c.h.b16 %v1366
    %v2759 = vunpack.c.l.b16 %v1367
    %v2760 = vunpack.c.h.b16 %v1367
    %v2761 = vunpack.c.l.b16 %v1368
    %v2762 = vunpack.c.h.b16 %v1368
    %v2763 = vunpack.c.l.b16 %v1369
    %v2764 = vunpack.c.h.b16 %v1369
    %v2765 = vunpack.c.l.b16 %v1370
    %v2766 = vunpack.c.h.b16 %v1370
    %v2767 = vunpack.c.l.b16 %v1371
    %v2768 = vunpack.c.h.b16 %v1371
    %v2769 = vunpack.c.l.b16 %v1372
    %v2770 = vunpack.c.h.b16 %v1372
    %v2771 = vunpack.c.l.b16 %v1373
    %v2772 = vunpack.c.h.b16 %v1373
    %v2773 = vunpack.c.l.b16 %v1374
    %v2774 = vunpack.c.h.b16 %v1374
    %v2775 = vunpack.c.l.b16 %v1375
    %v2776 = vunpack.c.h.b16 %v1375
    %v2777 = vunpack.c.l.b16 %v1376
    %v2778 = vunpack.c.h.b16 %v1376
    %v2779 = vunpack.c.l.b16 %v1377
    %v2780 = vunpack.c.h.b16 %v1377
    %v2781 = vunpack.c.l.b16 %v1378
    %v2782 = vunpack.c.h.b16 %v1378
    %v2783 = vunpack.c.l.b16 %v1379
    %v2784 = vunpack.c.h.b16 %v1379
    %v2785 = vunpack.c.l.b16 %v1380
    %v2786 = vunpack.c.h.b16 %v1380
    %v2787 = vunpack.c.l.b16 %v1381
    %v2788 = vunpack.c.h.b16 %v1381
    %v2789 = vunpack.c.l.b16 %v1382
    %v2790 = vunpack.c.h.b16 %v1382
    %v2791 = vunpack.c.l.b16 %v1383
    %v2792 = vunpack.c.h.b16 %v1383
    %v2793 = vunpack.c.l.b16 %v1384
    %v2794 = vunpack.c.h.b16 %v1384
    %v2795 = vunpack.c.l.b16 %v1385
    %v2796 = vunpack.c.h.b16 %v1385
    %v2797 = vunpack.c.l.b16 %v1386
    %v2798 = vunpack.c.h.b16 %v1386
    %v2799 = vunpack.c.l.b16 %v1387
    %v2800 = vunpack.c.h.b16 %v1387
    %v2801 = vunpack.c.l.b16 %v1388
    %v2802 = vunpack.c.h.b16 %v1388
    %v2803 = vunpack.c.l.b16 %v1389
    %v2804 = vunpack.c.h.b16 %v1389
    %v2805 = vunpack.c.l.b16 %v1390
    %v2806 = vunpack.c.h.b16 %v1390
    %v2807 = vunpack.c.l.b16 %v1391
    %v2808 = vunpack.c.h.b16 %v1391
    %v2809 = vunpack.c.l.b16 %v1392
    %v2810 = vunpack.c.h.b16 %v1392
    %v2811 = vunpack.c.l.b16 %v1393
    %v2812 = vunpack.c.h.b16 %v1393
    %v2813 = vunpack.c.l.b16 %v1394
    %v2814 = vunpack.c.h.b16 %v1394
    %v2815 = vunpack.c.l.b16 %v1395
    %v2816 = vunpack.c.h.b16 %v1395
    %v2817 = vunpack.c.l.b16 %v1396
    %v2818 = vunpack.c.h.b16 %v1396
    %v2819 = vunpack.c.l.b16 %v1397
    %v2820 = vunpack.c.h.b16 %v1397
    %v2821 = vunpack.c.l.b16 %v1398
    %v2822 = vunpack.c.h.b16 %v1398
    %v2823 = vunpack.c.l.b16 %v1399
    %v2824 = vunpack.c.h.b16 %v1399
    %v2825 = vunpack.c.l.b16 %v1400
    %v2826 = vunpack.c.h.b16 %v1400
    %v2827 = vunpack.c.l.b16 %v1401
    %v2828 = vunpack.c.h.b16 %v1401
    %v2829 = vunpack.c.l.b16 %v1402
    %v2830 = vunpack.c.h.b16 %v1402
    %v2831 = vunpack.c.l.b16 %v1403
    %v2832 = vunpack.c.h.b16 %v1403
    %v2833 = vunpack.c.l.b16 %v1404
    %v2834 = vunpack.c.h.b16 %v1404
    %v2835 = vunpack.c.l.b16 %v1405
    %v2836 = vunpack.c.h.b16 %v1405
    %v2837 = vunpack.c.l.b16 %v1406
    %v2838 = vunpack.c.h.b16 %v1406
    %v2839 = vunpack.c.l.b16 %v1407
    %v2840 = vunpack.c.h.b16 %v1407
    %v2841 = vunpack.c.l.b16 %v1408
    %v2842 = vunpack.c.h.b16 %v1408
    %v2843 = vunpack.c.l.b16 %v1409
    %v2844 = vunpack.c.h.b16 %v1409
    %v2845 = vunpack.c.l.b16 %v1410
    %v2846 = vunpack.c.h.b16 %v1410
    %v2847 = vunpack.c.l.b16 %v1411
    %v2848 = vunpack.c.h.b16 %v1411
    %v2849 = vunpack.c.l.b16 %v1412
    %v2850 = vunpack.c.h.b16 %v1412
    %v2851 = vunpack.c.l.b16 %v1413
    %v2852 = vunpack.c.h.b16 %v1413
    %v2853 = vunpack.c.l.b16 %v1414
    %v2854 = vunpack.c.h.b16 %v1414
    %v2855 = vunpack.c.l.b16 %v1415
    %v2856 = vunpack.c.h.b16 %v1415
    %v2857 = vunpack.c.l.b16 %v1416
    %v2858 = vunpack.c.h.b16 %v1416
    %v2859 = vunpack.c.l.b16 %v1417
    %v2860 = vunpack.c.h.b16 %v1417
    %v2861 = vunpack.c.l.b16 %v1418
    %v2862 = vunpack.c.h.b16 %v1418
    %v2863 = vunpack.c.l.b16 %v1419
    %v2864 = vunpack.c.h.b16 %v1419
    %v2865 = vunpack.c.l.b16 %v1420
    %v2866 = vunpack.c.h.b16 %v1420
    %v2867 = vunpack.c.l.b16 %v1421
    %v2868 = vunpack.c.h.b16 %v1421
    %v2869 = vunpack.c.l.b16 %v1422
    %v2870 = vunpack.c.h.b16 %v1422
    %v2871 = vunpack.c.l.b16 %v1423
    %v2872 = vunpack.c.h.b16 %v1423
    %v2873 = vunpack.c.l.b16 %v1424
    %v2874 = vunpack.c.h.b16 %v1424
    %v2875 = vunpack.c.l.b16 %v1425
    %v2876 = vunpack.c.h.b16 %v1425
    %v2877 = vunpack.c.l.b16 %v1426
    %v2878 = vunpack.c.h.b16 %v1426
    %v2879 = vunpack.c.l.b16 %v1427
    %v2880 = vunpack.c.h.b16 %v1427
    %v2881 = vunpack.c.l.b16 %v1428
    %v2882 = vunpack.c.h.b16 %v1428
    %v2883 = vunpack.c.l.b16 %v1429
    %v2884 = vunpack.c.h.b16 %v1429
    %v2885 = vunpack.c.l.b16 %v1430
    %v2886 = vunpack.c.h.b16 %v1430
    %v2887 = vunpack.c.l.b16 %v1431
    %v2888 = vunpack.c.h.b16 %v1431
    %v2889 = vunpack.c.l.b16 %v1432
    %v2890 = vunpack.c.h.b16 %v1432
    %v2891 = vunpack.c.l.b16 %v1433
    %v2892 = vunpack.c.h.b16 %v1433
    %v2893 = vunpack.c.l.b16 %v1434
    %v2894 = vunpack.c.h.b16 %v1434
    %v2895 = vunpack.c.l.b16 %v1435
    %v2896 = vunpack.c.h.b16 %v1435
    %v2897 = vunpack.c.l.b16 %v1436
    %v2898 = vunpack.c.h.b16 %v1436
    %v2899 = vunpack.c.l.b16 %v1437
    %v2900 = vunpack.c.h.b16 %v1437
    %v2901 = vunpack.c.l.b16 %v1438
    %v2902 = vunpack.c.h.b16 %v1438
    %v2903 = vunpack.c.l.b16 %v1439
    %v2904 = vunpack.c.h.b16 %v1439
    %v2905 = vunpack.c.l.b16 %v1440
    %v2906 = vunpack.c.h.b16 %v1440
    %v2907 = vunpack.c.l.b16 %v1441
    %v2908 = vunpack.c.h.b16 %v1441
    %v2909 = vunpack.c.l.b16 %v1442
    %v2910 = vunpack.c.h.b16 %v1442
    %v2911 = vunpack.c.l.b16 %v1443
    %v2912 = vunpack.c.h.b16 %v1443
    %v2913 = vunpack.c.l.b16 %v1444
    %v2914 = vunpack.c.h.b16 %v1444
    %v2915 = vunpack.c.l.b16 %v1445
    %v2916 = vunpack.c.h.b16 %v1445
    %v2917 = vunpack.c.l.b16 %v1446
    %v2918 = vunpack.c.h.b16 %v1446
    %v2919 = vunpack.c.l.b16 %v1447
    %v2920 = vunpack.c.h.b16 %v1447
    %v2921 = vunpack.c.l.b16 %v1448
    %v2922 = vunpack.c.h.b16 %v1448
    %v2923 = vunpack.c.l.b16 %v1449
    %v2924 = vunpack.c.h.b16 %v1449
    %v2925 = vunpack.c.l.b16 %v1450
    %v2926 = vunpack.c.h.b16 %v1450
    %v2927 = vunpack.c.l.b16 %v1451
    %v2928 = vunpack.c.h.b16 %v1451
    %v2929 = vunpack.c.l.b16 %v1452
    %v2930 = vunpack.c.h.b16 %v1452
    %v2931 = vunpack.c.l.b16 %v1453
    %v2932 = vunpack.c.h.b16 %v1453
    %v2933 = vunpack.c.l.b16 %v1454
    %v2934 = vunpack.c.h.b16 %v1454
    %v2935 = vunpack.c.l.b16 %v1455
    %v2936 = vunpack.c.h.b16 %v1455
    %v2937 = vunpack.c.l.b16 %v1456
    %v2938 = vunpack.c.h.b16 %v1456
    %v2939 = vpack.c.b16 %v1987, %v1979
    %v2940 = vpack.c.b16 %v1988, %v1980
    %v2941 = vpack.c.b16 %v1989, %v1981
    %v2942 = vpack.c.b16 %v1990, %v1982
    %v2943 = vpack.c.b16 %v1991, %v1983
    %v2944 = vpack.c.b16 %v1992, %v1984
    %v2945 = vpack.c.b16 %v1993, %v1985
    %v2946 = vpack.c.b16 %v1994, %v1986
    %v2947 = vpack.c.b16 %v2003, %v1995
    %v2948 = vpack.c.b16 %v2004, %v1996
    %v2949 = vpack.c.b16 %v2005, %v1997
    %v2950 = vpack.c.b16 %v2006, %v1998
    %v2951 = vpack.c.b16 %v2007, %v1999
    %v2952 = vpack.c.b16 %v2008, %v2000
    %v2953 = vpack.c.b16 %v2009, %v2001
    %v2954 = vpack.c.b16 %v2010, %v2002
    %v2955 = vpack.c.b16 %v2019, %v2011
    %v2956 = vpack.c.b16 %v2020, %v2012
    %v2957 = vpack.c.b16 %v2021, %v2013
    %v2958 = vpack.c.b16 %v2022, %v2014
    %v2959 = vpack.c.b16 %v2023, %v2015
    %v2960 = vpack.c.b16 %v2024, %v2016
    %v2961 = vpack.c.b16 %v2025, %v2017
    %v2962 = vpack.c.b16 %v2026, %v2018
    %v2963 = vpack.c.b16 %v2035, %v2027
    %v2964 = vpack.c.b16 %v2036, %v2028
    %v2965 = vpack.c.b16 %v2037, %v2029
    %v2966 = vpack.c.b16 %v2038, %v2030
    %v2967 = vpack.c.b16 %v2039, %v2031
    %v2968 = vpack.c.b16 %v2040, %v2032
    %v2969 = vpack.c.b16 %v2041, %v2033
    %v2970 = vpack.c.b16 %v2042, %v2034
    %v2971 = vpack.c.b16 %v2051, %v2043
    %v2972 = vpack.c.b16 %v2052, %v2044
    %v2973 = vpack.c.b16 %v2053, %v2045
    %v2974 = vpack.c.b16 %v2054, %v2046
    %v2975 = vpack.c.b16 %v2055, %v2047
    %v2976 = vpack.c.b16 %v2056, %v2048
    %v2977 = vpack.c.b16 %v2057, %v2049
    %v2978 = vpack.c.b16 %v2058, %v2050
    %v2979 = vpack.c.b16 %v2067, %v2059
    %v2980 = vpack.c.b16 %v2068, %v2060
    %v2981 = vpack.c.b16 %v2069, %v2061
    %v2982 = vpack.c.b16 %v2070, %v2062
    %v2983 = vpack.c.b16 %v2071, %v2063
    %v2984 = vpack.c.b16 %v2072, %v2064
    %v2985 = vpack.c.b16 %v2073, %v2065
    %v2986 = vpack.c.b16 %v2074, %v2066
    %v2987 = vpack.c.b16 %v2083, %v2075
    %v2988 = vpack.c.b16 %v2084, %v2076
    %v2989 = vpack.c.b16 %v2085, %v2077
    %v2990 = vpack.c.b16 %v2086, %v2078
    %v2991 = vpack.c.b16 %v2087, %v2079
    %v2992 = vpack.c.b16 %v2088, %v2080
    %v2993 = vpack.c.b16 %v2089, %v2081
    %v2994 = vpack.c.b16 %v2090, %v2082
    %v2995 = vpack.c.b16 %v2099, %v2091
    %v2996 = vpack.c.b16 %v2100, %v2092
    %v2997 = vpack.c.b16 %v2101, %v2093
    %v2998 = vpack.c.b16 %v2102, %v2094
    %v2999 = vpack.c.b16 %v2103, %v2095
    %v3000 = vpack.c.b16 %v2104, %v2096
    %v3001 = vpack.c.b16 %v2105, %v2097
    %v3002 = vpack.c.b16 %v2106, %v2098
    %v3003 = vpack.c.b16 %v2115, %v2107
    %v3004 = vpack.c.b16 %v2116, %v2108
    %v3005 = vpack.c.b16 %v2117, %v2109
    %v3006 = vpack.c.b16 %v2118, %v2110
    %v3007 = vpack.c.b16 %v2119, %v2111
    %v3008 = vpack.c.b16 %v2120, %v2112
    %v3009 = vpack.c.b16 %v2121, %v2113
    %v3010 = vpack.c.b16 %v2122, %v2114
    %v3011 = vpack.c.b16 %v2131, %v2123
    %v3012 = vpack.c.b16 %v2132, %v2124
    %v3013 = vpack.c.b16 %v2133, %v2125
    %v3014 = vpack.c.b16 %v2134, %v2126
    %v3015 = vpack.c.b16 %v2135, %v2127
    %v3016 = vpack.c.b16 %v2136, %v2128
    %v3017 = vpack.c.b16 %v2137, %v2129
    %v3018 = vpack.c.b16 %v2138, %v2130
    %v3019 = vpack.c.b16 %v2147, %v2139
    %v3020 = vpack.c.b16 %v2148, %v2140
    %v3021 = vpack.c.b16 %v2149, %v2141
    %v3022 = vpack.c.b16 %v2150, %v2142
    %v3023 = vpack.c.b16 %v2151, %v2143
    %v3024 = vpack.c.b16 %v2152, %v2144
    %v3025 = vpack.c.b16 %v2153, %v2145
    %v3026 = vpack.c.b16 %v2154, %v2146
    %v3027 = vpack.c.b16 %v2163, %v2155
    %v3028 = vpack.c.b16 %v2164, %v2156
    %v3029 = vpack.c.b16 %v2165, %v2157
    %v3030 = vpack.c.b16 %v2166, %v2158
    %v3031 = vpack.c.b16 %v2167, %v2159
    %v3032 = vpack.c.b16 %v2168, %v2160
    %v3033 = vpack.c.b16 %v2169, %v2161
    %v3034 = vpack.c.b16 %v2170, %v2162
    %v3035 = vpack.c.b16 %v2179, %v2171
    %v3036 = vpack.c.b16 %v2180, %v2172
    %v3037 = vpack.c.b16 %v2181, %v2173
    %v3038 = vpack.c.b16 %v2182, %v2174
    %v3039 = vpack.c.b16 %v2183, %v2175
    %v3040 = vpack.c.b16 %v2184, %v2176
    %v3041 = vpack.c.b16 %v2185, %v2177
    %v3042 = vpack.c.b16 %v2186, %v2178
    %v3043 = vpack.c.b16 %v2195, %v2187
    %v3044 = vpack.c.b16 %v2196, %v2188
    %v3045 = vpack.c.b16 %v2197, %v2189
    %v3046 = vpack.c.b16 %v2198, %v2190
    %v3047 = vpack.c.b16 %v2199, %v2191
    %v3048 = vpack.c.b16 %v2200, %v2192
    %v3049 = vpack.c.b16 %v2201, %v2193
    %v3050 = vpack.c.b16 %v2202, %v2194
    %v3051 = vpack.c.b16 %v2211, %v2203
    %v3052 = vpack.c.b16 %v2212, %v2204
    %v3053 = vpack.c.b16 %v2213, %v2205
    %v3054 = vpack.c.b16 %v2214, %v2206
    %v3055 = vpack.c.b16 %v2215, %v2207
    %v3056 = vpack.c.b16 %v2216, %v2208
    %v3057 = vpack.c.b16 %v2217, %v2209
    %v3058 = vpack.c.b16 %v2218, %v2210
    %v3059 = vpack.c.b16 %v2227, %v2219
    %v3060 = vpack.c.b16 %v2228, %v2220
    %v3061 = vpack.c.b16 %v2229, %v2221
    %v3062 = vpack.c.b16 %v2230, %v2222
    %v3063 = vpack.c.b16 %v2231, %v2223
    %v3064 = vpack.c.b16 %v2232, %v2224
    %v3065 = vpack.c.b16 %v2233, %v2225
    %v3066 = vpack.c.b16 %v2234, %v2226
    %v3067 = vpack.c.b16 %v2243, %v2235
    %v3068 = vpack.c.b16 %v2244, %v2236
    %v3069 = vpack.c.b16 %v2245, %v2237
    %v3070 = vpack.c.b16 %v2246, %v2238
    %v3071 = vpack.c.b16 %v2247, %v2239
    %v3072 = vpack.c.b16 %v2248, %v2240
    %v3073 = vpack.c.b16 %v2249, %v2241
    %v3074 = vpack.c.b16 %v2250, %v2242
    %v3075 = vpack.c.b16 %v2259, %v2251
    %v3076 = vpack.c.b16 %v2260, %v2252
    %v3077 = vpack.c.b16 %v2261, %v2253
    %v3078 = vpack.c.b16 %v2262, %v2254
    %v3079 = vpack.c.b16 %v2263, %v2255
    %v3080 = vpack.c.b16 %v2264, %v2256
    %v3081 = vpack.c.b16 %v2265, %v2257
    %v3082 = vpack.c.b16 %v2266, %v2258
    %v3083 = vpack.c.b16 %v2275, %v2267
    %v3084 = vpack.c.b16 %v2276, %v2268
    %v3085 = vpack.c.b16 %v2277, %v2269
    %v3086 = vpack.c.b16 %v2278, %v2270
    %v3087 = vpack.c.b16 %v2279, %v2271
    %v3088 = vpack.c.b16 %v2280, %v2272
    %v3089 = vpack.c.b16 %v2281, %v2273
    %v3090 = vpack.c.b16 %v2282, %v2274
    %v3091 = vpack.c.b16 %v2291, %v2283
    %v3092 = vpack.c.b16 %v2292, %v2284
    %v3093 = vpack.c.b16 %v2293, %v2285
    %v3094 = vpack.c.b16 %v2294, %v2286
    %v3095 = vpack.c.b16 %v2295, %v2287
    %v3096 = vpack.c.b16 %v2296, %v2288
    %v3097 = vpack.c.b16 %v2297, %v2289
    %v3098 = vpack.c.b16 %v2298, %v2290
    %v3099 = vpack.c.b16 %v2307, %v2299
    %v3100 = vpack.c.b16 %v2308, %v2300
    %v3101 = vpack.c.b16 %v2309, %v2301
    %v3102 = vpack.c.b16 %v2310, %v2302
    %v3103 = vpack.c.b16 %v2311, %v2303
    %v3104 = vpack.c.b16 %v2312, %v2304
    %v3105 = vpack.c.b16 %v2313, %v2305
    %v3106 = vpack.c.b16 %v2314, %v2306
    %v3107 = vpack.c.b16 %v2323, %v2315
    %v3108 = vpack.c.b16 %v2324, %v2316
    %v3109 = vpack.c.b16 %v2325, %v2317
    %v3110 = vpack.c.b16 %v2326, %v2318
    %v3111 = vpack.c.b16 %v2327, %v2319
    %v3112 = vpack.c.b16 %v2328, %v2320
    %v3113 = vpack.c.b16 %v2329, %v2321
    %v3114 = vpack.c.b16 %v2330, %v2322
    %v3115 = vpack.c.b16 %v2339, %v2331
    %v3116 = vpack.c.b16 %v2340, %v2332
    %v3117 = vpack.c.b16 %v2341, %v2333
    %v3118 = vpack.c.b16 %v2342, %v2334
    %v3119 = vpack.c.b16 %v2343, %v2335
    %v3120 = vpack.c.b16 %v2344, %v2336
    %v3121 = vpack.c.b16 %v2345, %v2337
    %v3122 = vpack.c.b16 %v2346, %v2338
    %v3123 = vpack.c.b16 %v2355, %v2347
    %v3124 = vpack.c.b16 %v2356, %v2348
    %v3125 = vpack.c.b16 %v2357, %v2349
    %v3126 = vpack.c.b16 %v2358, %v2350
    %v3127 = vpack.c.b16 %v2359, %v2351
    %v3128 = vpack.c.b16 %v2360, %v2352
    %v3129 = vpack.c.b16 %v2361, %v2353
    %v3130 = vpack.c.b16 %v2362, %v2354
    %v3131 = vpack.c.b16 %v2371, %v2363
    %v3132 = vpack.c.b16 %v2372, %v2364
    %v3133 = vpack.c.b16 %v2373, %v2365
    %v3134 = vpack.c.b16 %v2374, %v2366
    %v3135 = vpack.c.b16 %v2375, %v2367
    %v3136 = vpack.c.b16 %v2376, %v2368
    %v3137 = vpack.c.b16 %v2377, %v2369
    %v3138 = vpack.c.b16 %v2378, %v2370
    %v3139 = vpack.c.b16 %v2387, %v2379
    %v3140 = vpack.c.b16 %v2388, %v2380
    %v3141 = vpack.c.b16 %v2389, %v2381
    %v3142 = vpack.c.b16 %v2390, %v2382
    %v3143 = vpack.c.b16 %v2391, %v2383
    %v3144 = vpack.c.b16 %v2392, %v2384
    %v3145 = vpack.c.b16 %v2393, %v2385
    %v3146 = vpack.c.b16 %v2394, %v2386
    %v3147 = vpack.c.b16 %v2403, %v2395
    %v3148 = vpack.c.b16 %v2404, %v2396
    %v3149 = vpack.c.b16 %v2405, %v2397
    %v3150 = vpack.c.b16 %v2406, %v2398
    %v3151 = vpack.c.b16 %v2407, %v2399
    %v3152 = vpack.c.b16 %v2408, %v2400
    %v3153 = vpack.c.b16 %v2409, %v2401
    %v3154 = vpack.c.b16 %v2410, %v2402
    %v3155 = vpack.c.b16 %v2419, %v2411
    %v3156 = vpack.c.b16 %v2420, %v2412
    %v3157 = vpack.c.b16 %v2421, %v2413
    %v3158 = vpack.c.b16 %v2422, %v2414
    %v3159 = vpack.c.b16 %v2423, %v2415
    %v3160 = vpack.c.b16 %v2424, %v2416
    %v3161 = vpack.c.b16 %v2425, %v2417
    %v3162 = vpack.c.b16 %v2426, %v2418
    %v3163 = vpack.c.b16 %v2435, %v2427
    %v3164 = vpack.c.b16 %v2436, %v2428
    %v3165 = vpack.c.b16 %v2437, %v2429
    %v3166 = vpack.c.b16 %v2438, %v2430
    %v3167 = vpack.c.b16 %v2439, %v2431
    %v3168 = vpack.c.b16 %v2440, %v2432
    %v3169 = vpack.c.b16 %v2441, %v2433
    %v3170 = vpack.c.b16 %v2442, %v2434
    %v3171 = vpack.c.b16 %v2451, %v2443
    %v3172 = vpack.c.b16 %v2452, %v2444
    %v3173 = vpack.c.b16 %v2453, %v2445
    %v3174 = vpack.c.b16 %v2454, %v2446
    %v3175 = vpack.c.b16 %v2455, %v2447
    %v3176 = vpack.c.b16 %v2456, %v2448
    %v3177 = vpack.c.b16 %v2457, %v2449
    %v3178 = vpack.c.b16 %v2458, %v2450
    %v3179 = vpack.c.b16 %v2467, %v2459
    %v3180 = vpack.c.b16 %v2468, %v2460
    %v3181 = vpack.c.b16 %v2469, %v2461
    %v3182 = vpack.c.b16 %v2470, %v2462
    %v3183 = vpack.c.b16 %v2471, %v2463
    %v3184 = vpack.c.b16 %v2472, %v2464
    %v3185 = vpack.c.b16 %v2473, %v2465
    %v3186 = vpack.c.b16 %v2474, %v2466
    %v3187 = vpack.c.b16 %v2483, %v2475
    %v3188 = vpack.c.b16 %v2484, %v2476
    %v3189 = vpack.c.b16 %v2485, %v2477
    %v3190 = vpack.c.b16 %v2486, %v2478
    %v3191 = vpack.c.b16 %v2487, %v2479
    %v3192 = vpack.c.b16 %v2488, %v2480
    %v3193 = vpack.c.b16 %v2489, %v2481
    %v3194 = vpack.c.b16 %v2490, %v2482
    %v3195 = vpack.c.b16 %v2499, %v2491
    %v3196 = vpack.c.b16 %v2500, %v2492
    %v3197 = vpack.c.b16 %v2501, %v2493
    %v3198 = vpack.c.b16 %v2502, %v2494
    %v3199 = vpack.c.b16 %v2503, %v2495
    %v3200 = vpack.c.b16 %v2504, %v2496
    %v3201 = vpack.c.b16 %v2505, %v2497
    %v3202 = vpack.c.b16 %v2506, %v2498
    %v3203 = vpack.c.b16 %v2515, %v2507
    %v3204 = vpack.c.b16 %v2516, %v2508
    %v3205 = vpack.c.b16 %v2517, %v2509
    %v3206 = vpack.c.b16 %v2518, %v2510
    %v3207 = vpack.c.b16 %v2519, %v2511
    %v3208 = vpack.c.b16 %v2520, %v2512
    %v3209 = vpack.c.b16 %v2521, %v2513
    %v3210 = vpack.c.b16 %v2522, %v2514
    %v3211 = vpack.c.b16 %v2531, %v2523
    %v3212 = vpack.c.b16 %v2532, %v2524
    %v3213 = vpack.c.b16 %v2533, %v2525
    %v3214 = vpack.c.b16 %v2534, %v2526
    %v3215 = vpack.c.b16 %v2535, %v2527
    %v3216 = vpack.c.b16 %v2536, %v2528
    %v3217 = vpack.c.b16 %v2537, %v2529
    %v3218 = vpack.c.b16 %v2538, %v2530
    %v3219 = vpack.c.b16 %v2547, %v2539
    %v3220 = vpack.c.b16 %v2548, %v2540
    %v3221 = vpack.c.b16 %v2549, %v2541
    %v3222 = vpack.c.b16 %v2550, %v2542
    %v3223 = vpack.c.b16 %v2551, %v2543
    %v3224 = vpack.c.b16 %v2552, %v2544
    %v3225 = vpack.c.b16 %v2553, %v2545
    %v3226 = vpack.c.b16 %v2554, %v2546
    %v3227 = vpack.c.b16 %v2563, %v2555
    %v3228 = vpack.c.b16 %v2564, %v2556
    %v3229 = vpack.c.b16 %v2565, %v2557
    %v3230 = vpack.c.b16 %v2566, %v2558
    %v3231 = vpack.c.b16 %v2567, %v2559
    %v3232 = vpack.c.b16 %v2568, %v2560
    %v3233 = vpack.c.b16 %v2569, %v2561
    %v3234 = vpack.c.b16 %v2570, %v2562
    %v3235 = vpack.c.b16 %v2579, %v2571
    %v3236 = vpack.c.b16 %v2580, %v2572
    %v3237 = vpack.c.b16 %v2581, %v2573
    %v3238 = vpack.c.b16 %v2582, %v2574
    %v3239 = vpack.c.b16 %v2583, %v2575
    %v3240 = vpack.c.b16 %v2584, %v2576
    %v3241 = vpack.c.b16 %v2585, %v2577
    %v3242 = vpack.c.b16 %v2586, %v2578
    %v3243 = vpack.c.b16 %v2595, %v2587
    %v3244 = vpack.c.b16 %v2596, %v2588
    %v3245 = vpack.c.b16 %v2597, %v2589
    %v3246 = vpack.c.b16 %v2598, %v2590
    %v3247 = vpack.c.b16 %v2599, %v2591
    %v3248 = vpack.c.b16 %v2600, %v2592
    %v3249 = vpack.c.b16 %v2601, %v2593
    %v3250 = vpack.c.b16 %v2602, %v2594
    %v3251 = vpack.c.b16 %v2611, %v2603
    %v3252 = vpack.c.b16 %v2612, %v2604
    %v3253 = vpack.c.b16 %v2613, %v2605
    %v3254 = vpack.c.b16 %v2614, %v2606
    %v3255 = vpack.c.b16 %v2615, %v2607
    %v3256 = vpack.c.b16 %v2616, %v2608
    %v3257 = vpack.c.b16 %v2617, %v2609
    %v3258 = vpack.c.b16 %v2618, %v2610
    %v3259 = vpack.c.b16 %v2627, %v2619
    %v3260 = vpack.c.b16 %v2628, %v2620
    %v3261 = vpack.c.b16 %v2629, %v2621
    %v3262 = vpack.c.b16 %v2630, %v2622
    %v3263 = vpack.c.b16 %v2631, %v2623
    %v3264 = vpack.c.b16 %v2632, %v2624
    %v3265 = vpack.c.b16 %v2633, %v2625
    %v3266 = vpack.c.b16 %v2634, %v2626
    %v3267 = vpack.c.b16 %v2643, %v2635
    %v3268 = vpack.c.b16 %v2644, %v2636
    %v3269 = vpack.c.b16 %v2645, %v2637
    %v3270 = vpack.c.b16 %v2646, %v2638
    %v3271 = vpack.c.b16 %v2647, %v2639
    %v3272 = vpack.c.b16 %v2648, %v2640
    %v3273 = vpack.c.b16 %v2649, %v2641
    %v3274 = vpack.c.b16 %v2650, %v2642
    %v3275 = vpack.c.b16 %v2659, %v2651
    %v3276 = vpack.c.b16 %v2660, %v2652
    %v3277 = vpack.c.b16 %v2661, %v2653
    %v3278 = vpack.c.b16 %v2662, %v2654
    %v3279 = vpack.c.b16 %v2663, %v2655
    %v3280 = vpack.c.b16 %v2664, %v2656
    %v3281 = vpack.c.b16 %v2665, %v2657
    %v3282 = vpack.c.b16 %v2666, %v2658
    %v3283 = vpack.c.b16 %v2675, %v2667
    %v3284 = vpack.c.b16 %v2676, %v2668
    %v3285 = vpack.c.b16 %v2677, %v2669
    %v3286 = vpack.c.b16 %v2678, %v2670
    %v3287 = vpack.c.b16 %v2679, %v2671
    %v3288 = vpack.c.b16 %v2680, %v2672
    %v3289 = vpack.c.b16 %v2681, %v2673
    %v3290 = vpack.c.b16 %v2682, %v2674
    %v3291 = vpack.c.b16 %v2691, %v2683
    %v3292 = vpack.c.b16 %v2692, %v2684
    %v3293 = vpack.c.b16 %v2693, %v2685
    %v3294 = vpack.c.b16 %v2694, %v2686
    %v3295 = vpack.c.b16 %v2695, %v2687
    %v3296 = vpack.c.b16 %v2696, %v2688
    %v3297 = vpack.c.b16 %v2697, %v2689
    %v3298 = vpack.c.b16 %v2698, %v2690
    %v3299 = vpack.c.b16 %v2707, %v2699
    %v3300 = vpack.c.b16 %v2708, %v2700
    %v3301 = vpack.c.b16 %v2709, %v2701
    %v3302 = vpack.c.b16 %v2710, %v2702
    %v3303 = vpack.c.b16 %v2711, %v2703
    %v3304 = vpack.c.b16 %v2712, %v2704
    %v3305 = vpack.c.b16 %v2713, %v2705
    %v3306 = vpack.c.b16 %v2714, %v2706
    %v3307 = vpack.c.b16 %v2723, %v2715
    %v3308 = vpack.c.b16 %v2724, %v2716
    %v3309 = vpack.c.b16 %v2725, %v2717
    %v3310 = vpack.c.b16 %v2726, %v2718
    %v3311 = vpack.c.b16 %v2727, %v2719
    %v3312 = vpack.c.b16 %v2728, %v2720
    %v3313 = vpack.c.b16 %v2729, %v2721
    %v3314 = vpack.c.b16 %v2730, %v2722
    %v3315 = vpack.c.b16 %v2739, %v2731
    %v3316 = vpack.c.b16 %v2740, %v2732
    %v3317 = vpack.c.b16 %v2741, %v2733
    %v3318 = vpack.c.b16 %v2742, %v2734
    %v3319 = vpack.c.b16 %v2743, %v2735
    %v3320 = vpack.c.b16 %v2744, %v2736
    %v3321 = vpack.c.b16 %v2745, %v2737
    %v3322 = vpack.c.b16 %v2746, %v2738
    %v3323 = vpack.c.b16 %v2755, %v2747
    %v3324 = vpack.c.b16 %v2756, %v2748
    %v3325 = vpack.c.b16 %v2757, %v2749
    %v3326 = vpack.c.b16 %v2758, %v2750
    %v3327 = vpack.c.b16 %v2759, %v2751
    %v3328 = vpack.c.b16 %v2760, %v2752
    %v3329 = vpack.c.b16 %v2761, %v2753
    %v3330 = vpack.c.b16 %v2762, %v2754
    %v3331 = vpack.c.b16 %v2771, %v2763
    %v3332 = vpack.c.b16 %v2772, %v2764
    %v3333 = vpack.c.b16 %v2773, %v2765
    %v3334 = vpack.c.b16 %v2774, %v2766
    %v3335 = vpack.c.b16 %v2775, %v2767
    %v3336 = vpack.c.b16 %v2776, %v2768
    %v3337 = vpack.c.b16 %v2777, %v2769
    %v3338 = vpack.c.b16 %v2778, %v2770
    %v3339 = vpack.c.b16 %v2787, %v2779
    %v3340 = vpack.c.b16 %v2788, %v2780
    %v3341 = vpack.c.b16 %v2789, %v2781
    %v3342 = vpack.c.b16 %v2790, %v2782
    %v3343 = vpack.c.b16 %v2791, %v2783
    %v3344 = vpack.c.b16 %v2792, %v2784
    %v3345 = vpack.c.b16 %v2793, %v2785
    %v3346 = vpack.c.b16 %v2794, %v2786
    %v3347 = vpack.c.b16 %v2803, %v2795
    %v3348 = vpack.c.b16 %v2804, %v2796
    %v3349 = vpack.c.b16 %v2805, %v2797
    %v3350 = vpack.c.b16 %v2806, %v2798
    %v3351 = vpack.c.b16 %v2807, %v2799
    %v3352 = vpack.c.b16 %v2808, %v2800
    %v3353 = vpack.c.b16 %v2809, %v2801
    %v3354 = vpack.c.b16 %v2810, %v2802
    %v3355 = vpack.c.b16 %v2819, %v2811
    %v3356 = vpack.c.b16 %v2820, %v2812
    %v3357 = vpack.c.b16 %v2821, %v2813
    %v3358 = vpack.c.b16 %v2822, %v2814
    %v3359 = vpack.c.b16 %v2823, %v2815
    %v3360 = vpack.c.b16 %v2824, %v2816
    %v3361 = vpack.c.b16 %v2825, %v2817
    %v3362 = vpack.c.b16 %v2826, %v2818
    %v3363 = vpack.c.b16 %v2835, %v2827
    %v3364 = vpack.c.b16 %v2836, %v2828
    %v3365 = vpack.c.b16 %v2837, %v2829
    %v3366 = vpack.c.b16 %v2838, %v2830
    %v3367 = vpack.c.b16 %v2839, %v2831
    %v3368 = vpack.c.b16 %v2840, %v2832
    %v3369 = vpack.c.b16 %v2841, %v2833
    %v3370 = vpack.c.b16 %v2842, %v2834
    %v3371 = vpack.c.b16 %v2851, %v2843
    %v3372 = vpack.c.b16 %v2852, %v2844
    %v3373 = vpack.c.b16 %v2853, %v2845
    %v3374 = vpack.c.b16 %v2854, %v2846
    %v3375 = vpack.c.b16 %v2855, %v2847
    %v3376 = vpack.c.b16 %v2856, %v2848
    %v3377 = vpack.c.b16 %v2857, %v2849
    %v3378 = vpack.c.b16 %v2858, %v2850
    %v3379 = vpack.c.b16 %v2867, %v2859
    %v3380 = vpack.c.b16 %v2868, %v2860
    %v3381 = vpack.c.b16 %v2869, %v2861
    %v3382 = vpack.c.b16 %v2870, %v2862
    %v3383 = vpack.c.b16 %v2871, %v2863
    %v3384 = vpack.c.b16 %v2872, %v2864
    %v3385 = vpack.c.b16 %v2873, %v2865
    %v3386 = vpack.c.b16 %v2874, %v2866
    %v3387 = vpack.c.b16 %v2883, %v2875
    %v3388 = vpack.c.b16 %v2884, %v2876
    %v3389 = vpack.c.b16 %v2885, %v2877
    %v3390 = vpack.c.b16 %v2886, %v2878
    %v3391 = vpack.c.b16 %v2887, %v2879
    %v3392 = vpack.c.b16 %v2888, %v2880
    %v3393 = vpack.c.b16 %v2889, %v2881
    %v3394 = vpack.c.b16 %v2890, %v2882
    %v3395 = vpack.c.b16 %v2899, %v2891
    %v3396 = vpack.c.b16 %v2900, %v2892
    %v3397 = vpack.c.b16 %v2901, %v2893
    %v3398 = vpack.c.b16 %v2902, %v2894
    %v3399 = vpack.c.b16 %v2903, %v2895
    %v3400 = vpack.c.b16 %v2904, %v2896
    %v3401 = vpack.c.b16 %v2905, %v2897
    %v3402 = vpack.c.b16 %v2906, %v2898
    %v3403 = vpack.c.b16 %v2915, %v2907
    %v3404 = vpack.c.b16 %v2916, %v2908
    %v3405 = vpack.c.b16 %v2917, %v2909
    %v3406 = vpack.c.b16 %v2918, %v2910
    %v3407 = vpack.c.b16 %v2919, %v2911
    %v3408 = vpack.c.b16 %v2920, %v2912
    %v3409 = vpack.c.b16 %v2921, %v2913
    %v3410 = vpack.c.b16 %v2922, %v2914
    %v3411 = vpack.c.b16 %v2931, %v2923
    %v3412 = vpack.c.b16 %v2932, %v2924
    %v3413 = vpack.c.b16 %v2933, %v2925
    %v3414 = vpack.c.b16 %v2934, %v2926
    %v3415 = vpack.c.b16 %v2935, %v2927
    %v3416 = vpack.c.b16 %v2936, %v2928
    %v3417 = vpack.c.b16 %v2937, %v2929
    %v3418 = vpack.c.b16 %v2938, %v2930
    %vm3899 = vcmask 523264
    %v3901 = vsel %vm3899, %v976, 0
    %3903 = vmatprep.subr.bf16.mxu0 %v2940
    %3904 = vmatpush1.bf16.msra.mxu0 %v2939
    %3905 = vmatprep.subr.bf16.mxu0 %v2948
    %3906 = vmatpush1.bf16.msra.mxu0 %v2947
    %3907 = vmatprep.subr.bf16.mxu0 %v2956
    %3908 = vmatpush1.bf16.msra.mxu0 %v2955
    %3909 = vmatprep.subr.bf16.mxu0 %v2964
    %3910 = vmatpush1.bf16.msra.mxu0 %v2963
    %3911 = vmatprep.subr.bf16.mxu0 %v2972
    %3912 = vmatpush1.bf16.msra.mxu0 %v2971
    %3913 = vmatprep.subr.bf16.mxu0 %v2980
    %3914 = vmatpush1.bf16.msra.mxu0 %v2979
    %3915 = vmatprep.subr.bf16.mxu0 %v2988
    %3916 = vmatpush1.bf16.msra.mxu0 %v2987
    %3917 = vmatprep.subr.bf16.mxu0 %v2996
    %3918 = vmatpush1.bf16.msra.mxu0 %v2995
    %3919 = vmatprep.subr.bf16.mxu0 %v3004
    %3920 = vmatpush1.bf16.msra.mxu0 %v3003
    %3921 = vmatprep.subr.bf16.mxu0 %v3012
    %3922 = vmatpush1.bf16.msra.mxu0 %v3011
    %3923 = vmatprep.subr.bf16.mxu0 %v3020
    %3924 = vmatpush1.bf16.msra.mxu0 %v3019
    %3925 = vmatprep.subr.bf16.mxu0 %v3028
    %3926 = vmatpush1.bf16.msra.mxu0 %v3027
    %3927 = vmatprep.subr.bf16.mxu0 %v3036
    %3928 = vmatpush1.bf16.msra.mxu0 %v3035
    %3929 = vmatprep.subr.bf16.mxu0 %v3044
    %3930 = vmatpush1.bf16.msra.mxu0 %v3043
    %3931 = vmatprep.subr.bf16.mxu0 %v3052
    %3932 = vmatpush1.bf16.msra.mxu0 %v3051
    %3933 = vmatprep.subr.bf16.mxu0 %v3060
    %3934 = vmatpush1.bf16.msra.mxu0 %v3059
    %3935 = vmatprep.mubr.bf16.mxu0 %v970
    %3936 = vmatmul.mubr.bf16.gmra.mrb[0].mxu0 %v969
    %v3937 = vpop.f32.mrb[0].mxu0
    %v3938 = vadd.f32 %v1462, %v3937
    %v3939 = vpop.f32.mrb[0].mxu0
    %v3940 = vadd.f32 %v1466, %v3939
    %v3941 = vpop.f32.mrb[0].mxu0
    %v3942 = vpop.f32.mrb[0].mxu0
    %3943 = vdwg.mxu0
    %3944 = vmatprep.subr.bf16.mxu0 %v3068
    %3945 = vmatpush1.bf16.msra.mxu0 %v3067
    %3946 = vmatprep.subr.bf16.mxu0 %v3076
    %3947 = vmatpush1.bf16.msra.mxu0 %v3075
    %3948 = vmatprep.subr.bf16.mxu0 %v3084
    %3949 = vmatpush1.bf16.msra.mxu0 %v3083
    %3950 = vmatprep.subr.bf16.mxu0 %v3092
    %3951 = vmatpush1.bf16.msra.mxu0 %v3091
    %3952 = vmatprep.subr.bf16.mxu0 %v3100
    %3953 = vmatpush1.bf16.msra.mxu0 %v3099
    %3954 = vmatprep.subr.bf16.mxu0 %v3108
    %3955 = vmatpush1.bf16.msra.mxu0 %v3107
    %3956 = vmatprep.subr.bf16.mxu0 %v3116
    %3957 = vmatpush1.bf16.msra.mxu0 %v3115
    %3958 = vmatprep.subr.bf16.mxu0 %v3124
    %3959 = vmatpush1.bf16.msra.mxu0 %v3123
    %3960 = vmatprep.subr.bf16.mxu0 %v3132
    %3961 = vmatpush1.bf16.msra.mxu0 %v3131
    %3962 = vmatprep.subr.bf16.mxu0 %v3140
    %3963 = vmatpush1.bf16.msra.mxu0 %v3139
    %3964 = vmatprep.subr.bf16.mxu0 %v3148
    %3965 = vmatpush1.bf16.msra.mxu0 %v3147
    %3966 = vmatprep.subr.bf16.mxu0 %v3156
    %3967 = vmatpush1.bf16.msra.mxu0 %v3155
    %3968 = vmatprep.subr.bf16.mxu0 %v3164
    %3969 = vmatpush1.bf16.msra.mxu0 %v3163
    %3970 = vmatprep.subr.bf16.mxu0 %v3172
    %3971 = vmatpush1.bf16.msra.mxu0 %v3171
    %3972 = vmatprep.subr.bf16.mxu0 %v3180
    %3973 = vmatpush1.bf16.msra.mxu0 %v3179
    %3974 = vmatprep.subr.bf16.mxu0 %v3188
    %3975 = vmatpush1.bf16.msra.mxu0 %v3187
    %3976 = vmatprep.mubr.bf16.mxu0 %v972
    %3977 = vmatmul.mubr.bf16.gmra.mrb[0].mxu0 %v971
    %v3978 = vpop.f32.mrb[0].mxu0
    %v3979 = vadd.f32 %v3938, %v3978
    %v3980 = vpop.f32.mrb[0].mxu0
    %v3981 = vadd.f32 %v3940, %v3980
    %v3982 = vpop.f32.mrb[0].mxu0
    %v3983 = vpop.f32.mrb[0].mxu0
    %3984 = vdwg.mxu0
    %3985 = vmatprep.subr.bf16.mxu0 %v3196
    %3986 = vmatpush1.bf16.msra.mxu0 %v3195
    %3987 = vmatprep.subr.bf16.mxu0 %v3204
    %3988 = vmatpush1.bf16.msra.mxu0 %v3203
    %3989 = vmatprep.subr.bf16.mxu0 %v3212
    %3990 = vmatpush1.bf16.msra.mxu0 %v3211
    %3991 = vmatprep.subr.bf16.mxu0 %v3220
    %3992 = vmatpush1.bf16.msra.mxu0 %v3219
    %3993 = vmatprep.subr.bf16.mxu0 %v3228
    %3994 = vmatpush1.bf16.msra.mxu0 %v3227
    %3995 = vmatprep.subr.bf16.mxu0 %v3236
    %3996 = vmatpush1.bf16.msra.mxu0 %v3235
    %3997 = vmatprep.subr.bf16.mxu0 %v3244
    %3998 = vmatpush1.bf16.msra.mxu0 %v3243
    %3999 = vmatprep.subr.bf16.mxu0 %v3252
    %4000 = vmatpush1.bf16.msra.mxu0 %v3251
    %4001 = vmatprep.subr.bf16.mxu0 %v3260
    %4002 = vmatpush1.bf16.msra.mxu0 %v3259
    %4003 = vmatprep.subr.bf16.mxu0 %v3268
    %4004 = vmatpush1.bf16.msra.mxu0 %v3267
    %4005 = vmatprep.subr.bf16.mxu0 %v3276
    %4006 = vmatpush1.bf16.msra.mxu0 %v3275
    %4007 = vmatprep.subr.bf16.mxu0 %v3284
    %4008 = vmatpush1.bf16.msra.mxu0 %v3283
    %4009 = vmatprep.subr.bf16.mxu0 %v3292
    %4010 = vmatpush1.bf16.msra.mxu0 %v3291
    %4011 = vmatprep.subr.bf16.mxu0 %v3300
    %4012 = vmatpush1.bf16.msra.mxu0 %v3299
    %4013 = vmatprep.subr.bf16.mxu0 %v3308
    %4014 = vmatpush1.bf16.msra.mxu0 %v3307
    %4015 = vmatprep.subr.bf16.mxu0 %v3316
    %4016 = vmatpush1.bf16.msra.mxu0 %v3315
    %4017 = vmatprep.mubr.bf16.mxu0 %v974
    %4018 = vmatmul.mubr.bf16.gmra.mrb[0].mxu0 %v973
    %v4019 = vpop.f32.mrb[0].mxu0
    %v4020 = vadd.f32 %v3979, %v4019
    %v4021 = vpop.f32.mrb[0].mxu0
    %v4022 = vadd.f32 %v3981, %v4021
    %v4023 = vpop.f32.mrb[0].mxu0
    %v4024 = vpop.f32.mrb[0].mxu0
    %4025 = vdwg.mxu0
    %4026 = vmatprep.subr.bf16.mxu0 %v3324
    %4027 = vmatpush1.bf16.msra.mxu0 %v3323
    %4028 = vmatprep.subr.bf16.mxu0 %v3332
    %4029 = vmatpush1.bf16.msra.mxu0 %v3331
    %4030 = vmatprep.subr.bf16.mxu0 %v3340
    %4031 = vmatpush1.bf16.msra.mxu0 %v3339
    %4032 = vmatprep.subr.bf16.mxu0 %v3348
    %4033 = vmatpush1.bf16.msra.mxu0 %v3347
    %4034 = vmatprep.subr.bf16.mxu0 %v3356
    %4035 = vmatpush1.bf16.msra.mxu0 %v3355
    %4036 = vmatprep.subr.bf16.mxu0 %v3364
    %4037 = vmatpush1.bf16.msra.mxu0 %v3363
    %4038 = vmatprep.subr.bf16.mxu0 %v3372
    %4039 = vmatpush1.bf16.msra.mxu0 %v3371
    %4040 = vmatprep.subr.bf16.mxu0 %v3380
    %4041 = vmatpush1.bf16.msra.mxu0 %v3379
    %4042 = vmatprep.subr.bf16.mxu0 %v3388
    %4043 = vmatpush1.bf16.msra.mxu0 %v3387
    %4044 = vmatprep.subr.bf16.mxu0 %v3396
    %4045 = vmatpush1.bf16.msra.mxu0 %v3395
    %4046 = vmatprep.subr.bf16.mxu0 %v3404
    %4047 = vmatpush1.bf16.msra.mxu0 %v3403
    %4048 = vmatprep.subr.bf16.mxu0 %v3412
    %4049 = vmatpush1.bf16.msra.mxu0 %v3411
    %4050 = vmatprep.subr.bf16.mxu0 0
    %4051 = vmatpush1.bf16.msra.mxu0 0
    %4052 = vmatprep.subr.bf16.mxu0 0
    %4053 = vmatpush1.bf16.msra.mxu0 0
    %4054 = vmatprep.subr.bf16.mxu0 0
    %4055 = vmatpush1.bf16.msra.mxu0 0
    %4056 = vmatprep.subr.bf16.mxu0 0
    %4057 = vmatpush1.bf16.msra.mxu0 0
    %4058 = vmatprep.mubr.bf16.mxu0 %v3901
    %4059 = vmatmul.mubr.bf16.gmra.mrb[0].mxu0 %v975
    %v4060 = vpop.f32.mrb[0].mxu0
    %v4061 = vadd.f32 %v4020, %v4060
    %v4062 = vpop.f32.mrb[0].mxu0
    %v4063 = vadd.f32 %v4022, %v4062
    %v4064 = vpop.f32.mrb[0].mxu0
    %v4065 = vpop.f32.mrb[0].mxu0
    %4066 = vdwg.mxu0
    %4067 = vmatprep.subr.bf16.mxu0 %v2942
    %4068 = vmatpush1.bf16.msra.mxu0 %v2941
    %4069 = vmatprep.subr.bf16.mxu0 %v2950
    %4070 = vmatpush1.bf16.msra.mxu0 %v2949
    %4071 = vmatprep.subr.bf16.mxu0 %v2958
    %4072 = vmatpush1.bf16.msra.mxu0 %v2957
    %4073 = vmatprep.subr.bf16.mxu0 %v2966
    %4074 = vmatpush1.bf16.msra.mxu0 %v2965
    %4075 = vmatprep.subr.bf16.mxu0 %v2974
    %4076 = vmatpush1.bf16.msra.mxu0 %v2973
    %4077 = vmatprep.subr.bf16.mxu0 %v2982
    %4078 = vmatpush1.bf16.msra.mxu0 %v2981
    %4079 = vmatprep.subr.bf16.mxu0 %v2990
    %4080 = vmatpush1.bf16.msra.mxu0 %v2989
    %4081 = vmatprep.subr.bf16.mxu0 %v2998
    %4082 = vmatpush1.bf16.msra.mxu0 %v2997
    %4083 = vmatprep.subr.bf16.mxu0 %v3006
    %4084 = vmatpush1.bf16.msra.mxu0 %v3005
    %4085 = vmatprep.subr.bf16.mxu0 %v3014
    %4086 = vmatpush1.bf16.msra.mxu0 %v3013
    %4087 = vmatprep.subr.bf16.mxu0 %v3022
    %4088 = vmatpush1.bf16.msra.mxu0 %v3021
    %4089 = vmatprep.subr.bf16.mxu0 %v3030
    %4090 = vmatpush1.bf16.msra.mxu0 %v3029
    %4091 = vmatprep.subr.bf16.mxu0 %v3038
    %4092 = vmatpush1.bf16.msra.mxu0 %v3037
    %4093 = vmatprep.subr.bf16.mxu0 %v3046
    %4094 = vmatpush1.bf16.msra.mxu0 %v3045
    %4095 = vmatprep.subr.bf16.mxu0 %v3054
    %4096 = vmatpush1.bf16.msra.mxu0 %v3053
    %4097 = vmatprep.subr.bf16.mxu0 %v3062
    %4098 = vmatpush1.bf16.msra.mxu0 %v3061
    %4099 = vmatprep.mubr.bf16.mxu0 %v970
    %4100 = vmatmul.mubr.bf16.gmra.mrb[0].mxu0 %v969
    %v4101 = vpop.f32.mrb[0].mxu0
    %v4102 = vadd.f32 %v1470, %v4101
    %v4103 = vpop.f32.mrb[0].mxu0
    %v4104 = vadd.f32 %v1474, %v4103
    %v4105 = vpop.f32.mrb[0].mxu0
    %v4106 = vpop.f32.mrb[0].mxu0
    %4107 = vdwg.mxu0
    %4108 = vmatprep.subr.bf16.mxu0 %v3070
    %4109 = vmatpush1.bf16.msra.mxu0 %v3069
    %4110 = vmatprep.subr.bf16.mxu0 %v3078
    %4111 = vmatpush1.bf16.msra.mxu0 %v3077
    %4112 = vmatprep.subr.bf16.mxu0 %v3086
    %4113 = vmatpush1.bf16.msra.mxu0 %v3085
    %4114 = vmatprep.subr.bf16.mxu0 %v3094
    %4115 = vmatpush1.bf16.msra.mxu0 %v3093
    %4116 = vmatprep.subr.bf16.mxu0 %v3102
    %4117 = vmatpush1.bf16.msra.mxu0 %v3101
    %4118 = vmatprep.subr.bf16.mxu0 %v3110
    %4119 = vmatpush1.bf16.msra.mxu0 %v3109
    %4120 = vmatprep.subr.bf16.mxu0 %v3118
    %4121 = vmatpush1.bf16.msra.mxu0 %v3117
    %4122 = vmatprep.subr.bf16.mxu0 %v3126
    %4123 = vmatpush1.bf16.msra.mxu0 %v3125
    %4124 = vmatprep.subr.bf16.mxu0 %v3134
    %4125 = vmatpush1.bf16.msra.mxu0 %v3133
    %4126 = vmatprep.subr.bf16.mxu0 %v3142
    %4127 = vmatpush1.bf16.msra.mxu0 %v3141
    %4128 = vmatprep.subr.bf16.mxu0 %v3150
    %4129 = vmatpush1.bf16.msra.mxu0 %v3149
    %4130 = vmatprep.subr.bf16.mxu0 %v3158
    %4131 = vmatpush1.bf16.msra.mxu0 %v3157
    %4132 = vmatprep.subr.bf16.mxu0 %v3166
    %4133 = vmatpush1.bf16.msra.mxu0 %v3165
    %4134 = vmatprep.subr.bf16.mxu0 %v3174
    %4135 = vmatpush1.bf16.msra.mxu0 %v3173
    %4136 = vmatprep.subr.bf16.mxu0 %v3182
    %4137 = vmatpush1.bf16.msra.mxu0 %v3181
    %4138 = vmatprep.subr.bf16.mxu0 %v3190
    %4139 = vmatpush1.bf16.msra.mxu0 %v3189
    %4140 = vmatprep.mubr.bf16.mxu0 %v972
    %4141 = vmatmul.mubr.bf16.gmra.mrb[0].mxu0 %v971
    %v4142 = vpop.f32.mrb[0].mxu0
    %v4143 = vadd.f32 %v4102, %v4142
    %v4144 = vpop.f32.mrb[0].mxu0
    %v4145 = vadd.f32 %v4104, %v4144
    %v4146 = vpop.f32.mrb[0].mxu0
    %v4147 = vpop.f32.mrb[0].mxu0
    %4148 = vdwg.mxu0
    %4149 = vmatprep.subr.bf16.mxu0 %v3198
    %4150 = vmatpush1.bf16.msra.mxu0 %v3197
    %4151 = vmatprep.subr.bf16.mxu0 %v3206
    %4152 = vmatpush1.bf16.msra.mxu0 %v3205
    %4153 = vmatprep.subr.bf16.mxu0 %v3214
    %4154 = vmatpush1.bf16.msra.mxu0 %v3213
    %4155 = vmatprep.subr.bf16.mxu0 %v3222
    %4156 = vmatpush1.bf16.msra.mxu0 %v3221
    %4157 = vmatprep.subr.bf16.mxu0 %v3230
    %4158 = vmatpush1.bf16.msra.mxu0 %v3229
    %4159 = vmatprep.subr.bf16.mxu0 %v3238
    %4160 = vmatpush1.bf16.msra.mxu0 %v3237
    %4161 = vmatprep.subr.bf16.mxu0 %v3246
    %4162 = vmatpush1.bf16.msra.mxu0 %v3245
    %4163 = vmatprep.subr.bf16.mxu0 %v3254
    %4164 = vmatpush1.bf16.msra.mxu0 %v3253
    %4165 = vmatprep.subr.bf16.mxu0 %v3262
    %4166 = vmatpush1.bf16.msra.mxu0 %v3261
    %4167 = vmatprep.subr.bf16.mxu0 %v3270
    %4168 = vmatpush1.bf16.msra.mxu0 %v3269
    %4169 = vmatprep.subr.bf16.mxu0 %v3278
    %4170 = vmatpush1.bf16.msra.mxu0 %v3277
    %4171 = vmatprep.subr.bf16.mxu0 %v3286
    %4172 = vmatpush1.bf16.msra.mxu0 %v3285
    %4173 = vmatprep.subr.bf16.mxu0 %v3294
    %4174 = vmatpush1.bf16.msra.mxu0 %v3293
    %4175 = vmatprep.subr.bf16.mxu0 %v3302
    %4176 = vmatpush1.bf16.msra.mxu0 %v3301
    %4177 = vmatprep.subr.bf16.mxu0 %v3310
    %4178 = vmatpush1.bf16.msra.mxu0 %v3309
    %4179 = vmatprep.subr.bf16.mxu0 %v3318
    %4180 = vmatpush1.bf16.msra.mxu0 %v3317
    %4181 = vmatprep.mubr.bf16.mxu0 %v974
    %4182 = vmatmul.mubr.bf16.gmra.mrb[0].mxu0 %v973
    %v4183 = vpop.f32.mrb[0].mxu0
    %v4184 = vadd.f32 %v4143, %v4183
    %v4185 = vpop.f32.mrb[0].mxu0
    %v4186 = vadd.f32 %v4145, %v4185
    %v4187 = vpop.f32.mrb[0].mxu0
    %v4188 = vpop.f32.mrb[0].mxu0
    %4189 = vdwg.mxu0
    %4190 = vmatprep.subr.bf16.mxu0 %v3326
    %4191 = vmatpush1.bf16.msra.mxu0 %v3325
    %4192 = vmatprep.subr.bf16.mxu0 %v3334
    %4193 = vmatpush1.bf16.msra.mxu0 %v3333
    %4194 = vmatprep.subr.bf16.mxu0 %v3342
    %4195 = vmatpush1.bf16.msra.mxu0 %v3341
    %4196 = vmatprep.subr.bf16.mxu0 %v3350
    %4197 = vmatpush1.bf16.msra.mxu0 %v3349
    %4198 = vmatprep.subr.bf16.mxu0 %v3358
    %4199 = vmatpush1.bf16.msra.mxu0 %v3357
    %4200 = vmatprep.subr.bf16.mxu0 %v3366
    %4201 = vmatpush1.bf16.msra.mxu0 %v3365
    %4202 = vmatprep.subr.bf16.mxu0 %v3374
    %4203 = vmatpush1.bf16.msra.mxu0 %v3373
    %4204 = vmatprep.subr.bf16.mxu0 %v3382
    %4205 = vmatpush1.bf16.msra.mxu0 %v3381
    %4206 = vmatprep.subr.bf16.mxu0 %v3390
    %4207 = vmatpush1.bf16.msra.mxu0 %v3389
    %4208 = vmatprep.subr.bf16.mxu0 %v3398
    %4209 = vmatpush1.bf16.msra.mxu0 %v3397
    %4210 = vmatprep.subr.bf16.mxu0 %v3406
    %4211 = vmatpush1.bf16.msra.mxu0 %v3405
    %4212 = vmatprep.subr.bf16.mxu0 %v3414
    %4213 = vmatpush1.bf16.msra.mxu0 %v3413
    %4214 = vmatprep.subr.bf16.mxu0 0
    %4215 = vmatpush1.bf16.msra.mxu0 0
    %4216 = vmatprep.subr.bf16.mxu0 0
    %4217 = vmatpush1.bf16.msra.mxu0 0
    %4218 = vmatprep.subr.bf16.mxu0 0
    %4219 = vmatpush1.bf16.msra.mxu0 0
    %4220 = vmatprep.subr.bf16.mxu0 0
    %4221 = vmatpush1.bf16.msra.mxu0 0
    %4222 = vmatprep.mubr.bf16.mxu0 %v3901
    %4223 = vmatmul.mubr.bf16.gmra.mrb[0].mxu0 %v975
    %v4224 = vpop.f32.mrb[0].mxu0
    %v4225 = vadd.f32 %v4184, %v4224
    %v4226 = vpop.f32.mrb[0].mxu0
    %v4227 = vadd.f32 %v4186, %v4226
    %v4228 = vpop.f32.mrb[0].mxu0
    %v4229 = vpop.f32.mrb[0].mxu0
    %4230 = vdwg.mxu0
    %4231 = vmatprep.subr.bf16.mxu0 %v2944
    %4232 = vmatpush1.bf16.msra.mxu0 %v2943
    %4233 = vmatprep.subr.bf16.mxu0 %v2952
    %4234 = vmatpush1.bf16.msra.mxu0 %v2951
    %4235 = vmatprep.subr.bf16.mxu0 %v2960
    %4236 = vmatpush1.bf16.msra.mxu0 %v2959
    %4237 = vmatprep.subr.bf16.mxu0 %v2968
    %4238 = vmatpush1.bf16.msra.mxu0 %v2967
    %4239 = vmatprep.subr.bf16.mxu0 %v2976
    %4240 = vmatpush1.bf16.msra.mxu0 %v2975
    %4241 = vmatprep.subr.bf16.mxu0 %v2984
    %4242 = vmatpush1.bf16.msra.mxu0 %v2983
    %4243 = vmatprep.subr.bf16.mxu0 %v2992
    %4244 = vmatpush1.bf16.msra.mxu0 %v2991
    %4245 = vmatprep.subr.bf16.mxu0 %v3000
    %4246 = vmatpush1.bf16.msra.mxu0 %v2999
    %4247 = vmatprep.subr.bf16.mxu0 %v3008
    %4248 = vmatpush1.bf16.msra.mxu0 %v3007
    %4249 = vmatprep.subr.bf16.mxu0 %v3016
    %4250 = vmatpush1.bf16.msra.mxu0 %v3015
    %4251 = vmatprep.subr.bf16.mxu0 %v3024
    %4252 = vmatpush1.bf16.msra.mxu0 %v3023
    %4253 = vmatprep.subr.bf16.mxu0 %v3032
    %4254 = vmatpush1.bf16.msra.mxu0 %v3031
    %4255 = vmatprep.subr.bf16.mxu0 %v3040
    %4256 = vmatpush1.bf16.msra.mxu0 %v3039
    %4257 = vmatprep.subr.bf16.mxu0 %v3048
    %4258 = vmatpush1.bf16.msra.mxu0 %v3047
    %4259 = vmatprep.subr.bf16.mxu0 %v3056
    %4260 = vmatpush1.bf16.msra.mxu0 %v3055
    %4261 = vmatprep.subr.bf16.mxu0 %v3064
    %4262 = vmatpush1.bf16.msra.mxu0 %v3063
    %4263 = vmatprep.mubr.bf16.mxu0 %v970
    %4264 = vmatmul.mubr.bf16.gmra.mrb[0].mxu0 %v969
    %v4265 = vpop.f32.mrb[0].mxu0
    %v4266 = vadd.f32 %v1478, %v4265
    %v4267 = vpop.f32.mrb[0].mxu0
    %v4268 = vadd.f32 %v1482, %v4267
    %v4269 = vpop.f32.mrb[0].mxu0
    %v4270 = vpop.f32.mrb[0].mxu0
    %4271 = vdwg.mxu0
    %4272 = vmatprep.subr.bf16.mxu0 %v3072
    %4273 = vmatpush1.bf16.msra.mxu0 %v3071
    %4274 = vmatprep.subr.bf16.mxu0 %v3080
    %4275 = vmatpush1.bf16.msra.mxu0 %v3079
    %4276 = vmatprep.subr.bf16.mxu0 %v3088
    %4277 = vmatpush1.bf16.msra.mxu0 %v3087
    %4278 = vmatprep.subr.bf16.mxu0 %v3096
    %4279 = vmatpush1.bf16.msra.mxu0 %v3095
    %4280 = vmatprep.subr.bf16.mxu0 %v3104
    %4281 = vmatpush1.bf16.msra.mxu0 %v3103
    %4282 = vmatprep.subr.bf16.mxu0 %v3112
    %4283 = vmatpush1.bf16.msra.mxu0 %v3111
    %4284 = vmatprep.subr.bf16.mxu0 %v3120
    %4285 = vmatpush1.bf16.msra.mxu0 %v3119
    %4286 = vmatprep.subr.bf16.mxu0 %v3128
    %4287 = vmatpush1.bf16.msra.mxu0 %v3127
    %4288 = vmatprep.subr.bf16.mxu0 %v3136
    %4289 = vmatpush1.bf16.msra.mxu0 %v3135
    %4290 = vmatprep.subr.bf16.mxu0 %v3144
    %4291 = vmatpush1.bf16.msra.mxu0 %v3143
    %4292 = vmatprep.subr.bf16.mxu0 %v3152
    %4293 = vmatpush1.bf16.msra.mxu0 %v3151
    %4294 = vmatprep.subr.bf16.mxu0 %v3160
    %4295 = vmatpush1.bf16.msra.mxu0 %v3159
    %4296 = vmatprep.subr.bf16.mxu0 %v3168
    %4297 = vmatpush1.bf16.msra.mxu0 %v3167
    %4298 = vmatprep.subr.bf16.mxu0 %v3176
    %4299 = vmatpush1.bf16.msra.mxu0 %v3175
    %4300 = vmatprep.subr.bf16.mxu0 %v3184
    %4301 = vmatpush1.bf16.msra.mxu0 %v3183
    %4302 = vmatprep.subr.bf16.mxu0 %v3192
    %4303 = vmatpush1.bf16.msra.mxu0 %v3191
    %4304 = vmatprep.mubr.bf16.mxu0 %v972
    %4305 = vmatmul.mubr.bf16.gmra.mrb[0].mxu0 %v971
    %v4306 = vpop.f32.mrb[0].mxu0
    %v4307 = vadd.f32 %v4266, %v4306
    %v4308 = vpop.f32.mrb[0].mxu0
    %v4309 = vadd.f32 %v4268, %v4308
    %v4310 = vpop.f32.mrb[0].mxu0
    %v4311 = vpop.f32.mrb[0].mxu0
    %4312 = vdwg.mxu0
    %4313 = vmatprep.subr.bf16.mxu0 %v3200
    %4314 = vmatpush1.bf16.msra.mxu0 %v3199
    %4315 = vmatprep.subr.bf16.mxu0 %v3208
    %4316 = vmatpush1.bf16.msra.mxu0 %v3207
    %4317 = vmatprep.subr.bf16.mxu0 %v3216
    %4318 = vmatpush1.bf16.msra.mxu0 %v3215
    %4319 = vmatprep.subr.bf16.mxu0 %v3224
    %4320 = vmatpush1.bf16.msra.mxu0 %v3223
    %4321 = vmatprep.subr.bf16.mxu0 %v3232
    %4322 = vmatpush1.bf16.msra.mxu0 %v3231
    %4323 = vmatprep.subr.bf16.mxu0 %v3240
    %4324 = vmatpush1.bf16.msra.mxu0 %v3239
    %4325 = vmatprep.subr.bf16.mxu0 %v3248
    %4326 = vmatpush1.bf16.msra.mxu0 %v3247
    %4327 = vmatprep.subr.bf16.mxu0 %v3256
    %4328 = vmatpush1.bf16.msra.mxu0 %v3255
    %4329 = vmatprep.subr.bf16.mxu0 %v3264
    %4330 = vmatpush1.bf16.msra.mxu0 %v3263
    %4331 = vmatprep.subr.bf16.mxu0 %v3272
    %4332 = vmatpush1.bf16.msra.mxu0 %v3271
    %4333 = vmatprep.subr.bf16.mxu0 %v3280
    %4334 = vmatpush1.bf16.msra.mxu0 %v3279
    %4335 = vmatprep.subr.bf16.mxu0 %v3288
    %4336 = vmatpush1.bf16.msra.mxu0 %v3287
    %4337 = vmatprep.subr.bf16.mxu0 %v3296
    %4338 = vmatpush1.bf16.msra.mxu0 %v3295
    %4339 = vmatprep.subr.bf16.mxu0 %v3304
    %4340 = vmatpush1.bf16.msra.mxu0 %v3303
    %4341 = vmatprep.subr.bf16.mxu0 %v3312
    %4342 = vmatpush1.bf16.msra.mxu0 %v3311
    %4343 = vmatprep.subr.bf16.mxu0 %v3320
    %4344 = vmatpush1.bf16.msra.mxu0 %v3319
    %4345 = vmatprep.mubr.bf16.mxu0 %v974
    %4346 = vmatmul.mubr.bf16.gmra.mrb[0].mxu0 %v973
    %v4347 = vpop.f32.mrb[0].mxu0
    %v4348 = vadd.f32 %v4307, %v4347
    %v4349 = vpop.f32.mrb[0].mxu0
    %v4350 = vadd.f32 %v4309, %v4349
    %v4351 = vpop.f32.mrb[0].mxu0
    %v4352 = vpop.f32.mrb[0].mxu0
    %4353 = vdwg.mxu0
    %4354 = vmatprep.subr.bf16.mxu0 %v3328
    %4355 = vmatpush1.bf16.msra.mxu0 %v3327
    %4356 = vmatprep.subr.bf16.mxu0 %v3336
    %4357 = vmatpush1.bf16.msra.mxu0 %v3335
    %4358 = vmatprep.subr.bf16.mxu0 %v3344
    %4359 = vmatpush1.bf16.msra.mxu0 %v3343
    %4360 = vmatprep.subr.bf16.mxu0 %v3352
    %4361 = vmatpush1.bf16.msra.mxu0 %v3351
    %4362 = vmatprep.subr.bf16.mxu0 %v3360
    %4363 = vmatpush1.bf16.msra.mxu0 %v3359
    %4364 = vmatprep.subr.bf16.mxu0 %v3368
    %4365 = vmatpush1.bf16.msra.mxu0 %v3367
    %4366 = vmatprep.subr.bf16.mxu0 %v3376
    %4367 = vmatpush1.bf16.msra.mxu0 %v3375
    %4368 = vmatprep.subr.bf16.mxu0 %v3384
    %4369 = vmatpush1.bf16.msra.mxu0 %v3383
    %4370 = vmatprep.subr.bf16.mxu0 %v3392
    %4371 = vmatpush1.bf16.msra.mxu0 %v3391
    %4372 = vmatprep.subr.bf16.mxu0 %v3400
    %4373 = vmatpush1.bf16.msra.mxu0 %v3399
    %4374 = vmatprep.subr.bf16.mxu0 %v3408
    %4375 = vmatpush1.bf16.msra.mxu0 %v3407
    %4376 = vmatprep.subr.bf16.mxu0 %v3416
    %4377 = vmatpush1.bf16.msra.mxu0 %v3415
    %4378 = vmatprep.subr.bf16.mxu0 0
    %4379 = vmatpush1.bf16.msra.mxu0 0
    %4380 = vmatprep.subr.bf16.mxu0 0
    %4381 = vmatpush1.bf16.msra.mxu0 0
    %4382 = vmatprep.subr.bf16.mxu0 0
    %4383 = vmatpush1.bf16.msra.mxu0 0
    %4384 = vmatprep.subr.bf16.mxu0 0
    %4385 = vmatpush1.bf16.msra.mxu0 0
    %4386 = vmatprep.mubr.bf16.mxu0 %v3901
    %4387 = vmatmul.mubr.bf16.gmra.mrb[0].mxu0 %v975
    %v4388 = vpop.f32.mrb[0].mxu0
    %v4389 = vadd.f32 %v4348, %v4388
    %v4390 = vpop.f32.mrb[0].mxu0
    %v4391 = vadd.f32 %v4350, %v4390
    %v4392 = vpop.f32.mrb[0].mxu0
    %v4393 = vpop.f32.mrb[0].mxu0
    %4394 = vdwg.mxu0
    %4395 = vmatprep.subr.bf16.mxu0 %v2946
    %4396 = vmatpush1.bf16.msra.mxu0 %v2945
    %4397 = vmatprep.subr.bf16.mxu0 %v2954
    %4398 = vmatpush1.bf16.msra.mxu0 %v2953
    %4399 = vmatprep.subr.bf16.mxu0 %v2962
    %4400 = vmatpush1.bf16.msra.mxu0 %v2961
    %4401 = vmatprep.subr.bf16.mxu0 %v2970
    %4402 = vmatpush1.bf16.msra.mxu0 %v2969
    %4403 = vmatprep.subr.bf16.mxu0 %v2978
    %4404 = vmatpush1.bf16.msra.mxu0 %v2977
    %4405 = vmatprep.subr.bf16.mxu0 %v2986
    %4406 = vmatpush1.bf16.msra.mxu0 %v2985
    %4407 = vmatprep.subr.bf16.mxu0 %v2994
    %4408 = vmatpush1.bf16.msra.mxu0 %v2993
    %4409 = vmatprep.subr.bf16.mxu0 %v3002
    %4410 = vmatpush1.bf16.msra.mxu0 %v3001
    %4411 = vmatprep.subr.bf16.mxu0 %v3010
    %4412 = vmatpush1.bf16.msra.mxu0 %v3009
    %4413 = vmatprep.subr.bf16.mxu0 %v3018
    %4414 = vmatpush1.bf16.msra.mxu0 %v3017
    %4415 = vmatprep.subr.bf16.mxu0 %v3026
    %4416 = vmatpush1.bf16.msra.mxu0 %v3025
    %4417 = vmatprep.subr.bf16.mxu0 %v3034
    %4418 = vmatpush1.bf16.msra.mxu0 %v3033
    %4419 = vmatprep.subr.bf16.mxu0 %v3042
    %4420 = vmatpush1.bf16.msra.mxu0 %v3041
    %4421 = vmatprep.subr.bf16.mxu0 %v3050
    %4422 = vmatpush1.bf16.msra.mxu0 %v3049
    %4423 = vmatprep.subr.bf16.mxu0 %v3058
    %4424 = vmatpush1.bf16.msra.mxu0 %v3057
    %4425 = vmatprep.subr.bf16.mxu0 %v3066
    %4426 = vmatpush1.bf16.msra.mxu0 %v3065
    %4427 = vmatprep.mubr.bf16.mxu0 %v970
    %4428 = vmatmul.mubr.bf16.gmra.mrb[0].mxu0 %v969
    %v4429 = vpop.f32.mrb[0].mxu0
    %v4430 = vadd.f32 %v1486, %v4429
    %v4431 = vpop.f32.mrb[0].mxu0
    %v4432 = vadd.f32 %v1490, %v4431
    %v4433 = vpop.f32.mrb[0].mxu0
    %v4434 = vpop.f32.mrb[0].mxu0
    %4435 = vdwg.mxu0
    %4436 = vmatprep.subr.bf16.mxu0 %v3074
    %4437 = vmatpush1.bf16.msra.mxu0 %v3073
    %4438 = vmatprep.subr.bf16.mxu0 %v3082
    %4439 = vmatpush1.bf16.msra.mxu0 %v3081
    %4440 = vmatprep.subr.bf16.mxu0 %v3090
    %4441 = vmatpush1.bf16.msra.mxu0 %v3089
    %4442 = vmatprep.subr.bf16.mxu0 %v3098
    %4443 = vmatpush1.bf16.msra.mxu0 %v3097
    %4444 = vmatprep.subr.bf16.mxu0 %v3106
    %4445 = vmatpush1.bf16.msra.mxu0 %v3105
    %4446 = vmatprep.subr.bf16.mxu0 %v3114
    %4447 = vmatpush1.bf16.msra.mxu0 %v3113
    %4448 = vmatprep.subr.bf16.mxu0 %v3122
    %4449 = vmatpush1.bf16.msra.mxu0 %v3121
    %4450 = vmatprep.subr.bf16.mxu0 %v3130
    %4451 = vmatpush1.bf16.msra.mxu0 %v3129
    %4452 = vmatprep.subr.bf16.mxu0 %v3138
    %4453 = vmatpush1.bf16.msra.mxu0 %v3137
    %4454 = vmatprep.subr.bf16.mxu0 %v3146
    %4455 = vmatpush1.bf16.msra.mxu0 %v3145
    %4456 = vmatprep.subr.bf16.mxu0 %v3154
    %4457 = vmatpush1.bf16.msra.mxu0 %v3153
    %4458 = vmatprep.subr.bf16.mxu0 %v3162
    %4459 = vmatpush1.bf16.msra.mxu0 %v3161
    %4460 = vmatprep.subr.bf16.mxu0 %v3170
    %4461 = vmatpush1.bf16.msra.mxu0 %v3169
    %4462 = vmatprep.subr.bf16.mxu0 %v3178
    %4463 = vmatpush1.bf16.msra.mxu0 %v3177
    %4464 = vmatprep.subr.bf16.mxu0 %v3186
    %4465 = vmatpush1.bf16.msra.mxu0 %v3185
    %4466 = vmatprep.subr.bf16.mxu0 %v3194
    %4467 = vmatpush1.bf16.msra.mxu0 %v3193
    %4468 = vmatprep.mubr.bf16.mxu0 %v972
    %4469 = vmatmul.mubr.bf16.gmra.mrb[0].mxu0 %v971
    %v4470 = vpop.f32.mrb[0].mxu0
    %v4471 = vadd.f32 %v4430, %v4470
    %v4472 = vpop.f32.mrb[0].mxu0
    %v4473 = vadd.f32 %v4432, %v4472
    %v4474 = vpop.f32.mrb[0].mxu0
    %v4475 = vpop.f32.mrb[0].mxu0
    %4476 = vdwg.mxu0
    %4477 = vmatprep.subr.bf16.mxu0 %v3202
    %4478 = vmatpush1.bf16.msra.mxu0 %v3201
    %4479 = vmatprep.subr.bf16.mxu0 %v3210
    %4480 = vmatpush1.bf16.msra.mxu0 %v3209
    %4481 = vmatprep.subr.bf16.mxu0 %v3218
    %4482 = vmatpush1.bf16.msra.mxu0 %v3217
    %4483 = vmatprep.subr.bf16.mxu0 %v3226
    %4484 = vmatpush1.bf16.msra.mxu0 %v3225
    %4485 = vmatprep.subr.bf16.mxu0 %v3234
    %4486 = vmatpush1.bf16.msra.mxu0 %v3233
    %4487 = vmatprep.subr.bf16.mxu0 %v3242
    %4488 = vmatpush1.bf16.msra.mxu0 %v3241
    %4489 = vmatprep.subr.bf16.mxu0 %v3250
    %4490 = vmatpush1.bf16.msra.mxu0 %v3249
    %4491 = vmatprep.subr.bf16.mxu0 %v3258
    %4492 = vmatpush1.bf16.msra.mxu0 %v3257
    %4493 = vmatprep.subr.bf16.mxu0 %v3266
    %4494 = vmatpush1.bf16.msra.mxu0 %v3265
    %4495 = vmatprep.subr.bf16.mxu0 %v3274
    %4496 = vmatpush1.bf16.msra.mxu0 %v3273
    %4497 = vmatprep.subr.bf16.mxu0 %v3282
    %4498 = vmatpush1.bf16.msra.mxu0 %v3281
    %4499 = vmatprep.subr.bf16.mxu0 %v3290
    %4500 = vmatpush1.bf16.msra.mxu0 %v3289
    %4501 = vmatprep.subr.bf16.mxu0 %v3298
    %4502 = vmatpush1.bf16.msra.mxu0 %v3297
    %4503 = vmatprep.subr.bf16.mxu0 %v3306
    %4504 = vmatpush1.bf16.msra.mxu0 %v3305
    %4505 = vmatprep.subr.bf16.mxu0 %v3314
    %4506 = vmatpush1.bf16.msra.mxu0 %v3313
    %4507 = vmatprep.subr.bf16.mxu0 %v3322
    %4508 = vmatpush1.bf16.msra.mxu0 %v3321
    %4509 = vmatprep.mubr.bf16.mxu0 %v974
    %4510 = vmatmul.mubr.bf16.gmra.mrb[0].mxu0 %v973
    %v4511 = vpop.f32.mrb[0].mxu0
    %v4512 = vadd.f32 %v4471, %v4511
    %v4513 = vpop.f32.mrb[0].mxu0
    %v4514 = vadd.f32 %v4473, %v4513
    %v4515 = vpop.f32.mrb[0].mxu0
    %v4516 = vpop.f32.mrb[0].mxu0
    %4517 = vdwg.mxu0
    %4518 = vmatprep.subr.bf16.mxu0 %v3330
    %4519 = vmatpush1.bf16.msra.mxu0 %v3329
    %4520 = vmatprep.subr.bf16.mxu0 %v3338
    %4521 = vmatpush1.bf16.msra.mxu0 %v3337
    %4522 = vmatprep.subr.bf16.mxu0 %v3346
    %4523 = vmatpush1.bf16.msra.mxu0 %v3345
    %4524 = vmatprep.subr.bf16.mxu0 %v3354
    %4525 = vmatpush1.bf16.msra.mxu0 %v3353
    %4526 = vmatprep.subr.bf16.mxu0 %v3362
    %4527 = vmatpush1.bf16.msra.mxu0 %v3361
    %4528 = vmatprep.subr.bf16.mxu0 %v3370
    %4529 = vmatpush1.bf16.msra.mxu0 %v3369
    %4530 = vmatprep.subr.bf16.mxu0 %v3378
    %4531 = vmatpush1.bf16.msra.mxu0 %v3377
    %4532 = vmatprep.subr.bf16.mxu0 %v3386
    %4533 = vmatpush1.bf16.msra.mxu0 %v3385
    %4534 = vmatprep.subr.bf16.mxu0 %v3394
    %4535 = vmatpush1.bf16.msra.mxu0 %v3393
    %4536 = vmatprep.subr.bf16.mxu0 %v3402
    %4537 = vmatpush1.bf16.msra.mxu0 %v3401
    %4538 = vmatprep.subr.bf16.mxu0 %v3410
    %4539 = vmatpush1.bf16.msra.mxu0 %v3409
    %4540 = vmatprep.subr.bf16.mxu0 %v3418
    %4541 = vmatpush1.bf16.msra.mxu0 %v3417
    %4542 = vmatprep.subr.bf16.mxu0 0
    %4543 = vmatpush1.bf16.msra.mxu0 0
    %4544 = vmatprep.subr.bf16.mxu0 0
    %4545 = vmatpush1.bf16.msra.mxu0 0
    %4546 = vmatprep.subr.bf16.mxu0 0
    %4547 = vmatpush1.bf16.msra.mxu0 0
    %4548 = vmatprep.subr.bf16.mxu0 0
    %4549 = vmatpush1.bf16.msra.mxu0 0
    %4550 = vmatprep.mubr.bf16.mxu0 %v3901
    %4551 = vmatmul.mubr.bf16.gmra.mrb[0].mxu0 %v975
    %v4552 = vpop.f32.mrb[0].mxu0
    %v4553 = vadd.f32 %v4512, %v4552
    %v4554 = vpop.f32.mrb[0].mxu0
    %v4555 = vadd.f32 %v4514, %v4554
    %v4556 = vpop.f32.mrb[0].mxu0
    %v4557 = vpop.f32.mrb[0].mxu0
    %4558 = vdwg.mxu0
    %v4559 = vxor.u32 %v4061, 2147483648
    %v4560 = vxor.u32 %v4063, 2147483648
    %v4561 = vxor.u32 %v4225, 2147483648
    %v4562 = vxor.u32 %v4227, 2147483648
    %v4563 = vxor.u32 %v4389, 2147483648
    %v4564 = vxor.u32 %v4391, 2147483648
    %v4565 = vxor.u32 %v4553, 2147483648
    %v4566 = vxor.u32 %v4555, 2147483648
    %v4567 = vmul.f32 %v4559, 1.442695
    %v4568 = vpow.pop %v4567
    %v4569 = vmul.f32 %v4560, 1.442695
    %v4570 = vpow.pop %v4569
    %v4571 = vmul.f32 %v4561, 1.442695
    %v4572 = vpow.pop %v4571
    %v4573 = vmul.f32 %v4562, 1.442695
    %v4574 = vpow.pop %v4573
    %v4575 = vmul.f32 %v4563, 1.442695
    %v4576 = vpow.pop %v4575
    %v4577 = vmul.f32 %v4564, 1.442695
    %v4578 = vpow.pop %v4577
    %v4579 = vmul.f32 %v4565, 1.442695
    %v4580 = vpow.pop %v4579
    %v4581 = vmul.f32 %v4566, 1.442695
    %v4582 = vpow.pop %v4581
    %v4583 = vadd.f32 %v4568, 1.0
    %v4584 = vadd.f32 %v4570, 1.0
    %v4585 = vadd.f32 %v4572, 1.0
    %v4586 = vadd.f32 %v4574, 1.0
    %v4587 = vadd.f32 %v4576, 1.0
    %v4588 = vadd.f32 %v4578, 1.0
    %v4589 = vadd.f32 %v4580, 1.0
    %v4590 = vadd.f32 %v4582, 1.0
    %v4591 = vrcp.pop %v4583
    %v4592 = vmul.f32 1.0, %v4591
    %v4593 = vrcp.pop %v4584
    %v4594 = vmul.f32 1.0, %v4593
    %v4595 = vrcp.pop %v4585
    %v4596 = vmul.f32 1.0, %v4595
    %v4597 = vrcp.pop %v4586
    %v4598 = vmul.f32 1.0, %v4597
    %v4599 = vrcp.pop %v4587
    %v4600 = vmul.f32 1.0, %v4599
    %v4601 = vrcp.pop %v4588
    %v4602 = vmul.f32 1.0, %v4601
    %v4603 = vrcp.pop %v4589
    %v4604 = vmul.f32 1.0, %v4603
    %v4605 = vrcp.pop %v4590
    %v4606 = vmul.f32 1.0, %v4605
    %v4607 = vmul.f32 %v4592, %v840
    %v4608 = vmul.f32 %v4594, %v842
    %v4609 = vmul.f32 %v4596, %v881
    %v4610 = vmul.f32 %v4598, %v883
    %v4611 = vmul.f32 %v4600, %v922
    %v4612 = vmul.f32 %v4602, %v924
    %v4613 = vmul.f32 %v4604, %v963
    %v4614 = vmul.f32 %v4606, %v965
    %v4615 = vpack.c.bf16 %v4607, %v4607
    %v4616 = vpack.c.bf16 %v4608, %v4608
    %v4617 = vpack.c.bf16 %v4609, %v4609
    %v4618 = vpack.c.bf16 %v4610, %v4610
    %v4619 = vpack.c.bf16 %v4611, %v4611
    %v4620 = vpack.c.bf16 %v4612, %v4612
    %v4621 = vpack.c.bf16 %v4613, %v4613
    %v4622 = vpack.c.bf16 %v4614, %v4614
    %v4623 = vld [vmem:[#allocation7] sm:$0xff]
    %v4624 = vld [vmem:[#allocation7 + $0x8] sm:$0xff]
    %v4625 = vld [vmem:[#allocation7 + $0x10] sm:$0xff]
    %v4626 = vld [vmem:[#allocation7 + $0x18] sm:$0xff]
    %v4627 = vld [vmem:[#allocation7 + $0x20] sm:$0xff]
    %v4628 = vld [vmem:[#allocation7 + $0x28] sm:$0xff]
    %v4629 = vld [vmem:[#allocation7 + $0x30] sm:$0xff]
    %v4630 = vld [vmem:[#allocation7 + $0x38] sm:$0xff]
    %v4631 = vld [vmem:[#allocation7 + $0x40] sm:$0xff]
    %v4632 = vld [vmem:[#allocation7 + $0x48] sm:$0xff]
    %v4633 = vld [vmem:[#allocation7 + $0x50] sm:$0xff]
    %v4634 = vld [vmem:[#allocation7 + $0x58] sm:$0xff]
    %v4635 = vld [vmem:[#allocation7 + $0x60] sm:$0xff]
    %v4636 = vld [vmem:[#allocation7 + $0x68] sm:$0xff]
    %v4637 = vld [vmem:[#allocation7 + $0x70] sm:$0xff]
    %v4638 = vld [vmem:[#allocation7 + $0x78] sm:$0xff]
    %v4639 = vld [vmem:[#allocation7 + $0x80] sm:$0xff]
    %v4640 = vld [vmem:[#allocation7 + $0x88] sm:$0xff]
    %v4641 = vld [vmem:[#allocation7 + $0x90] sm:$0xff]
    %v4642 = vld [vmem:[#allocation7 + $0x98] sm:$0xff]
    %v4643 = vld [vmem:[#allocation7 + $0xa0] sm:$0xff]
    %v4644 = vld [vmem:[#allocation7 + $0xa8] sm:$0xff]
    %v4645 = vld [vmem:[#allocation7 + $0xb0] sm:$0xff]
    %v4646 = vld [vmem:[#allocation7 + $0xb8] sm:$0xff]
    %v4647 = vld [vmem:[#allocation7 + $0xc0] sm:$0xff]
    %v4648 = vld [vmem:[#allocation7 + $0xc8] sm:$0xff]
    %v4649 = vld [vmem:[#allocation7 + $0xd0] sm:$0xff]
    %v4650 = vld [vmem:[#allocation7 + $0xd8] sm:$0xff]
    %v4651 = vld [vmem:[#allocation7 + $0xe0] sm:$0xff]
    %v4652 = vld [vmem:[#allocation7 + $0xe8] sm:$0xff]
    %v4653 = vld [vmem:[#allocation7 + $0xf0] sm:$0xff]
    %v4654 = vld [vmem:[#allocation7 + $0xf8] sm:$0xff]
    %v4655 = vld [vmem:[#allocation7 + $0x100] sm:$0xff]
    %v4656 = vld [vmem:[#allocation7 + $0x108] sm:$0xff]
    %v4657 = vld [vmem:[#allocation7 + $0x110] sm:$0xff]
    %v4658 = vld [vmem:[#allocation7 + $0x118] sm:$0xff]
    %v4659 = vld [vmem:[#allocation7 + $0x120] sm:$0xff]
    %v4660 = vld [vmem:[#allocation7 + $0x128] sm:$0xff]
    %v4661 = vld [vmem:[#allocation7 + $0x130] sm:$0xff]
    %v4662 = vld [vmem:[#allocation7 + $0x138] sm:$0xff]
    %v4663 = vld [vmem:[#allocation7 + $0x140] sm:$0xff]
    %v4664 = vld [vmem:[#allocation7 + $0x148] sm:$0xff]
    %v4665 = vld [vmem:[#allocation7 + $0x150] sm:$0xff]
    %v4666 = vld [vmem:[#allocation7 + $0x158] sm:$0xff]
    %v4667 = vld [vmem:[#allocation7 + $0x160] sm:$0xff]
    %v4668 = vld [vmem:[#allocation7 + $0x168] sm:$0xff]
    %v4669 = vld [vmem:[#allocation7 + $0x170] sm:$0xff]
    %v4670 = vld [vmem:[#allocation7 + $0x178] sm:$0xff]
    %v4671 = vld [vmem:[#allocation7 + $0x180] sm:$0xff]
    %v4672 = vld [vmem:[#allocation7 + $0x188] sm:$0xff]
    %v4673 = vld [vmem:[#allocation7 + $0x190] sm:$0xff]
    %v4674 = vld [vmem:[#allocation7 + $0x198] sm:$0xff]
    %v4675 = vld [vmem:[#allocation7 + $0x1a0] sm:$0xff]
    %v4676 = vld [vmem:[#allocation7 + $0x1a8] sm:$0xff]
    %v4677 = vld [vmem:[#allocation7 + $0x1b0] sm:$0xff]
    %v4678 = vld [vmem:[#allocation7 + $0x1b8] sm:$0xff]
    %v4679 = vld [vmem:[#allocation7 + $0x1c0] sm:$0xff]
    %v4680 = vld [vmem:[#allocation7 + $0x1c8] sm:$0xff]
    %v4681 = vld [vmem:[#allocation7 + $0x1d0] sm:$0xff]
    %v4682 = vld [vmem:[#allocation7 + $0x1d8] sm:$0xff]
    %v4683 = vld [vmem:[#allocation7 + $0x1e0] sm:$0xff]
    %v4684 = vld [vmem:[#allocation7 + $0x1e8] sm:$0xff]
    %v4685 = vld [vmem:[#allocation7 + $0x1f0] sm:$0xff]
    %v4686 = vld [vmem:[#allocation7 + $0x1f8] sm:$0xff]
    %v4687 = vld [vmem:[#allocation7 + $0x200] sm:$0xff]
    %v4688 = vld [vmem:[#allocation7 + $0x208] sm:$0xff]
    %v4689 = vld [vmem:[#allocation7 + $0x210] sm:$0xff]
    %v4690 = vld [vmem:[#allocation7 + $0x218] sm:$0xff]
    %v4691 = vld [vmem:[#allocation7 + $0x220] sm:$0xff]
    %v4692 = vld [vmem:[#allocation7 + $0x228] sm:$0xff]
    %v4693 = vld [vmem:[#allocation7 + $0x230] sm:$0xff]
    %v4694 = vld [vmem:[#allocation7 + $0x238] sm:$0xff]
    %v4695 = vld [vmem:[#allocation7 + $0x240] sm:$0xff]
    %v4696 = vld [vmem:[#allocation7 + $0x248] sm:$0xff]
    %v4697 = vld [vmem:[#allocation7 + $0x250] sm:$0xff]
    %v4698 = vld [vmem:[#allocation7 + $0x258] sm:$0xff]
    %v4699 = vld [vmem:[#allocation7 + $0x260] sm:$0xff]
    %v4700 = vld [vmem:[#allocation7 + $0x268] sm:$0xff]
    %v4701 = vld [vmem:[#allocation7 + $0x270] sm:$0xff]
    %v4702 = vld [vmem:[#allocation7 + $0x278] sm:$0xff]
    %v4703 = vld [vmem:[#allocation7 + $0x280] sm:$0xff]
    %v4704 = vld [vmem:[#allocation7 + $0x288] sm:$0xff]
    %v4705 = vld [vmem:[#allocation7 + $0x290] sm:$0xff]
    %v4706 = vld [vmem:[#allocation7 + $0x298] sm:$0xff]
    %v4707 = vld [vmem:[#allocation7 + $0x2a0] sm:$0xff]
    %v4708 = vld [vmem:[#allocation7 + $0x2a8] sm:$0xff]
    %v4709 = vld [vmem:[#allocation7 + $0x2b0] sm:$0xff]
    %v4710 = vld [vmem:[#allocation7 + $0x2b8] sm:$0xff]
    %v4711 = vld [vmem:[#allocation7 + $0x2c0] sm:$0xff]
    %v4712 = vld [vmem:[#allocation7 + $0x2c8] sm:$0xff]
    %v4713 = vld [vmem:[#allocation7 + $0x2d0] sm:$0xff]
    %v4714 = vld [vmem:[#allocation7 + $0x2d8] sm:$0xff]
    %v4715 = vld [vmem:[#allocation7 + $0x2e0] sm:$0xff]
    %v4716 = vld [vmem:[#allocation7 + $0x2e8] sm:$0xff]
    %v4717 = vld [vmem:[#allocation7 + $0x2f0] sm:$0xff]
    %v4718 = vld [vmem:[#allocation7 + $0x2f8] sm:$0xff]
    %v4719 = vld [vmem:[#allocation7 + $0x300] sm:$0xff]
    %v4720 = vld [vmem:[#allocation7 + $0x308] sm:$0xff]
    %v4721 = vld [vmem:[#allocation7 + $0x310] sm:$0xff]
    %v4722 = vld [vmem:[#allocation7 + $0x318] sm:$0xff]
    %v4723 = vld [vmem:[#allocation7 + $0x320] sm:$0xff]
    %v4724 = vld [vmem:[#allocation7 + $0x328] sm:$0xff]
    %v4725 = vld [vmem:[#allocation7 + $0x330] sm:$0xff]
    %v4726 = vld [vmem:[#allocation7 + $0x338] sm:$0xff]
    %v4727 = vld [vmem:[#allocation7 + $0x340] sm:$0xff]
    %v4728 = vld [vmem:[#allocation7 + $0x348] sm:$0xff]
    %v4729 = vld [vmem:[#allocation7 + $0x350] sm:$0xff]
    %v4730 = vld [vmem:[#allocation7 + $0x358] sm:$0xff]
    %v4731 = vld [vmem:[#allocation7 + $0x360] sm:$0xff]
    %v4732 = vld [vmem:[#allocation7 + $0x368] sm:$0xff]
    %v4733 = vld [vmem:[#allocation7 + $0x370] sm:$0xff]
    %v4734 = vld [vmem:[#allocation7 + $0x378] sm:$0xff]
    %v4735 = vld [vmem:[#allocation7 + $0x380] sm:$0xff]
    %v4736 = vld [vmem:[#allocation7 + $0x388] sm:$0xff]
    %v4737 = vld [vmem:[#allocation7 + $0x390] sm:$0xff]
    %v4738 = vld [vmem:[#allocation7 + $0x398] sm:$0xff]
    %v4739 = vld [vmem:[#allocation7 + $0x3a0] sm:$0xff]
    %v4740 = vld [vmem:[#allocation7 + $0x3a8] sm:$0xff]
    %v4741 = vld [vmem:[#allocation7 + $0x3b0] sm:$0xff]
    %v4742 = vld [vmem:[#allocation7 + $0x3b8] sm:$0xff]
    %v4863 = vunpack.c.l.b16 %v4623
    %v4864 = vunpack.c.h.b16 %v4623
    %v4865 = vunpack.c.l.b16 %v4624
    %v4866 = vunpack.c.h.b16 %v4624
    %v4867 = vunpack.c.l.b16 %v4625
    %v4868 = vunpack.c.h.b16 %v4625
    %v4869 = vunpack.c.l.b16 %v4626
    %v4870 = vunpack.c.h.b16 %v4626
    %v4871 = vunpack.c.l.b16 %v4627
    %v4872 = vunpack.c.h.b16 %v4627
    %v4873 = vunpack.c.l.b16 %v4628
    %v4874 = vunpack.c.h.b16 %v4628
    %v4875 = vunpack.c.l.b16 %v4629
    %v4876 = vunpack.c.h.b16 %v4629
    %v4877 = vunpack.c.l.b16 %v4630
    %v4878 = vunpack.c.h.b16 %v4630
    %v4879 = vunpack.c.l.b16 %v4631
    %v4880 = vunpack.c.h.b16 %v4631
    %v4881 = vunpack.c.l.b16 %v4632
    %v4882 = vunpack.c.h.b16 %v4632
    %v4883 = vunpack.c.l.b16 %v4633
    %v4884 = vunpack.c.h.b16 %v4633
    %v4885 = vunpack.c.l.b16 %v4634
    %v4886 = vunpack.c.h.b16 %v4634
    %v4887 = vunpack.c.l.b16 %v4635
    %v4888 = vunpack.c.h.b16 %v4635
    %v4889 = vunpack.c.l.b16 %v4636
    %v4890 = vunpack.c.h.b16 %v4636
    %v4891 = vunpack.c.l.b16 %v4637
    %v4892 = vunpack.c.h.b16 %v4637
    %v4893 = vunpack.c.l.b16 %v4638
    %v4894 = vunpack.c.h.b16 %v4638
    %v4895 = vunpack.c.l.b16 %v4639
    %v4896 = vunpack.c.h.b16 %v4639
    %v4897 = vunpack.c.l.b16 %v4640
    %v4898 = vunpack.c.h.b16 %v4640
    %v4899 = vunpack.c.l.b16 %v4641
    %v4900 = vunpack.c.h.b16 %v4641
    %v4901 = vunpack.c.l.b16 %v4642
    %v4902 = vunpack.c.h.b16 %v4642
    %v4903 = vunpack.c.l.b16 %v4643
    %v4904 = vunpack.c.h.b16 %v4643
    %v4905 = vunpack.c.l.b16 %v4644
    %v4906 = vunpack.c.h.b16 %v4644
    %v4907 = vunpack.c.l.b16 %v4645
    %v4908 = vunpack.c.h.b16 %v4645
    %v4909 = vunpack.c.l.b16 %v4646
    %v4910 = vunpack.c.h.b16 %v4646
    %v4911 = vunpack.c.l.b16 %v4647
    %v4912 = vunpack.c.h.b16 %v4647
    %v4913 = vunpack.c.l.b16 %v4648
    %v4914 = vunpack.c.h.b16 %v4648
    %v4915 = vunpack.c.l.b16 %v4649
    %v4916 = vunpack.c.h.b16 %v4649
    %v4917 = vunpack.c.l.b16 %v4650
    %v4918 = vunpack.c.h.b16 %v4650
    %v4919 = vunpack.c.l.b16 %v4651
    %v4920 = vunpack.c.h.b16 %v4651
    %v4921 = vunpack.c.l.b16 %v4652
    %v4922 = vunpack.c.h.b16 %v4652
    %v4923 = vunpack.c.l.b16 %v4653
    %v4924 = vunpack.c.h.b16 %v4653
    %v4925 = vunpack.c.l.b16 %v4654
    %v4926 = vunpack.c.h.b16 %v4654
    %v4927 = vunpack.c.l.b16 %v4655
    %v4928 = vunpack.c.h.b16 %v4655
    %v4929 = vunpack.c.l.b16 %v4656
    %v4930 = vunpack.c.h.b16 %v4656
    %v4931 = vunpack.c.l.b16 %v4657
    %v4932 = vunpack.c.h.b16 %v4657
    %v4933 = vunpack.c.l.b16 %v4658
    %v4934 = vunpack.c.h.b16 %v4658
    %v4935 = vunpack.c.l.b16 %v4659
    %v4936 = vunpack.c.h.b16 %v4659
    %v4937 = vunpack.c.l.b16 %v4660
    %v4938 = vunpack.c.h.b16 %v4660
    %v4939 = vunpack.c.l.b16 %v4661
    %v4940 = vunpack.c.h.b16 %v4661
    %v4941 = vunpack.c.l.b16 %v4662
    %v4942 = vunpack.c.h.b16 %v4662
    %v4943 = vunpack.c.l.b16 %v4663
    %v4944 = vunpack.c.h.b16 %v4663
    %v4945 = vunpack.c.l.b16 %v4664
    %v4946 = vunpack.c.h.b16 %v4664
    %v4947 = vunpack.c.l.b16 %v4665
    %v4948 = vunpack.c.h.b16 %v4665
    %v4949 = vunpack.c.l.b16 %v4666
    %v4950 = vunpack.c.h.b16 %v4666
    %v4951 = vunpack.c.l.b16 %v4667
    %v4952 = vunpack.c.h.b16 %v4667
    %v4953 = vunpack.c.l.b16 %v4668
    %v4954 = vunpack.c.h.b16 %v4668
    %v4955 = vunpack.c.l.b16 %v4669
    %v4956 = vunpack.c.h.b16 %v4669
    %v4957 = vunpack.c.l.b16 %v4670
    %v4958 = vunpack.c.h.b16 %v4670
    %v4959 = vunpack.c.l.b16 %v4671
    %v4960 = vunpack.c.h.b16 %v4671
    %v4961 = vunpack.c.l.b16 %v4672
    %v4962 = vunpack.c.h.b16 %v4672
    %v4963 = vunpack.c.l.b16 %v4673
    %v4964 = vunpack.c.h.b16 %v4673
    %v4965 = vunpack.c.l.b16 %v4674
    %v4966 = vunpack.c.h.b16 %v4674
    %v4967 = vunpack.c.l.b16 %v4675
    %v4968 = vunpack.c.h.b16 %v4675
    %v4969 = vunpack.c.l.b16 %v4676
    %v4970 = vunpack.c.h.b16 %v4676
    %v4971 = vunpack.c.l.b16 %v4677
    %v4972 = vunpack.c.h.b16 %v4677
    %v4973 = vunpack.c.l.b16 %v4678
    %v4974 = vunpack.c.h.b16 %v4678
    %v4975 = vunpack.c.l.b16 %v4679
    %v4976 = vunpack.c.h.b16 %v4679
    %v4977 = vunpack.c.l.b16 %v4680
    %v4978 = vunpack.c.h.b16 %v4680
    %v4979 = vunpack.c.l.b16 %v4681
    %v4980 = vunpack.c.h.b16 %v4681
    %v4981 = vunpack.c.l.b16 %v4682
    %v4982 = vunpack.c.h.b16 %v4682
    %v4983 = vunpack.c.l.b16 %v4683
    %v4984 = vunpack.c.h.b16 %v4683
    %v4985 = vunpack.c.l.b16 %v4684
    %v4986 = vunpack.c.h.b16 %v4684
    %v4987 = vunpack.c.l.b16 %v4685
    %v4988 = vunpack.c.h.b16 %v4685
    %v4989 = vunpack.c.l.b16 %v4686
    %v4990 = vunpack.c.h.b16 %v4686
    %v4991 = vunpack.c.l.b16 %v4687
    %v4992 = vunpack.c.h.b16 %v4687
    %v4993 = vunpack.c.l.b16 %v4688
    %v4994 = vunpack.c.h.b16 %v4688
    %v4995 = vunpack.c.l.b16 %v4689
    %v4996 = vunpack.c.h.b16 %v4689
    %v4997 = vunpack.c.l.b16 %v4690
    %v4998 = vunpack.c.h.b16 %v4690
    %v4999 = vunpack.c.l.b16 %v4691
    %v5000 = vunpack.c.h.b16 %v4691
    %v5001 = vunpack.c.l.b16 %v4692
    %v5002 = vunpack.c.h.b16 %v4692
    %v5003 = vunpack.c.l.b16 %v4693
    %v5004 = vunpack.c.h.b16 %v4693
    %v5005 = vunpack.c.l.b16 %v4694
    %v5006 = vunpack.c.h.b16 %v4694
    %v5007 = vunpack.c.l.b16 %v4695
    %v5008 = vunpack.c.h.b16 %v4695
    %v5009 = vunpack.c.l.b16 %v4696
    %v5010 = vunpack.c.h.b16 %v4696
    %v5011 = vunpack.c.l.b16 %v4697
    %v5012 = vunpack.c.h.b16 %v4697
    %v5013 = vunpack.c.l.b16 %v4698
    %v5014 = vunpack.c.h.b16 %v4698
    %v5015 = vunpack.c.l.b16 %v4699
    %v5016 = vunpack.c.h.b16 %v4699
    %v5017 = vunpack.c.l.b16 %v4700
    %v5018 = vunpack.c.h.b16 %v4700
    %v5019 = vunpack.c.l.b16 %v4701
    %v5020 = vunpack.c.h.b16 %v4701
    %v5021 = vunpack.c.l.b16 %v4702
    %v5022 = vunpack.c.h.b16 %v4702
    %v5023 = vunpack.c.l.b16 %v4703
    %v5024 = vunpack.c.h.b16 %v4703
    %v5025 = vunpack.c.l.b16 %v4704
    %v5026 = vunpack.c.h.b16 %v4704
    %v5027 = vunpack.c.l.b16 %v4705
    %v5028 = vunpack.c.h.b16 %v4705
    %v5029 = vunpack.c.l.b16 %v4706
    %v5030 = vunpack.c.h.b16 %v4706
    %v5031 = vunpack.c.l.b16 %v4707
    %v5032 = vunpack.c.h.b16 %v4707
    %v5033 = vunpack.c.l.b16 %v4708
    %v5034 = vunpack.c.h.b16 %v4708
    %v5035 = vunpack.c.l.b16 %v4709
    %v5036 = vunpack.c.h.b16 %v4709
    %v5037 = vunpack.c.l.b16 %v4710
    %v5038 = vunpack.c.h.b16 %v4710
    %v5039 = vunpack.c.l.b16 %v4711
    %v5040 = vunpack.c.h.b16 %v4711
    %v5041 = vunpack.c.l.b16 %v4712
    %v5042 = vunpack.c.h.b16 %v4712
    %v5043 = vunpack.c.l.b16 %v4713
    %v5044 = vunpack.c.h.b16 %v4713
    %v5045 = vunpack.c.l.b16 %v4714
    %v5046 = vunpack.c.h.b16 %v4714
    %v5047 = vunpack.c.l.b16 %v4715
    %v5048 = vunpack.c.h.b16 %v4715
    %v5049 = vunpack.c.l.b16 %v4716
    %v5050 = vunpack.c.h.b16 %v4716
    %v5051 = vunpack.c.l.b16 %v4717
    %v5052 = vunpack.c.h.b16 %v4717
    %v5053 = vunpack.c.l.b16 %v4718
    %v5054 = vunpack.c.h.b16 %v4718
    %v5055 = vunpack.c.l.b16 %v4719
    %v5056 = vunpack.c.h.b16 %v4719
    %v5057 = vunpack.c.l.b16 %v4720
    %v5058 = vunpack.c.h.b16 %v4720
    %v5059 = vunpack.c.l.b16 %v4721
    %v5060 = vunpack.c.h.b16 %v4721
    %v5061 = vunpack.c.l.b16 %v4722
    %v5062 = vunpack.c.h.b16 %v4722
    %v5063 = vunpack.c.l.b16 %v4723
    %v5064 = vunpack.c.h.b16 %v4723
    %v5065 = vunpack.c.l.b16 %v4724
    %v5066 = vunpack.c.h.b16 %v4724
    %v5067 = vunpack.c.l.b16 %v4725
    %v5068 = vunpack.c.h.b16 %v4725
    %v5069 = vunpack.c.l.b16 %v4726
    %v5070 = vunpack.c.h.b16 %v4726
    %v5071 = vunpack.c.l.b16 %v4727
    %v5072 = vunpack.c.h.b16 %v4727
    %v5073 = vunpack.c.l.b16 %v4728
    %v5074 = vunpack.c.h.b16 %v4728
    %v5075 = vunpack.c.l.b16 %v4729
    %v5076 = vunpack.c.h.b16 %v4729
    %v5077 = vunpack.c.l.b16 %v4730
    %v5078 = vunpack.c.h.b16 %v4730
    %v5079 = vunpack.c.l.b16 %v4731
    %v5080 = vunpack.c.h.b16 %v4731
    %v5081 = vunpack.c.l.b16 %v4732
    %v5082 = vunpack.c.h.b16 %v4732
    %v5083 = vunpack.c.l.b16 %v4733
    %v5084 = vunpack.c.h.b16 %v4733
    %v5085 = vunpack.c.l.b16 %v4734
    %v5086 = vunpack.c.h.b16 %v4734
    %v5087 = vunpack.c.l.b16 %v4735
    %v5088 = vunpack.c.h.b16 %v4735
    %v5089 = vunpack.c.l.b16 %v4736
    %v5090 = vunpack.c.h.b16 %v4736
    %v5091 = vunpack.c.l.b16 %v4737
    %v5092 = vunpack.c.h.b16 %v4737
    %v5093 = vunpack.c.l.b16 %v4738
    %v5094 = vunpack.c.h.b16 %v4738
    %v5095 = vunpack.c.l.b16 %v4739
    %v5096 = vunpack.c.h.b16 %v4739
    %v5097 = vunpack.c.l.b16 %v4740
    %v5098 = vunpack.c.h.b16 %v4740
    %v5099 = vunpack.c.l.b16 %v4741
    %v5100 = vunpack.c.h.b16 %v4741
    %v5101 = vunpack.c.l.b16 %v4742
    %v5102 = vunpack.c.h.b16 %v4742
    %v5103 = vpack.c.b16 %v4865, %v4863
    %v5104 = vpack.c.b16 %v4866, %v4864
    %v5105 = vpack.c.b16 %v4869, %v4867
    %v5106 = vpack.c.b16 %v4870, %v4868
    %v5107 = vpack.c.b16 %v4873, %v4871
    %v5108 = vpack.c.b16 %v4874, %v4872
    %v5109 = vpack.c.b16 %v4877, %v4875
    %v5110 = vpack.c.b16 %v4878, %v4876
    %v5111 = vpack.c.b16 %v4881, %v4879
    %v5112 = vpack.c.b16 %v4882, %v4880
    %v5113 = vpack.c.b16 %v4885, %v4883
    %v5114 = vpack.c.b16 %v4886, %v4884
    %v5115 = vpack.c.b16 %v4889, %v4887
    %v5116 = vpack.c.b16 %v4890, %v4888
    %v5117 = vpack.c.b16 %v4893, %v4891
    %v5118 = vpack.c.b16 %v4894, %v4892
    %v5119 = vpack.c.b16 %v4897, %v4895
    %v5120 = vpack.c.b16 %v4898, %v4896
    %v5121 = vpack.c.b16 %v4901, %v4899
    %v5122 = vpack.c.b16 %v4902, %v4900
    %v5123 = vpack.c.b16 %v4905, %v4903
    %v5124 = vpack.c.b16 %v4906, %v4904
    %v5125 = vpack.c.b16 %v4909, %v4907
    %v5126 = vpack.c.b16 %v4910, %v4908
    %v5127 = vpack.c.b16 %v4913, %v4911
    %v5128 = vpack.c.b16 %v4914, %v4912
    %v5129 = vpack.c.b16 %v4917, %v4915
    %v5130 = vpack.c.b16 %v4918, %v4916
    %v5131 = vpack.c.b16 %v4921, %v4919
    %v5132 = vpack.c.b16 %v4922, %v4920
    %v5133 = vpack.c.b16 %v4925, %v4923
    %v5134 = vpack.c.b16 %v4926, %v4924
    %v5135 = vpack.c.b16 %v4929, %v4927
    %v5136 = vpack.c.b16 %v4930, %v4928
    %v5137 = vpack.c.b16 %v4933, %v4931
    %v5138 = vpack.c.b16 %v4934, %v4932
    %v5139 = vpack.c.b16 %v4937, %v4935
    %v5140 = vpack.c.b16 %v4938, %v4936
    %v5141 = vpack.c.b16 %v4941, %v4939
    %v5142 = vpack.c.b16 %v4942, %v4940
    %v5143 = vpack.c.b16 %v4945, %v4943
    %v5144 = vpack.c.b16 %v4946, %v4944
    %v5145 = vpack.c.b16 %v4949, %v4947
    %v5146 = vpack.c.b16 %v4950, %v4948
    %v5147 = vpack.c.b16 %v4953, %v4951
    %v5148 = vpack.c.b16 %v4954, %v4952
    %v5149 = vpack.c.b16 %v4957, %v4955
    %v5150 = vpack.c.b16 %v4958, %v4956
    %v5151 = vpack.c.b16 %v4961, %v4959
    %v5152 = vpack.c.b16 %v4962, %v4960
    %v5153 = vpack.c.b16 %v4965, %v4963
    %v5154 = vpack.c.b16 %v4966, %v4964
    %v5155 = vpack.c.b16 %v4969, %v4967
    %v5156 = vpack.c.b16 %v4970, %v4968
    %v5157 = vpack.c.b16 %v4973, %v4971
    %v5158 = vpack.c.b16 %v4974, %v4972
    %v5159 = vpack.c.b16 %v4977, %v4975
    %v5160 = vpack.c.b16 %v4978, %v4976
    %v5161 = vpack.c.b16 %v4981, %v4979
    %v5162 = vpack.c.b16 %v4982, %v4980
    %v5163 = vpack.c.b16 %v4985, %v4983
    %v5164 = vpack.c.b16 %v4986, %v4984
    %v5165 = vpack.c.b16 %v4989, %v4987
    %v5166 = vpack.c.b16 %v4990, %v4988
    %v5167 = vpack.c.b16 %v4993, %v4991
    %v5168 = vpack.c.b16 %v4994, %v4992
    %v5169 = vpack.c.b16 %v4997, %v4995
    %v5170 = vpack.c.b16 %v4998, %v4996
    %v5171 = vpack.c.b16 %v5001, %v4999
    %v5172 = vpack.c.b16 %v5002, %v5000
    %v5173 = vpack.c.b16 %v5005, %v5003
    %v5174 = vpack.c.b16 %v5006, %v5004
    %v5175 = vpack.c.b16 %v5009, %v5007
    %v5176 = vpack.c.b16 %v5010, %v5008
    %v5177 = vpack.c.b16 %v5013, %v5011
    %v5178 = vpack.c.b16 %v5014, %v5012
    %v5179 = vpack.c.b16 %v5017, %v5015
    %v5180 = vpack.c.b16 %v5018, %v5016
    %v5181 = vpack.c.b16 %v5021, %v5019
    %v5182 = vpack.c.b16 %v5022, %v5020
    %v5183 = vpack.c.b16 %v5025, %v5023
    %v5184 = vpack.c.b16 %v5026, %v5024
    %v5185 = vpack.c.b16 %v5029, %v5027
    %v5186 = vpack.c.b16 %v5030, %v5028
    %v5187 = vpack.c.b16 %v5033, %v5031
    %v5188 = vpack.c.b16 %v5034, %v5032
    %v5189 = vpack.c.b16 %v5037, %v5035
    %v5190 = vpack.c.b16 %v5038, %v5036
    %v5191 = vpack.c.b16 %v5041, %v5039
    %v5192 = vpack.c.b16 %v5042, %v5040
    %v5193 = vpack.c.b16 %v5045, %v5043
    %v5194 = vpack.c.b16 %v5046, %v5044
    %v5195 = vpack.c.b16 %v5049, %v5047
    %v5196 = vpack.c.b16 %v5050, %v5048
    %v5197 = vpack.c.b16 %v5053, %v5051
    %v5198 = vpack.c.b16 %v5054, %v5052
    %v5199 = vpack.c.b16 %v5057, %v5055
    %v5200 = vpack.c.b16 %v5058, %v5056
    %v5201 = vpack.c.b16 %v5061, %v5059
    %v5202 = vpack.c.b16 %v5062, %v5060
    %v5203 = vpack.c.b16 %v5065, %v5063
    %v5204 = vpack.c.b16 %v5066, %v5064
    %v5205 = vpack.c.b16 %v5069, %v5067
    %v5206 = vpack.c.b16 %v5070, %v5068
    %v5207 = vpack.c.b16 %v5073, %v5071
    %v5208 = vpack.c.b16 %v5074, %v5072
    %v5209 = vpack.c.b16 %v5077, %v5075
    %v5210 = vpack.c.b16 %v5078, %v5076
    %v5211 = vpack.c.b16 %v5081, %v5079
    %v5212 = vpack.c.b16 %v5082, %v5080
    %v5213 = vpack.c.b16 %v5085, %v5083
    %v5214 = vpack.c.b16 %v5086, %v5084
    %v5215 = vpack.c.b16 %v5089, %v5087
    %v5216 = vpack.c.b16 %v5090, %v5088
    %v5217 = vpack.c.b16 %v5093, %v5091
    %v5218 = vpack.c.b16 %v5094, %v5092
    %v5219 = vpack.c.b16 %v5097, %v5095
    %v5220 = vpack.c.b16 %v5098, %v5096
    %v5221 = vpack.c.b16 %v5101, %v5099
    %v5222 = vpack.c.b16 %v5102, %v5100
    %v5344 = vsel %vm3899, %v4622, 0
    %5346 = vmatprep.subr.bf16.mxu0 %v5104
    %5347 = vmatpush1.bf16.msra.mxu0 %v5103
    %5348 = vmatprep.subr.bf16.mxu0 %v5106
    %5349 = vmatpush1.bf16.msra.mxu0 %v5105
    %5350 = vmatprep.subr.bf16.mxu0 %v5108
    %5351 = vmatpush1.bf16.msra.mxu0 %v5107
    %5352 = vmatprep.subr.bf16.mxu0 %v5110
    %5353 = vmatpush1.bf16.msra.mxu0 %v5109
    %5354 = vmatprep.subr.bf16.mxu0 %v5112
    %5355 = vmatpush1.bf16.msra.mxu0 %v5111
    %5356 = vmatprep.subr.bf16.mxu0 %v5114
    %5357 = vmatpush1.bf16.msra.mxu0 %v5113
    %5358 = vmatprep.subr.bf16.mxu0 %v5116
    %5359 = vmatpush1.bf16.msra.mxu0 %v5115
    %5360 = vmatprep.subr.bf16.mxu0 %v5118
    %5361 = vmatpush1.bf16.msra.mxu0 %v5117
    %5362 = vmatprep.subr.bf16.mxu0 %v5120
    %5363 = vmatpush1.bf16.msra.mxu0 %v5119
    %5364 = vmatprep.subr.bf16.mxu0 %v5122
    %5365 = vmatpush1.bf16.msra.mxu0 %v5121
    %5366 = vmatprep.subr.bf16.mxu0 %v5124
    %5367 = vmatpush1.bf16.msra.mxu0 %v5123
    %5368 = vmatprep.subr.bf16.mxu0 %v5126
    %5369 = vmatpush1.bf16.msra.mxu0 %v5125
    %5370 = vmatprep.subr.bf16.mxu0 %v5128
    %5371 = vmatpush1.bf16.msra.mxu0 %v5127
    %5372 = vmatprep.subr.bf16.mxu0 %v5130
    %5373 = vmatpush1.bf16.msra.mxu0 %v5129
    %5374 = vmatprep.subr.bf16.mxu0 %v5132
    %5375 = vmatpush1.bf16.msra.mxu0 %v5131
    %5376 = vmatprep.subr.bf16.mxu0 %v5134
    %5377 = vmatpush1.bf16.msra.mxu0 %v5133
    %5378 = vmatprep.mubr.bf16.mxu0 %v4616
    %5379 = vmatmul.mubr.bf16.gmra.mrb[0].mxu0 %v4615
    %v5380 = vpop.f32.mrb[0].mxu0
    %v5381 = vadd.f32 0.0, %v5380
    %v5382 = vpop.f32.mrb[0].mxu0
    %v5383 = vadd.f32 0.0, %v5382
    %v5384 = vpop.f32.mrb[0].mxu0
    %v5385 = vpop.f32.mrb[0].mxu0
    %5386 = vdwg.mxu0
    %5387 = vmatprep.subr.bf16.mxu0 %v5136
    %5388 = vmatpush1.bf16.msra.mxu0 %v5135
    %5389 = vmatprep.subr.bf16.mxu0 %v5138
    %5390 = vmatpush1.bf16.msra.mxu0 %v5137
    %5391 = vmatprep.subr.bf16.mxu0 %v5140
    %5392 = vmatpush1.bf16.msra.mxu0 %v5139
    %5393 = vmatprep.subr.bf16.mxu0 %v5142
    %5394 = vmatpush1.bf16.msra.mxu0 %v5141
    %5395 = vmatprep.subr.bf16.mxu0 %v5144
    %5396 = vmatpush1.bf16.msra.mxu0 %v5143
    %5397 = vmatprep.subr.bf16.mxu0 %v5146
    %5398 = vmatpush1.bf16.msra.mxu0 %v5145
    %5399 = vmatprep.subr.bf16.mxu0 %v5148
    %5400 = vmatpush1.bf16.msra.mxu0 %v5147
    %5401 = vmatprep.subr.bf16.mxu0 %v5150
    %5402 = vmatpush1.bf16.msra.mxu0 %v5149
    %5403 = vmatprep.subr.bf16.mxu0 %v5152
    %5404 = vmatpush1.bf16.msra.mxu0 %v5151
    %5405 = vmatprep.subr.bf16.mxu0 %v5154
    %5406 = vmatpush1.bf16.msra.mxu0 %v5153
    %5407 = vmatprep.subr.bf16.mxu0 %v5156
    %5408 = vmatpush1.bf16.msra.mxu0 %v5155
    %5409 = vmatprep.subr.bf16.mxu0 %v5158
    %5410 = vmatpush1.bf16.msra.mxu0 %v5157
    %5411 = vmatprep.subr.bf16.mxu0 %v5160
    %5412 = vmatpush1.bf16.msra.mxu0 %v5159
    %5413 = vmatprep.subr.bf16.mxu0 %v5162
    %5414 = vmatpush1.bf16.msra.mxu0 %v5161
    %5415 = vmatprep.subr.bf16.mxu0 %v5164
    %5416 = vmatpush1.bf16.msra.mxu0 %v5163
    %5417 = vmatprep.subr.bf16.mxu0 %v5166
    %5418 = vmatpush1.bf16.msra.mxu0 %v5165
    %5419 = vmatprep.mubr.bf16.mxu0 %v4618
    %5420 = vmatmul.mubr.bf16.gmra.mrb[0].mxu0 %v4617
    %v5421 = vpop.f32.mrb[0].mxu0
    %v5422 = vadd.f32 %v5381, %v5421
    %v5423 = vpop.f32.mrb[0].mxu0
    %v5424 = vadd.f32 %v5383, %v5423
    %v5425 = vpop.f32.mrb[0].mxu0
    %v5426 = vpop.f32.mrb[0].mxu0
    %5427 = vdwg.mxu0
    %5428 = vmatprep.subr.bf16.mxu0 %v5168
    %5429 = vmatpush1.bf16.msra.mxu0 %v5167
    %5430 = vmatprep.subr.bf16.mxu0 %v5170
    %5431 = vmatpush1.bf16.msra.mxu0 %v5169
    %5432 = vmatprep.subr.bf16.mxu0 %v5172
    %5433 = vmatpush1.bf16.msra.mxu0 %v5171
    %5434 = vmatprep.subr.bf16.mxu0 %v5174
    %5435 = vmatpush1.bf16.msra.mxu0 %v5173
    %5436 = vmatprep.subr.bf16.mxu0 %v5176
    %5437 = vmatpush1.bf16.msra.mxu0 %v5175
    %5438 = vmatprep.subr.bf16.mxu0 %v5178
    %5439 = vmatpush1.bf16.msra.mxu0 %v5177
    %5440 = vmatprep.subr.bf16.mxu0 %v5180
    %5441 = vmatpush1.bf16.msra.mxu0 %v5179
    %5442 = vmatprep.subr.bf16.mxu0 %v5182
    %5443 = vmatpush1.bf16.msra.mxu0 %v5181
    %5444 = vmatprep.subr.bf16.mxu0 %v5184
    %5445 = vmatpush1.bf16.msra.mxu0 %v5183
    %5446 = vmatprep.subr.bf16.mxu0 %v5186
    %5447 = vmatpush1.bf16.msra.mxu0 %v5185
    %5448 = vmatprep.subr.bf16.mxu0 %v5188
    %5449 = vmatpush1.bf16.msra.mxu0 %v5187
    %5450 = vmatprep.subr.bf16.mxu0 %v5190
    %5451 = vmatpush1.bf16.msra.mxu0 %v5189
    %5452 = vmatprep.subr.bf16.mxu0 %v5192
    %5453 = vmatpush1.bf16.msra.mxu0 %v5191
    %5454 = vmatprep.subr.bf16.mxu0 %v5194
    %5455 = vmatpush1.bf16.msra.mxu0 %v5193
    %5456 = vmatprep.subr.bf16.mxu0 %v5196
    %5457 = vmatpush1.bf16.msra.mxu0 %v5195
    %5458 = vmatprep.subr.bf16.mxu0 %v5198
    %5459 = vmatpush1.bf16.msra.mxu0 %v5197
    %5460 = vmatprep.mubr.bf16.mxu0 %v4620
    %5461 = vmatmul.mubr.bf16.gmra.mrb[0].mxu0 %v4619
    %v5462 = vpop.f32.mrb[0].mxu0
    %v5463 = vadd.f32 %v5422, %v5462
    %v5464 = vpop.f32.mrb[0].mxu0
    %v5465 = vadd.f32 %v5424, %v5464
    %v5466 = vpop.f32.mrb[0].mxu0
    %v5467 = vpop.f32.mrb[0].mxu0
    %5468 = vdwg.mxu0
    %5469 = vmatprep.subr.bf16.mxu0 %v5200
    %5470 = vmatpush1.bf16.msra.mxu0 %v5199
    %5471 = vmatprep.subr.bf16.mxu0 %v5202
    %5472 = vmatpush1.bf16.msra.mxu0 %v5201
    %5473 = vmatprep.subr.bf16.mxu0 %v5204
    %5474 = vmatpush1.bf16.msra.mxu0 %v5203
    %5475 = vmatprep.subr.bf16.mxu0 %v5206
    %5476 = vmatpush1.bf16.msra.mxu0 %v5205
    %5477 = vmatprep.subr.bf16.mxu0 %v5208
    %5478 = vmatpush1.bf16.msra.mxu0 %v5207
    %5479 = vmatprep.subr.bf16.mxu0 %v5210
    %5480 = vmatpush1.bf16.msra.mxu0 %v5209
    %5481 = vmatprep.subr.bf16.mxu0 %v5212
    %5482 = vmatpush1.bf16.msra.mxu0 %v5211
    %5483 = vmatprep.subr.bf16.mxu0 %v5214
    %5484 = vmatpush1.bf16.msra.mxu0 %v5213
    %5485 = vmatprep.subr.bf16.mxu0 %v5216
    %5486 = vmatpush1.bf16.msra.mxu0 %v5215
    %5487 = vmatprep.subr.bf16.mxu0 %v5218
    %5488 = vmatpush1.bf16.msra.mxu0 %v5217
    %5489 = vmatprep.subr.bf16.mxu0 %v5220
    %5490 = vmatpush1.bf16.msra.mxu0 %v5219
    %5491 = vmatprep.subr.bf16.mxu0 %v5222
    %5492 = vmatpush1.bf16.msra.mxu0 %v5221
    %5493 = vmatprep.subr.bf16.mxu0 0
    %5494 = vmatpush1.bf16.msra.mxu0 0
    %5495 = vmatprep.subr.bf16.mxu0 0
    %5496 = vmatpush1.bf16.msra.mxu0 0
    %5497 = vmatprep.subr.bf16.mxu0 0
    %5498 = vmatpush1.bf16.msra.mxu0 0
    %5499 = vmatprep.subr.bf16.mxu0 0
    %5500 = vmatpush1.bf16.msra.mxu0 0
    %5501 = vmatprep.mubr.bf16.mxu0 %v5344
    %5502 = vmatmul.mubr.bf16.gmra.mrb[0].mxu0 %v4621
    %v5503 = vpop.f32.mrb[0].mxu0
    %v5504 = vadd.f32 %v5463, %v5503
    %v5505 = vpop.f32.mrb[0].mxu0
    %v5506 = vadd.f32 %v5465, %v5505
    %v5507 = vpop.f32.mrb[0].mxu0
    %v5508 = vpop.f32.mrb[0].mxu0
    %5509 = vdwg.mxu0
    %5510 = vst [vmem:[%s5] sm:$0xff] %v5504
    %5511 = vst [vmem:[%s5 + $0x8] sm:$0xff] %v5506
    // Predicated region
    $region38: #{base_encoder_masker_decoder_forward.1} parent=1 // pred_check
      _
    $region39: #{base_encoder_masker_decoder_forward.1} parent=1 // pred_check_branch
      %5513 = sbr.rel (0) target = $region41
    $region40: #{base_encoder_masker_decoder_forward.1} parent=1 // pred_region
      _
    $region41: #{base_encoder_masker_decoder_forward.1} parent=1 // pred_fallthru
      _
    // Predicated region
    $region42: #{base_encoder_masker_decoder_forward.1} parent=1 // pred_check
      _
    $region43: #{base_encoder_masker_decoder_forward.1} parent=1 // pred_check_branch
      %5515 = sbr.rel (0) target = $region45
    $region44: #{base_encoder_masker_decoder_forward.1} parent=1 // pred_region
      _
    $region45: #{base_encoder_masker_decoder_forward.1} parent=1 // pred_fallthru
      _
    %5516 = vsyncpa [#allocation3], 1
    %5517 = vsyncpa [#allocation5], 1
    %5518 = vsyncpa [#allocation8], 1

</llo_original>
